<compile_context>
chip_gen: v5e
topology: v5e:2x2
jax: 0.10.0
libtpu: 0.0.40
codegen_flags: <defaults>
</compile_context>

<pallas_src>
import jax
import jax.numpy as jnp
from jax.experimental import pallas as pl
from jax.experimental.pallas import tpu as pltpu


# ---------------------------------------------------------------------------
# Layer objects mimicking the wrapped model's modules (each has `.f`)
# ---------------------------------------------------------------------------
class ConvSiLU:
    """3x3 / 1x1 stride-1 SAME Conv2d + SiLU with PyTorch OIHW weights.

    Kernel-side weight layout is hoisted here (perf feedback):
      OIHW -> (KH*KW, Cout, Cin_pad) bf16 taps  +  (Cout, 1) f32 bias column.
    """

    def __init__(self, f, weight, bias):
        self.f = f
        self.weight = weight              # (Cout, Cin, KH, KW) f32, for the reference
        self.bias = bias                  # (Cout,) f32, for the reference
        cout, cin, kh, kw = weight.shape
        assert kh == kw and kh in (1, 3)
        self.cout = cout
        self.cin = cin
        self.cin_pad = -(-cin // 8) * 8   # pad contraction dim to a sublane multiple
        taps = jnp.transpose(weight, (2, 3, 0, 1)).reshape(kh * kw, cout, cin)
        if self.cin_pad != cin:
            taps = jnp.pad(taps, ((0, 0), (0, 0), (0, self.cin_pad - cin)))
        self.w_taps = taps.astype(jnp.bfloat16)          # (T, Cout, Cin_pad)
        self.b_col = bias.reshape(cout, 1).astype(jnp.float32)


class Concat:
    def __init__(self, f):
        self.f = f


# ---------------------------------------------------------------------------
# Deterministic synthetic model construction
# ---------------------------------------------------------------------------
def build_model(key, cin=4):
    def conv_params(k, c_in, c_out, ks):
        k1, k2 = jax.random.split(k)
        w = 0.1 * jax.random.normal(k1, (c_out, c_in, ks, ks), jnp.float32)
        b = 0.1 * jax.random.normal(k2, (c_out,), jnp.float32)
        return w, b

    keys = jax.random.split(key, 6)
    layers = [
        ConvSiLU(-1, *conv_params(keys[0], cin, 8, 3)),   # 0
        ConvSiLU(-1, *conv_params(keys[1], 8, 8, 3)),     # 1
        ConvSiLU(-1, *conv_params(keys[2], 8, 8, 1)),     # 2
        Concat([-1, 1]),                                  # 3: concat(out2, out1) -> 16ch
        ConvSiLU(-1, *conv_params(keys[3], 16, 8, 1)),    # 4
        ConvSiLU(2, *conv_params(keys[4], 8, 8, 3)),      # 5: int skip from layer 2
    ]
    return layers


def _trace_out_channels(layers, cin):
    """Run the FXModel.forward routing on channel counts only (static)."""
    x = cin
    y = []
    for m in layers:
        if m.f != -1:
            x = y[m.f] if isinstance(m.f, int) else [x if j == -1 else y[j] for j in m.f]
        x = m.cout if isinstance(m, ConvSiLU) else sum(x)
        y.append(x)
    return x


def _build_shift_mats(H, W):
    """S[t, q, m] = 1 iff q == m + dh*W + dw and tap (dh, dw) is in-bounds at m.

    Folds the SAME-padding boundary mask into a 0/1 matrix so a 3x3 conv tap's
    shifted activation is simply  act @ S[t]  on the MXU (exact in bf16).
    """
    HW = H * W
    m = jnp.arange(HW)
    h, w = m // W, m % W
    mats = []
    for dh in (-1, 0, 1):
        for dw in (-1, 0, 1):
            valid = (h + dh >= 0) & (h + dh < H) & (w + dw >= 0) & (w + dw < W)
            src = m + dh * W + dw
            mats.append((m[:, None] == src[None, :]) & valid[None, :])
    return jnp.stack(mats, axis=0).astype(jnp.bfloat16)   # (9, HW, HW)


# ---------------------------------------------------------------------------
# Fused Pallas kernel: entire FXModel graph, one invocation per image
# ---------------------------------------------------------------------------
def _make_fused_kernel(layers, conv_layers):
    n_conv = len(conv_layers)

    def kernel(*refs):
        x_ref, s_ref = refs[0], refs[1]
        conv_refs = refs[2:2 + 2 * n_conv]
        out_ref = refs[2 + 2 * n_conv]
        wb = {id(m): (conv_refs[2 * i], conv_refs[2 * i + 1])
              for i, m in enumerate(conv_layers)}

        def conv_silu(m, act):
            w_ref, b_ref = wb[id(m)]
            ksq = int(m.w_taps.shape[0])          # 1 or 9, static
            # channel counts in this graph are multiples of 8 (input padded in wrapper)
            assert act.shape[0] == m.cin_pad, (act.shape, m.cin_pad)
            a16 = act.astype(jnp.bfloat16)        # bf16 MXU operands
            acc = None
            for t in range(ksq):
                if ksq == 1:
                    src = a16
                else:
                    # spatial shift + boundary mask as one MXU matmul (exact 0/1 gather)
                    src = jnp.dot(a16, s_ref[t],
                                  preferred_element_type=jnp.float32
                                  ).astype(jnp.bfloat16)
                part = jnp.dot(w_ref[t], src, preferred_element_type=jnp.float32)
                acc = part if acc is None else acc + part
            acc = acc + b_ref[...]                # f32 epilogue (bias)
            return acc * jax.nn.sigmoid(acc)      # SiLU in f32

        # ---- FXModel.forward routing, resolved at trace time; all data in VMEM ----
        x = x_ref[0]                              # (Cin_pad, HW) f32
        y = []
        for m in layers:
            if m.f != -1:
                x = y[m.f] if isinstance(m.f, int) else [
                    x if j == -1 else y[j] for j in m.f]
            if isinstance(m, ConvSiLU):
                x = conv_silu(m, x)
            else:                                 # Concat: channel axis is 0 in (C, HW)
                x = jnp.concatenate(x, axis=0)
            y.append(x)
        out_ref[0] = x.astype(out_ref.dtype)

    return kernel


def build_fused_apply(layers, x_shape):
    """Returns a jitted NCHW -> NCHW forward running the whole graph in one kernel."""
    N, cin, H, W = x_shape
    HW = H * W
    assert HW % 128 == 0, "flattened spatial dim must be lane-aligned"
    cin_pad = -(-cin // 8) * 8
    cout_last = _trace_out_channels(layers, cin)
    conv_layers = [m for m in layers if isinstance(m, ConvSiLU)]
    shift_mats = _build_shift_mats(H, W)          # (9, HW, HW) bf16, ~1.2 MB

    kernel = _make_fused_kernel(layers, conv_layers)

    in_specs = [
        pl.BlockSpec((1, cin_pad, HW), lambda n: (n, 0, 0)),   # per-image input tile
        pl.BlockSpec(shift_mats.shape, lambda n: (0, 0, 0)),   # shared shift matrices
    ]
    flat_params = []
    for m in conv_layers:
        in_specs.append(pl.BlockSpec(m.w_taps.shape, lambda n: (0, 0, 0)))
        in_specs.append(pl.BlockSpec(m.b_col.shape, lambda n: (0, 0)))
        flat_params.extend([m.w_taps, m.b_col])

    fused = pl.pallas_call(
        kernel,
        out_shape=jax.ShapeDtypeStruct((N, cout_last, HW), jnp.float32),
        grid=(N,),
        in_specs=in_specs,
        out_specs=pl.BlockSpec((1, cout_last, HW), lambda n: (n, 0, 0)),
        compiler_params=pltpu.CompilerParams(
            dimension_semantics=("parallel",),        # v7x: 2 TensorCores split the batch
            vmem_limit_bytes=32 * 1024 * 1024,
        ),
    )

    @jax.jit
    def apply(x_nchw):
        x_flat = x_nchw.reshape(N, cin, HW)           # NCHW -> (N, C, H*W): no transpose
        if cin_pad != cin:
            x_flat = jnp.pad(x_flat, ((0, 0), (0, cin_pad - cin), (0, 0)))
        out = fused(x_flat, shift_mats, *flat_params)
        return out.reshape(N, cout_last, H, W)

    return apply


# ---------------------------------------------------------------------------
# Pure-JAX reference (correctness check only) — same FXModel routing
# ---------------------------------------------------------------------------
def _ref_conv_silu(x_nhwc, w_oihw, b):
    w_hwio = jnp.transpose(w_oihw, (2, 3, 1, 0))
    out = jax.lax.conv_general_dilated(
        x_nhwc, w_hwio, window_strides=(1, 1), padding="SAME",
        dimension_numbers=("NHWC", "HWIO", "NHWC"))
    out = out + b[None, None, None, :]
    return out * jax.nn.sigmoid(out)


def reference_forward(model_layers, x_nchw):
    x = jnp.transpose(x_nchw, (0, 2, 3, 1))
    y = []
    for m in model_layers:
        if m.f != -1:
            x = y[m.f] if isinstance(m.f, int) else [
                x if j == -1 else y[j] for j in m.f]
        if isinstance(m, ConvSiLU):
            x = _ref_conv_silu(x, m.weight, m.bias)
        else:
            x = jnp.concatenate(x, axis=-1)
        y.append(x)
    return jnp.transpose(x, (0, 3, 1, 2))


if __name__ == "__main__":
    key = jax.random.PRNGKey(0)
    k_model, k_x = jax.random.split(key)

    layers = build_model(k_model, cin=4)

    # Input, PyTorch NCHW convention: (batch=2, channels=4, 16, 16)
    x = jax.random.normal(k_x, (2, 4, 16, 16), jnp.float32)

    apply_fn = build_fused_apply(layers, x.shape)
    out = jax.block_until_ready(apply_fn(x))
    assert out.shape == (2, 8, 16, 16), out.shape

    ref = jax.block_until_ready(reference_forward(layers, x))
    max_err = float(jnp.max(jnp.abs(out - ref)))
    # bf16 MXU operands (f32 accumulation / f32 epilogue) vs. full-f32 reference.
    assert jnp.allclose(out, ref, atol=2e-2, rtol=2e-2), max_err

    print("KERNEL_OK")
</pallas_src>

<mosaic_0001>
module attributes {stable_mosaic.version = 11 : i64} {
  func.func @kernel(%arg0: i32, %arg1: memref<1x8x256xf32, #tpu.memory_space<vmem>>, %arg2: memref<9x256x256xbf16, #tpu.memory_space<vmem>>, %arg3: memref<9x8x8xbf16, #tpu.memory_space<vmem>>, %arg4: memref<8x1xf32, #tpu.memory_space<vmem>>, %arg5: memref<9x8x8xbf16, #tpu.memory_space<vmem>>, %arg6: memref<8x1xf32, #tpu.memory_space<vmem>>, %arg7: memref<1x8x8xbf16, #tpu.memory_space<vmem>>, %arg8: memref<8x1xf32, #tpu.memory_space<vmem>>, %arg9: memref<1x8x16xbf16, #tpu.memory_space<vmem>>, %arg10: memref<8x1xf32, #tpu.memory_space<vmem>>, %arg11: memref<9x8x8xbf16, #tpu.memory_space<vmem>>, %arg12: memref<8x1xf32, #tpu.memory_space<vmem>>, %arg13: memref<1x8x256xf32, #tpu.memory_space<vmem>>) attributes {dimension_semantics = [#tpu.dimension_semantics<parallel>], iteration_bounds = array<i64: 2>, scalar_prefetch = 0 : i64, scratch_operands = 0 : i64, tpu.core_type = #tpu.core_type<tc>, window_params = [{transform_indices = @transform_0, window_bounds = array<i64: 1, 8, 256>}, {pipeline_mode = #tpu.pipeline_mode<synchronous>, transform_indices = @transform_1, window_bounds = array<i64: 9, 256, 256>}, {pipeline_mode = #tpu.pipeline_mode<synchronous>, transform_indices = @transform_2, window_bounds = array<i64: 9, 8, 8>}, {pipeline_mode = #tpu.pipeline_mode<synchronous>, transform_indices = @transform_3, window_bounds = array<i64: 8, 1>}, {pipeline_mode = #tpu.pipeline_mode<synchronous>, transform_indices = @transform_4, window_bounds = array<i64: 9, 8, 8>}, {pipeline_mode = #tpu.pipeline_mode<synchronous>, transform_indices = @transform_5, window_bounds = array<i64: 8, 1>}, {pipeline_mode = #tpu.pipeline_mode<synchronous>, transform_indices = @transform_6, window_bounds = array<i64: 1, 8, 8>}, {pipeline_mode = #tpu.pipeline_mode<synchronous>, transform_indices = @transform_7, window_bounds = array<i64: 8, 1>}, {pipeline_mode = #tpu.pipeline_mode<synchronous>, transform_indices = @transform_8, window_bounds = array<i64: 1, 8, 16>}, {pipeline_mode = #tpu.pipeline_mode<synchronous>, transform_indices = @transform_9, window_bounds = array<i64: 8, 1>}, {pipeline_mode = #tpu.pipeline_mode<synchronous>, transform_indices = @transform_10, window_bounds = array<i64: 9, 8, 8>}, {pipeline_mode = #tpu.pipeline_mode<synchronous>, transform_indices = @transform_11, window_bounds = array<i64: 8, 1>}, {transform_indices = @transform_12, window_bounds = array<i64: 1, 8, 256>}]} {
    %c0 = arith.constant 0 : index
    %c0_0 = arith.constant 0 : index
    %c0_1 = arith.constant 0 : index
    %0 = vector.load %arg1[%c0, %c0_0, %c0_1] : memref<1x8x256xf32, #tpu.memory_space<vmem>>, vector<1x8x256xf32>
    %1 = vector.shape_cast %0 : vector<1x8x256xf32> to vector<8x256xf32>
    %2 = arith.truncf %1 : vector<8x256xf32> to vector<8x256xbf16>
    %c0_2 = arith.constant 0 : index
    %c0_3 = arith.constant 0 : index
    %c0_4 = arith.constant 0 : index
    %3 = vector.load %arg2[%c0_2, %c0_3, %c0_4] : memref<9x256x256xbf16, #tpu.memory_space<vmem>>, vector<1x256x256xbf16>
    %4 = vector.shape_cast %3 : vector<1x256x256xbf16> to vector<256x256xbf16>
    %cst = arith.constant dense<0.000000e+00> : vector<8x256xf32>
    %5 = tpu.matmul %2, %4, %cst {dimension_numbers = #tpu.dot_dimension_numbers<[1], [0], [0], [1], [0, 0, 1, 1], [], []>} : vector<8x256xbf16>, vector<256x256xbf16>, vector<8x256xf32> -> vector<8x256xf32>
    %6 = arith.truncf %5 : vector<8x256xf32> to vector<8x256xbf16>
    %c0_5 = arith.constant 0 : index
    %c0_6 = arith.constant 0 : index
    %c0_7 = arith.constant 0 : index
    %7 = vector.load %arg3[%c0_5, %c0_6, %c0_7] : memref<9x8x8xbf16, #tpu.memory_space<vmem>>, vector<1x8x8xbf16>
    %8 = vector.shape_cast %7 : vector<1x8x8xbf16> to vector<8x8xbf16>
    %cst_8 = arith.constant dense<0.000000e+00> : vector<8x256xf32>
    %9 = tpu.matmul %8, %6, %cst_8 {dimension_numbers = #tpu.dot_dimension_numbers<[1], [0], [0], [1], [0, 0, 1, 1], [], []>} : vector<8x8xbf16>, vector<8x256xbf16>, vector<8x256xf32> -> vector<8x256xf32>
    %c1 = arith.constant 1 : index
    %c0_9 = arith.constant 0 : index
    %c0_10 = arith.constant 0 : index
    %10 = vector.load %arg2[%c1, %c0_9, %c0_10] : memref<9x256x256xbf16, #tpu.memory_space<vmem>>, vector<1x256x256xbf16>
    %11 = vector.shape_cast %10 : vector<1x256x256xbf16> to vector<256x256xbf16>
    %cst_11 = arith.constant dense<0.000000e+00> : vector<8x256xf32>
    %12 = tpu.matmul %2, %11, %cst_11 {dimension_numbers = #tpu.dot_dimension_numbers<[1], [0], [0], [1], [0, 0, 1, 1], [], []>} : vector<8x256xbf16>, vector<256x256xbf16>, vector<8x256xf32> -> vector<8x256xf32>
    %13 = arith.truncf %12 : vector<8x256xf32> to vector<8x256xbf16>
    %c1_12 = arith.constant 1 : index
    %c0_13 = arith.constant 0 : index
    %c0_14 = arith.constant 0 : index
    %14 = vector.load %arg3[%c1_12, %c0_13, %c0_14] : memref<9x8x8xbf16, #tpu.memory_space<vmem>>, vector<1x8x8xbf16>
    %15 = vector.shape_cast %14 : vector<1x8x8xbf16> to vector<8x8xbf16>
    %cst_15 = arith.constant dense<0.000000e+00> : vector<8x256xf32>
    %16 = tpu.matmul %15, %13, %cst_15 {dimension_numbers = #tpu.dot_dimension_numbers<[1], [0], [0], [1], [0, 0, 1, 1], [], []>} : vector<8x8xbf16>, vector<8x256xbf16>, vector<8x256xf32> -> vector<8x256xf32>
    %17 = arith.addf %9, %16 : vector<8x256xf32>
    %c2 = arith.constant 2 : index
    %c0_16 = arith.constant 0 : index
    %c0_17 = arith.constant 0 : index
    %18 = vector.load %arg2[%c2, %c0_16, %c0_17] : memref<9x256x256xbf16, #tpu.memory_space<vmem>>, vector<1x256x256xbf16>
    %19 = vector.shape_cast %18 : vector<1x256x256xbf16> to vector<256x256xbf16>
    %cst_18 = arith.constant dense<0.000000e+00> : vector<8x256xf32>
    %20 = tpu.matmul %2, %19, %cst_18 {dimension_numbers = #tpu.dot_dimension_numbers<[1], [0], [0], [1], [0, 0, 1, 1], [], []>} : vector<8x256xbf16>, vector<256x256xbf16>, vector<8x256xf32> -> vector<8x256xf32>
    %21 = arith.truncf %20 : vector<8x256xf32> to vector<8x256xbf16>
    %c2_19 = arith.constant 2 : index
    %c0_20 = arith.constant 0 : index
    %c0_21 = arith.constant 0 : index
    %22 = vector.load %arg3[%c2_19, %c0_20, %c0_21] : memref<9x8x8xbf16, #tpu.memory_space<vmem>>, vector<1x8x8xbf16>
    %23 = vector.shape_cast %22 : vector<1x8x8xbf16> to vector<8x8xbf16>
    %cst_22 = arith.constant dense<0.000000e+00> : vector<8x256xf32>
    %24 = tpu.matmul %23, %21, %cst_22 {dimension_numbers = #tpu.dot_dimension_numbers<[1], [0], [0], [1], [0, 0, 1, 1], [], []>} : vector<8x8xbf16>, vector<8x256xbf16>, vector<8x256xf32> -> vector<8x256xf32>
    %25 = arith.addf %17, %24 : vector<8x256xf32>
    %c3 = arith.constant 3 : index
    %c0_23 = arith.constant 0 : index
    %c0_24 = arith.constant 0 : index
    %26 = vector.load %arg2[%c3, %c0_23, %c0_24] : memref<9x256x256xbf16, #tpu.memory_space<vmem>>, vector<1x256x256xbf16>
    %27 = vector.shape_cast %26 : vector<1x256x256xbf16> to vector<256x256xbf16>
    %cst_25 = arith.constant dense<0.000000e+00> : vector<8x256xf32>
    %28 = tpu.matmul %2, %27, %cst_25 {dimension_numbers = #tpu.dot_dimension_numbers<[1], [0], [0], [1], [0, 0, 1, 1], [], []>} : vector<8x256xbf16>, vector<256x256xbf16>, vector<8x256xf32> -> vector<8x256xf32>
    %29 = arith.truncf %28 : vector<8x256xf32> to vector<8x256xbf16>
    %c3_26 = arith.constant 3 : index
    %c0_27 = arith.constant 0 : index
    %c0_28 = arith.constant 0 : index
    %30 = vector.load %arg3[%c3_26, %c0_27, %c0_28] : memref<9x8x8xbf16, #tpu.memory_space<vmem>>, vector<1x8x8xbf16>
    %31 = vector.shape_cast %30 : vector<1x8x8xbf16> to vector<8x8xbf16>
    %cst_29 = arith.constant dense<0.000000e+00> : vector<8x256xf32>
    %32 = tpu.matmul %31, %29, %cst_29 {dimension_numbers = #tpu.dot_dimension_numbers<[1], [0], [0], [1], [0, 0, 1, 1], [], []>} : vector<8x8xbf16>, vector<8x256xbf16>, vector<8x256xf32> -> vector<8x256xf32>
    %33 = arith.addf %25, %32 : vector<8x256xf32>
    %c4 = arith.constant 4 : index
    %c0_30 = arith.constant 0 : index
    %c0_31 = arith.constant 0 : index
    %34 = vector.load %arg2[%c4, %c0_30, %c0_31] : memref<9x256x256xbf16, #tpu.memory_space<vmem>>, vector<1x256x256xbf16>
    %35 = vector.shape_cast %34 : vector<1x256x256xbf16> to vector<256x256xbf16>
    %cst_32 = arith.constant dense<0.000000e+00> : vector<8x256xf32>
    %36 = tpu.matmul %2, %35, %cst_32 {dimension_numbers = #tpu.dot_dimension_numbers<[1], [0], [0], [1], [0, 0, 1, 1], [], []>} : vector<8x256xbf16>, vector<256x256xbf16>, vector<8x256xf32> -> vector<8x256xf32>
    %37 = arith.truncf %36 : vector<8x256xf32> to vector<8x256xbf16>
    %c4_33 = arith.constant 4 : index
    %c0_34 = arith.constant 0 : index
    %c0_35 = arith.constant 0 : index
    %38 = vector.load %arg3[%c4_33, %c0_34, %c0_35] : memref<9x8x8xbf16, #tpu.memory_space<vmem>>, vector<1x8x8xbf16>
    %39 = vector.shape_cast %38 : vector<1x8x8xbf16> to vector<8x8xbf16>
    %cst_36 = arith.constant dense<0.000000e+00> : vector<8x256xf32>
    %40 = tpu.matmul %39, %37, %cst_36 {dimension_numbers = #tpu.dot_dimension_numbers<[1], [0], [0], [1], [0, 0, 1, 1], [], []>} : vector<8x8xbf16>, vector<8x256xbf16>, vector<8x256xf32> -> vector<8x256xf32>
    %41 = arith.addf %33, %40 : vector<8x256xf32>
    %c5 = arith.constant 5 : index
    %c0_37 = arith.constant 0 : index
    %c0_38 = arith.constant 0 : index
    %42 = vector.load %arg2[%c5, %c0_37, %c0_38] : memref<9x256x256xbf16, #tpu.memory_space<vmem>>, vector<1x256x256xbf16>
    %43 = vector.shape_cast %42 : vector<1x256x256xbf16> to vector<256x256xbf16>
    %cst_39 = arith.constant dense<0.000000e+00> : vector<8x256xf32>
    %44 = tpu.matmul %2, %43, %cst_39 {dimension_numbers = #tpu.dot_dimension_numbers<[1], [0], [0], [1], [0, 0, 1, 1], [], []>} : vector<8x256xbf16>, vector<256x256xbf16>, vector<8x256xf32> -> vector<8x256xf32>
    %45 = arith.truncf %44 : vector<8x256xf32> to vector<8x256xbf16>
    %c5_40 = arith.constant 5 : index
    %c0_41 = arith.constant 0 : index
    %c0_42 = arith.constant 0 : index
    %46 = vector.load %arg3[%c5_40, %c0_41, %c0_42] : memref<9x8x8xbf16, #tpu.memory_space<vmem>>, vector<1x8x8xbf16>
    %47 = vector.shape_cast %46 : vector<1x8x8xbf16> to vector<8x8xbf16>
    %cst_43 = arith.constant dense<0.000000e+00> : vector<8x256xf32>
    %48 = tpu.matmul %47, %45, %cst_43 {dimension_numbers = #tpu.dot_dimension_numbers<[1], [0], [0], [1], [0, 0, 1, 1], [], []>} : vector<8x8xbf16>, vector<8x256xbf16>, vector<8x256xf32> -> vector<8x256xf32>
    %49 = arith.addf %41, %48 : vector<8x256xf32>
    %c6 = arith.constant 6 : index
    %c0_44 = arith.constant 0 : index
    %c0_45 = arith.constant 0 : index
    %50 = vector.load %arg2[%c6, %c0_44, %c0_45] : memref<9x256x256xbf16, #tpu.memory_space<vmem>>, vector<1x256x256xbf16>
    %51 = vector.shape_cast %50 : vector<1x256x256xbf16> to vector<256x256xbf16>
    %cst_46 = arith.constant dense<0.000000e+00> : vector<8x256xf32>
    %52 = tpu.matmul %2, %51, %cst_46 {dimension_numbers = #tpu.dot_dimension_numbers<[1], [0], [0], [1], [0, 0, 1, 1], [], []>} : vector<8x256xbf16>, vector<256x256xbf16>, vector<8x256xf32> -> vector<8x256xf32>
    %53 = arith.truncf %52 : vector<8x256xf32> to vector<8x256xbf16>
    %c6_47 = arith.constant 6 : index
    %c0_48 = arith.constant 0 : index
    %c0_49 = arith.constant 0 : index
    %54 = vector.load %arg3[%c6_47, %c0_48, %c0_49] : memref<9x8x8xbf16, #tpu.memory_space<vmem>>, vector<1x8x8xbf16>
    %55 = vector.shape_cast %54 : vector<1x8x8xbf16> to vector<8x8xbf16>
    %cst_50 = arith.constant dense<0.000000e+00> : vector<8x256xf32>
    %56 = tpu.matmul %55, %53, %cst_50 {dimension_numbers = #tpu.dot_dimension_numbers<[1], [0], [0], [1], [0, 0, 1, 1], [], []>} : vector<8x8xbf16>, vector<8x256xbf16>, vector<8x256xf32> -> vector<8x256xf32>
    %57 = arith.addf %49, %56 : vector<8x256xf32>
    %c7 = arith.constant 7 : index
    %c0_51 = arith.constant 0 : index
    %c0_52 = arith.constant 0 : index
    %58 = vector.load %arg2[%c7, %c0_51, %c0_52] : memref<9x256x256xbf16, #tpu.memory_space<vmem>>, vector<1x256x256xbf16>
    %59 = vector.shape_cast %58 : vector<1x256x256xbf16> to vector<256x256xbf16>
    %cst_53 = arith.constant dense<0.000000e+00> : vector<8x256xf32>
    %60 = tpu.matmul %2, %59, %cst_53 {dimension_numbers = #tpu.dot_dimension_numbers<[1], [0], [0], [1], [0, 0, 1, 1], [], []>} : vector<8x256xbf16>, vector<256x256xbf16>, vector<8x256xf32> -> vector<8x256xf32>
    %61 = arith.truncf %60 : vector<8x256xf32> to vector<8x256xbf16>
    %c7_54 = arith.constant 7 : index
    %c0_55 = arith.constant 0 : index
    %c0_56 = arith.constant 0 : index
    %62 = vector.load %arg3[%c7_54, %c0_55, %c0_56] : memref<9x8x8xbf16, #tpu.memory_space<vmem>>, vector<1x8x8xbf16>
    %63 = vector.shape_cast %62 : vector<1x8x8xbf16> to vector<8x8xbf16>
    %cst_57 = arith.constant dense<0.000000e+00> : vector<8x256xf32>
    %64 = tpu.matmul %63, %61, %cst_57 {dimension_numbers = #tpu.dot_dimension_numbers<[1], [0], [0], [1], [0, 0, 1, 1], [], []>} : vector<8x8xbf16>, vector<8x256xbf16>, vector<8x256xf32> -> vector<8x256xf32>
    %65 = arith.addf %57, %64 : vector<8x256xf32>
    %c8 = arith.constant 8 : index
    %c0_58 = arith.constant 0 : index
    %c0_59 = arith.constant 0 : index
    %66 = vector.load %arg2[%c8, %c0_58, %c0_59] : memref<9x256x256xbf16, #tpu.memory_space<vmem>>, vector<1x256x256xbf16>
    %67 = vector.shape_cast %66 : vector<1x256x256xbf16> to vector<256x256xbf16>
    %cst_60 = arith.constant dense<0.000000e+00> : vector<8x256xf32>
    %68 = tpu.matmul %2, %67, %cst_60 {dimension_numbers = #tpu.dot_dimension_numbers<[1], [0], [0], [1], [0, 0, 1, 1], [], []>} : vector<8x256xbf16>, vector<256x256xbf16>, vector<8x256xf32> -> vector<8x256xf32>
    %69 = arith.truncf %68 : vector<8x256xf32> to vector<8x256xbf16>
    %c8_61 = arith.constant 8 : index
    %c0_62 = arith.constant 0 : index
    %c0_63 = arith.constant 0 : index
    %70 = vector.load %arg3[%c8_61, %c0_62, %c0_63] : memref<9x8x8xbf16, #tpu.memory_space<vmem>>, vector<1x8x8xbf16>
    %71 = vector.shape_cast %70 : vector<1x8x8xbf16> to vector<8x8xbf16>
    %cst_64 = arith.constant dense<0.000000e+00> : vector<8x256xf32>
    %72 = tpu.matmul %71, %69, %cst_64 {dimension_numbers = #tpu.dot_dimension_numbers<[1], [0], [0], [1], [0, 0, 1, 1], [], []>} : vector<8x8xbf16>, vector<8x256xbf16>, vector<8x256xf32> -> vector<8x256xf32>
    %73 = arith.addf %65, %72 : vector<8x256xf32>
    %c0_65 = arith.constant 0 : index
    %c0_66 = arith.constant 0 : index
    %74 = vector.load %arg4[%c0_65, %c0_66] : memref<8x1xf32, #tpu.memory_space<vmem>>, vector<8x1xf32>
    %75 = vector.broadcast %74 : vector<8x1xf32> to vector<8x256xf32>
    %76 = arith.addf %73, %75 : vector<8x256xf32>
    %77 = arith.negf %76 : vector<8x256xf32>
    %78 = math.exp %77 : vector<8x256xf32>
    %cst_67 = arith.constant 1.000000e+00 : f32
    %79 = vector.broadcast %cst_67 : f32 to vector<8x256xf32>
    %80 = arith.addf %79, %78 : vector<8x256xf32>
    %81 = arith.divf %79, %80 : vector<8x256xf32>
    %82 = arith.mulf %76, %81 : vector<8x256xf32>
    %83 = arith.truncf %82 : vector<8x256xf32> to vector<8x256xbf16>
    %c0_68 = arith.constant 0 : index
    %c0_69 = arith.constant 0 : index
    %c0_70 = arith.constant 0 : index
    %84 = vector.load %arg2[%c0_68, %c0_69, %c0_70] : memref<9x256x256xbf16, #tpu.memory_space<vmem>>, vector<1x256x256xbf16>
    %85 = vector.shape_cast %84 : vector<1x256x256xbf16> to vector<256x256xbf16>
    %cst_71 = arith.constant dense<0.000000e+00> : vector<8x256xf32>
    %86 = tpu.matmul %83, %85, %cst_71 {dimension_numbers = #tpu.dot_dimension_numbers<[1], [0], [0], [1], [0, 0, 1, 1], [], []>} : vector<8x256xbf16>, vector<256x256xbf16>, vector<8x256xf32> -> vector<8x256xf32>
    %87 = arith.truncf %86 : vector<8x256xf32> to vector<8x256xbf16>
    %c0_72 = arith.constant 0 : index
    %c0_73 = arith.constant 0 : index
    %c0_74 = arith.constant 0 : index
    %88 = vector.load %arg5[%c0_72, %c0_73, %c0_74] : memref<9x8x8xbf16, #tpu.memory_space<vmem>>, vector<1x8x8xbf16>
    %89 = vector.shape_cast %88 : vector<1x8x8xbf16> to vector<8x8xbf16>
    %cst_75 = arith.constant dense<0.000000e+00> : vector<8x256xf32>
    %90 = tpu.matmul %89, %87, %cst_75 {dimension_numbers = #tpu.dot_dimension_numbers<[1], [0], [0], [1], [0, 0, 1, 1], [], []>} : vector<8x8xbf16>, vector<8x256xbf16>, vector<8x256xf32> -> vector<8x256xf32>
    %c1_76 = arith.constant 1 : index
    %c0_77 = arith.constant 0 : index
    %c0_78 = arith.constant 0 : index
    %91 = vector.load %arg2[%c1_76, %c0_77, %c0_78] : memref<9x256x256xbf16, #tpu.memory_space<vmem>>, vector<1x256x256xbf16>
    %92 = vector.shape_cast %91 : vector<1x256x256xbf16> to vector<256x256xbf16>
    %cst_79 = arith.constant dense<0.000000e+00> : vector<8x256xf32>
    %93 = tpu.matmul %83, %92, %cst_79 {dimension_numbers = #tpu.dot_dimension_numbers<[1], [0], [0], [1], [0, 0, 1, 1], [], []>} : vector<8x256xbf16>, vector<256x256xbf16>, vector<8x256xf32> -> vector<8x256xf32>
    %94 = arith.truncf %93 : vector<8x256xf32> to vector<8x256xbf16>
    %c1_80 = arith.constant 1 : index
    %c0_81 = arith.constant 0 : index
    %c0_82 = arith.constant 0 : index
    %95 = vector.load %arg5[%c1_80, %c0_81, %c0_82] : memref<9x8x8xbf16, #tpu.memory_space<vmem>>, vector<1x8x8xbf16>
    %96 = vector.shape_cast %95 : vector<1x8x8xbf16> to vector<8x8xbf16>
    %cst_83 = arith.constant dense<0.000000e+00> : vector<8x256xf32>
    %97 = tpu.matmul %96, %94, %cst_83 {dimension_numbers = #tpu.dot_dimension_numbers<[1], [0], [0], [1], [0, 0, 1, 1], [], []>} : vector<8x8xbf16>, vector<8x256xbf16>, vector<8x256xf32> -> vector<8x256xf32>
    %98 = arith.addf %90, %97 : vector<8x256xf32>
    %c2_84 = arith.constant 2 : index
    %c0_85 = arith.constant 0 : index
    %c0_86 = arith.constant 0 : index
    %99 = vector.load %arg2[%c2_84, %c0_85, %c0_86] : memref<9x256x256xbf16, #tpu.memory_space<vmem>>, vector<1x256x256xbf16>
    %100 = vector.shape_cast %99 : vector<1x256x256xbf16> to vector<256x256xbf16>
    %cst_87 = arith.constant dense<0.000000e+00> : vector<8x256xf32>
    %101 = tpu.matmul %83, %100, %cst_87 {dimension_numbers = #tpu.dot_dimension_numbers<[1], [0], [0], [1], [0, 0, 1, 1], [], []>} : vector<8x256xbf16>, vector<256x256xbf16>, vector<8x256xf32> -> vector<8x256xf32>
    %102 = arith.truncf %101 : vector<8x256xf32> to vector<8x256xbf16>
    %c2_88 = arith.constant 2 : index
    %c0_89 = arith.constant 0 : index
    %c0_90 = arith.constant 0 : index
    %103 = vector.load %arg5[%c2_88, %c0_89, %c0_90] : memref<9x8x8xbf16, #tpu.memory_space<vmem>>, vector<1x8x8xbf16>
    %104 = vector.shape_cast %103 : vector<1x8x8xbf16> to vector<8x8xbf16>
    %cst_91 = arith.constant dense<0.000000e+00> : vector<8x256xf32>
    %105 = tpu.matmul %104, %102, %cst_91 {dimension_numbers = #tpu.dot_dimension_numbers<[1], [0], [0], [1], [0, 0, 1, 1], [], []>} : vector<8x8xbf16>, vector<8x256xbf16>, vector<8x256xf32> -> vector<8x256xf32>
    %106 = arith.addf %98, %105 : vector<8x256xf32>
    %c3_92 = arith.constant 3 : index
    %c0_93 = arith.constant 0 : index
    %c0_94 = arith.constant 0 : index
    %107 = vector.load %arg2[%c3_92, %c0_93, %c0_94] : memref<9x256x256xbf16, #tpu.memory_space<vmem>>, vector<1x256x256xbf16>
    %108 = vector.shape_cast %107 : vector<1x256x256xbf16> to vector<256x256xbf16>
    %cst_95 = arith.constant dense<0.000000e+00> : vector<8x256xf32>
    %109 = tpu.matmul %83, %108, %cst_95 {dimension_numbers = #tpu.dot_dimension_numbers<[1], [0], [0], [1], [0, 0, 1, 1], [], []>} : vector<8x256xbf16>, vector<256x256xbf16>, vector<8x256xf32> -> vector<8x256xf32>
    %110 = arith.truncf %109 : vector<8x256xf32> to vector<8x256xbf16>
    %c3_96 = arith.constant 3 : index
    %c0_97 = arith.constant 0 : index
    %c0_98 = arith.constant 0 : index
    %111 = vector.load %arg5[%c3_96, %c0_97, %c0_98] : memref<9x8x8xbf16, #tpu.memory_space<vmem>>, vector<1x8x8xbf16>
    %112 = vector.shape_cast %111 : vector<1x8x8xbf16> to vector<8x8xbf16>
    %cst_99 = arith.constant dense<0.000000e+00> : vector<8x256xf32>
    %113 = tpu.matmul %112, %110, %cst_99 {dimension_numbers = #tpu.dot_dimension_numbers<[1], [0], [0], [1], [0, 0, 1, 1], [], []>} : vector<8x8xbf16>, vector<8x256xbf16>, vector<8x256xf32> -> vector<8x256xf32>
    %114 = arith.addf %106, %113 : vector<8x256xf32>
    %c4_100 = arith.constant 4 : index
    %c0_101 = arith.constant 0 : index
    %c0_102 = arith.constant 0 : index
    %115 = vector.load %arg2[%c4_100, %c0_101, %c0_102] : memref<9x256x256xbf16, #tpu.memory_space<vmem>>, vector<1x256x256xbf16>
    %116 = vector.shape_cast %115 : vector<1x256x256xbf16> to vector<256x256xbf16>
    %cst_103 = arith.constant dense<0.000000e+00> : vector<8x256xf32>
    %117 = tpu.matmul %83, %116, %cst_103 {dimension_numbers = #tpu.dot_dimension_numbers<[1], [0], [0], [1], [0, 0, 1, 1], [], []>} : vector<8x256xbf16>, vector<256x256xbf16>, vector<8x256xf32> -> vector<8x256xf32>
    %118 = arith.truncf %117 : vector<8x256xf32> to vector<8x256xbf16>
    %c4_104 = arith.constant 4 : index
    %c0_105 = arith.constant 0 : index
    %c0_106 = arith.constant 0 : index
    %119 = vector.load %arg5[%c4_104, %c0_105, %c0_106] : memref<9x8x8xbf16, #tpu.memory_space<vmem>>, vector<1x8x8xbf16>
    %120 = vector.shape_cast %119 : vector<1x8x8xbf16> to vector<8x8xbf16>
    %cst_107 = arith.constant dense<0.000000e+00> : vector<8x256xf32>
    %121 = tpu.matmul %120, %118, %cst_107 {dimension_numbers = #tpu.dot_dimension_numbers<[1], [0], [0], [1], [0, 0, 1, 1], [], []>} : vector<8x8xbf16>, vector<8x256xbf16>, vector<8x256xf32> -> vector<8x256xf32>
    %122 = arith.addf %114, %121 : vector<8x256xf32>
    %c5_108 = arith.constant 5 : index
    %c0_109 = arith.constant 0 : index
    %c0_110 = arith.constant 0 : index
    %123 = vector.load %arg2[%c5_108, %c0_109, %c0_110] : memref<9x256x256xbf16, #tpu.memory_space<vmem>>, vector<1x256x256xbf16>
    %124 = vector.shape_cast %123 : vector<1x256x256xbf16> to vector<256x256xbf16>
    %cst_111 = arith.constant dense<0.000000e+00> : vector<8x256xf32>
    %125 = tpu.matmul %83, %124, %cst_111 {dimension_numbers = #tpu.dot_dimension_numbers<[1], [0], [0], [1], [0, 0, 1, 1], [], []>} : vector<8x256xbf16>, vector<256x256xbf16>, vector<8x256xf32> -> vector<8x256xf32>
    %126 = arith.truncf %125 : vector<8x256xf32> to vector<8x256xbf16>
    %c5_112 = arith.constant 5 : index
    %c0_113 = arith.constant 0 : index
    %c0_114 = arith.constant 0 : index
    %127 = vector.load %arg5[%c5_112, %c0_113, %c0_114] : memref<9x8x8xbf16, #tpu.memory_space<vmem>>, vector<1x8x8xbf16>
    %128 = vector.shape_cast %127 : vector<1x8x8xbf16> to vector<8x8xbf16>
    %cst_115 = arith.constant dense<0.000000e+00> : vector<8x256xf32>
    %129 = tpu.matmul %128, %126, %cst_115 {dimension_numbers = #tpu.dot_dimension_numbers<[1], [0], [0], [1], [0, 0, 1, 1], [], []>} : vector<8x8xbf16>, vector<8x256xbf16>, vector<8x256xf32> -> vector<8x256xf32>
    %130 = arith.addf %122, %129 : vector<8x256xf32>
    %c6_116 = arith.constant 6 : index
    %c0_117 = arith.constant 0 : index
    %c0_118 = arith.constant 0 : index
    %131 = vector.load %arg2[%c6_116, %c0_117, %c0_118] : memref<9x256x256xbf16, #tpu.memory_space<vmem>>, vector<1x256x256xbf16>
    %132 = vector.shape_cast %131 : vector<1x256x256xbf16> to vector<256x256xbf16>
    %cst_119 = arith.constant dense<0.000000e+00> : vector<8x256xf32>
    %133 = tpu.matmul %83, %132, %cst_119 {dimension_numbers = #tpu.dot_dimension_numbers<[1], [0], [0], [1], [0, 0, 1, 1], [], []>} : vector<8x256xbf16>, vector<256x256xbf16>, vector<8x256xf32> -> vector<8x256xf32>
    %134 = arith.truncf %133 : vector<8x256xf32> to vector<8x256xbf16>
    %c6_120 = arith.constant 6 : index
    %c0_121 = arith.constant 0 : index
    %c0_122 = arith.constant 0 : index
    %135 = vector.load %arg5[%c6_120, %c0_121, %c0_122] : memref<9x8x8xbf16, #tpu.memory_space<vmem>>, vector<1x8x8xbf16>
    %136 = vector.shape_cast %135 : vector<1x8x8xbf16> to vector<8x8xbf16>
    %cst_123 = arith.constant dense<0.000000e+00> : vector<8x256xf32>
    %137 = tpu.matmul %136, %134, %cst_123 {dimension_numbers = #tpu.dot_dimension_numbers<[1], [0], [0], [1], [0, 0, 1, 1], [], []>} : vector<8x8xbf16>, vector<8x256xbf16>, vector<8x256xf32> -> vector<8x256xf32>
    %138 = arith.addf %130, %137 : vector<8x256xf32>
    %c7_124 = arith.constant 7 : index
    %c0_125 = arith.constant 0 : index
    %c0_126 = arith.constant 0 : index
    %139 = vector.load %arg2[%c7_124, %c0_125, %c0_126] : memref<9x256x256xbf16, #tpu.memory_space<vmem>>, vector<1x256x256xbf16>
    %140 = vector.shape_cast %139 : vector<1x256x256xbf16> to vector<256x256xbf16>
    %cst_127 = arith.constant dense<0.000000e+00> : vector<8x256xf32>
    %141 = tpu.matmul %83, %140, %cst_127 {dimension_numbers = #tpu.dot_dimension_numbers<[1], [0], [0], [1], [0, 0, 1, 1], [], []>} : vector<8x256xbf16>, vector<256x256xbf16>, vector<8x256xf32> -> vector<8x256xf32>
    %142 = arith.truncf %141 : vector<8x256xf32> to vector<8x256xbf16>
    %c7_128 = arith.constant 7 : index
    %c0_129 = arith.constant 0 : index
    %c0_130 = arith.constant 0 : index
    %143 = vector.load %arg5[%c7_128, %c0_129, %c0_130] : memref<9x8x8xbf16, #tpu.memory_space<vmem>>, vector<1x8x8xbf16>
    %144 = vector.shape_cast %143 : vector<1x8x8xbf16> to vector<8x8xbf16>
    %cst_131 = arith.constant dense<0.000000e+00> : vector<8x256xf32>
    %145 = tpu.matmul %144, %142, %cst_131 {dimension_numbers = #tpu.dot_dimension_numbers<[1], [0], [0], [1], [0, 0, 1, 1], [], []>} : vector<8x8xbf16>, vector<8x256xbf16>, vector<8x256xf32> -> vector<8x256xf32>
    %146 = arith.addf %138, %145 : vector<8x256xf32>
    %c8_132 = arith.constant 8 : index
    %c0_133 = arith.constant 0 : index
    %c0_134 = arith.constant 0 : index
    %147 = vector.load %arg2[%c8_132, %c0_133, %c0_134] : memref<9x256x256xbf16, #tpu.memory_space<vmem>>, vector<1x256x256xbf16>
    %148 = vector.shape_cast %147 : vector<1x256x256xbf16> to vector<256x256xbf16>
    %cst_135 = arith.constant dense<0.000000e+00> : vector<8x256xf32>
    %149 = tpu.matmul %83, %148, %cst_135 {dimension_numbers = #tpu.dot_dimension_numbers<[1], [0], [0], [1], [0, 0, 1, 1], [], []>} : vector<8x256xbf16>, vector<256x256xbf16>, vector<8x256xf32> -> vector<8x256xf32>
    %150 = arith.truncf %149 : vector<8x256xf32> to vector<8x256xbf16>
    %c8_136 = arith.constant 8 : index
    %c0_137 = arith.constant 0 : index
    %c0_138 = arith.constant 0 : index
    %151 = vector.load %arg5[%c8_136, %c0_137, %c0_138] : memref<9x8x8xbf16, #tpu.memory_space<vmem>>, vector<1x8x8xbf16>
    %152 = vector.shape_cast %151 : vector<1x8x8xbf16> to vector<8x8xbf16>
    %cst_139 = arith.constant dense<0.000000e+00> : vector<8x256xf32>
    %153 = tpu.matmul %152, %150, %cst_139 {dimension_numbers = #tpu.dot_dimension_numbers<[1], [0], [0], [1], [0, 0, 1, 1], [], []>} : vector<8x8xbf16>, vector<8x256xbf16>, vector<8x256xf32> -> vector<8x256xf32>
    %154 = arith.addf %146, %153 : vector<8x256xf32>
    %c0_140 = arith.constant 0 : index
    %c0_141 = arith.constant 0 : index
    %155 = vector.load %arg6[%c0_140, %c0_141] : memref<8x1xf32, #tpu.memory_space<vmem>>, vector<8x1xf32>
    %156 = vector.broadcast %155 : vector<8x1xf32> to vector<8x256xf32>
    %157 = arith.addf %154, %156 : vector<8x256xf32>
    %158 = arith.negf %157 : vector<8x256xf32>
    %159 = math.exp %158 : vector<8x256xf32>
    %cst_142 = arith.constant 1.000000e+00 : f32
    %160 = vector.broadcast %cst_142 : f32 to vector<8x256xf32>
    %161 = arith.addf %160, %159 : vector<8x256xf32>
    %162 = arith.divf %160, %161 : vector<8x256xf32>
    %163 = arith.mulf %157, %162 : vector<8x256xf32>
    %164 = arith.truncf %163 : vector<8x256xf32> to vector<8x256xbf16>
    %c0_143 = arith.constant 0 : index
    %c0_144 = arith.constant 0 : index
    %c0_145 = arith.constant 0 : index
    %165 = vector.load %arg7[%c0_143, %c0_144, %c0_145] : memref<1x8x8xbf16, #tpu.memory_space<vmem>>, vector<1x8x8xbf16>
    %166 = vector.shape_cast %165 : vector<1x8x8xbf16> to vector<8x8xbf16>
    %cst_146 = arith.constant dense<0.000000e+00> : vector<8x256xf32>
    %167 = tpu.matmul %166, %164, %cst_146 {dimension_numbers = #tpu.dot_dimension_numbers<[1], [0], [0], [1], [0, 0, 1, 1], [], []>} : vector<8x8xbf16>, vector<8x256xbf16>, vector<8x256xf32> -> vector<8x256xf32>
    %c0_147 = arith.constant 0 : index
    %c0_148 = arith.constant 0 : index
    %168 = vector.load %arg8[%c0_147, %c0_148] : memref<8x1xf32, #tpu.memory_space<vmem>>, vector<8x1xf32>
    %169 = vector.broadcast %168 : vector<8x1xf32> to vector<8x256xf32>
    %170 = arith.addf %167, %169 : vector<8x256xf32>
    %171 = arith.negf %170 : vector<8x256xf32>
    %172 = math.exp %171 : vector<8x256xf32>
    %cst_149 = arith.constant 1.000000e+00 : f32
    %173 = vector.broadcast %cst_149 : f32 to vector<8x256xf32>
    %174 = arith.addf %173, %172 : vector<8x256xf32>
    %175 = arith.divf %173, %174 : vector<8x256xf32>
    %176 = arith.mulf %170, %175 : vector<8x256xf32>
    %177 = arith.truncf %176 : vector<8x256xf32> to vector<8x256xbf16>
    %c0_150 = arith.constant 0 : index
    %c0_151 = arith.constant 0 : index
    %c0_152 = arith.constant 0 : index
    %178 = vector.load %arg2[%c0_150, %c0_151, %c0_152] : memref<9x256x256xbf16, #tpu.memory_space<vmem>>, vector<1x256x256xbf16>
    %179 = vector.shape_cast %178 : vector<1x256x256xbf16> to vector<256x256xbf16>
    %cst_153 = arith.constant dense<0.000000e+00> : vector<8x256xf32>
    %180 = tpu.matmul %177, %179, %cst_153 {dimension_numbers = #tpu.dot_dimension_numbers<[1], [0], [0], [1], [0, 0, 1, 1], [], []>} : vector<8x256xbf16>, vector<256x256xbf16>, vector<8x256xf32> -> vector<8x256xf32>
    %181 = arith.truncf %180 : vector<8x256xf32> to vector<8x256xbf16>
    %c0_154 = arith.constant 0 : index
    %c0_155 = arith.constant 0 : index
    %c0_156 = arith.constant 0 : index
    %182 = vector.load %arg11[%c0_154, %c0_155, %c0_156] : memref<9x8x8xbf16, #tpu.memory_space<vmem>>, vector<1x8x8xbf16>
    %183 = vector.shape_cast %182 : vector<1x8x8xbf16> to vector<8x8xbf16>
    %cst_157 = arith.constant dense<0.000000e+00> : vector<8x256xf32>
    %184 = tpu.matmul %183, %181, %cst_157 {dimension_numbers = #tpu.dot_dimension_numbers<[1], [0], [0], [1], [0, 0, 1, 1], [], []>} : vector<8x8xbf16>, vector<8x256xbf16>, vector<8x256xf32> -> vector<8x256xf32>
    %c1_158 = arith.constant 1 : index
    %c0_159 = arith.constant 0 : index
    %c0_160 = arith.constant 0 : index
    %185 = vector.load %arg2[%c1_158, %c0_159, %c0_160] : memref<9x256x256xbf16, #tpu.memory_space<vmem>>, vector<1x256x256xbf16>
    %186 = vector.shape_cast %185 : vector<1x256x256xbf16> to vector<256x256xbf16>
    %cst_161 = arith.constant dense<0.000000e+00> : vector<8x256xf32>
    %187 = tpu.matmul %177, %186, %cst_161 {dimension_numbers = #tpu.dot_dimension_numbers<[1], [0], [0], [1], [0, 0, 1, 1], [], []>} : vector<8x256xbf16>, vector<256x256xbf16>, vector<8x256xf32> -> vector<8x256xf32>
    %188 = arith.truncf %187 : vector<8x256xf32> to vector<8x256xbf16>
    %c1_162 = arith.constant 1 : index
    %c0_163 = arith.constant 0 : index
    %c0_164 = arith.constant 0 : index
    %189 = vector.load %arg11[%c1_162, %c0_163, %c0_164] : memref<9x8x8xbf16, #tpu.memory_space<vmem>>, vector<1x8x8xbf16>
    %190 = vector.shape_cast %189 : vector<1x8x8xbf16> to vector<8x8xbf16>
    %cst_165 = arith.constant dense<0.000000e+00> : vector<8x256xf32>
    %191 = tpu.matmul %190, %188, %cst_165 {dimension_numbers = #tpu.dot_dimension_numbers<[1], [0], [0], [1], [0, 0, 1, 1], [], []>} : vector<8x8xbf16>, vector<8x256xbf16>, vector<8x256xf32> -> vector<8x256xf32>
    %192 = arith.addf %184, %191 : vector<8x256xf32>
    %c2_166 = arith.constant 2 : index
    %c0_167 = arith.constant 0 : index
    %c0_168 = arith.constant 0 : index
    %193 = vector.load %arg2[%c2_166, %c0_167, %c0_168] : memref<9x256x256xbf16, #tpu.memory_space<vmem>>, vector<1x256x256xbf16>
    %194 = vector.shape_cast %193 : vector<1x256x256xbf16> to vector<256x256xbf16>
    %cst_169 = arith.constant dense<0.000000e+00> : vector<8x256xf32>
    %195 = tpu.matmul %177, %194, %cst_169 {dimension_numbers = #tpu.dot_dimension_numbers<[1], [0], [0], [1], [0, 0, 1, 1], [], []>} : vector<8x256xbf16>, vector<256x256xbf16>, vector<8x256xf32> -> vector<8x256xf32>
    %196 = arith.truncf %195 : vector<8x256xf32> to vector<8x256xbf16>
    %c2_170 = arith.constant 2 : index
    %c0_171 = arith.constant 0 : index
    %c0_172 = arith.constant 0 : index
    %197 = vector.load %arg11[%c2_170, %c0_171, %c0_172] : memref<9x8x8xbf16, #tpu.memory_space<vmem>>, vector<1x8x8xbf16>
    %198 = vector.shape_cast %197 : vector<1x8x8xbf16> to vector<8x8xbf16>
    %cst_173 = arith.constant dense<0.000000e+00> : vector<8x256xf32>
    %199 = tpu.matmul %198, %196, %cst_173 {dimension_numbers = #tpu.dot_dimension_numbers<[1], [0], [0], [1], [0, 0, 1, 1], [], []>} : vector<8x8xbf16>, vector<8x256xbf16>, vector<8x256xf32> -> vector<8x256xf32>
    %200 = arith.addf %192, %199 : vector<8x256xf32>
    %c3_174 = arith.constant 3 : index
    %c0_175 = arith.constant 0 : index
    %c0_176 = arith.constant 0 : index
    %201 = vector.load %arg2[%c3_174, %c0_175, %c0_176] : memref<9x256x256xbf16, #tpu.memory_space<vmem>>, vector<1x256x256xbf16>
    %202 = vector.shape_cast %201 : vector<1x256x256xbf16> to vector<256x256xbf16>
    %cst_177 = arith.constant dense<0.000000e+00> : vector<8x256xf32>
    %203 = tpu.matmul %177, %202, %cst_177 {dimension_numbers = #tpu.dot_dimension_numbers<[1], [0], [0], [1], [0, 0, 1, 1], [], []>} : vector<8x256xbf16>, vector<256x256xbf16>, vector<8x256xf32> -> vector<8x256xf32>
    %204 = arith.truncf %203 : vector<8x256xf32> to vector<8x256xbf16>
    %c3_178 = arith.constant 3 : index
    %c0_179 = arith.constant 0 : index
    %c0_180 = arith.constant 0 : index
    %205 = vector.load %arg11[%c3_178, %c0_179, %c0_180] : memref<9x8x8xbf16, #tpu.memory_space<vmem>>, vector<1x8x8xbf16>
    %206 = vector.shape_cast %205 : vector<1x8x8xbf16> to vector<8x8xbf16>
    %cst_181 = arith.constant dense<0.000000e+00> : vector<8x256xf32>
    %207 = tpu.matmul %206, %204, %cst_181 {dimension_numbers = #tpu.dot_dimension_numbers<[1], [0], [0], [1], [0, 0, 1, 1], [], []>} : vector<8x8xbf16>, vector<8x256xbf16>, vector<8x256xf32> -> vector<8x256xf32>
    %208 = arith.addf %200, %207 : vector<8x256xf32>
    %c4_182 = arith.constant 4 : index
    %c0_183 = arith.constant 0 : index
    %c0_184 = arith.constant 0 : index
    %209 = vector.load %arg2[%c4_182, %c0_183, %c0_184] : memref<9x256x256xbf16, #tpu.memory_space<vmem>>, vector<1x256x256xbf16>
    %210 = vector.shape_cast %209 : vector<1x256x256xbf16> to vector<256x256xbf16>
    %cst_185 = arith.constant dense<0.000000e+00> : vector<8x256xf32>
    %211 = tpu.matmul %177, %210, %cst_185 {dimension_numbers = #tpu.dot_dimension_numbers<[1], [0], [0], [1], [0, 0, 1, 1], [], []>} : vector<8x256xbf16>, vector<256x256xbf16>, vector<8x256xf32> -> vector<8x256xf32>
    %212 = arith.truncf %211 : vector<8x256xf32> to vector<8x256xbf16>
    %c4_186 = arith.constant 4 : index
    %c0_187 = arith.constant 0 : index
    %c0_188 = arith.constant 0 : index
    %213 = vector.load %arg11[%c4_186, %c0_187, %c0_188] : memref<9x8x8xbf16, #tpu.memory_space<vmem>>, vector<1x8x8xbf16>
    %214 = vector.shape_cast %213 : vector<1x8x8xbf16> to vector<8x8xbf16>
    %cst_189 = arith.constant dense<0.000000e+00> : vector<8x256xf32>
    %215 = tpu.matmul %214, %212, %cst_189 {dimension_numbers = #tpu.dot_dimension_numbers<[1], [0], [0], [1], [0, 0, 1, 1], [], []>} : vector<8x8xbf16>, vector<8x256xbf16>, vector<8x256xf32> -> vector<8x256xf32>
    %216 = arith.addf %208, %215 : vector<8x256xf32>
    %c5_190 = arith.constant 5 : index
    %c0_191 = arith.constant 0 : index
    %c0_192 = arith.constant 0 : index
    %217 = vector.load %arg2[%c5_190, %c0_191, %c0_192] : memref<9x256x256xbf16, #tpu.memory_space<vmem>>, vector<1x256x256xbf16>
    %218 = vector.shape_cast %217 : vector<1x256x256xbf16> to vector<256x256xbf16>
    %cst_193 = arith.constant dense<0.000000e+00> : vector<8x256xf32>
    %219 = tpu.matmul %177, %218, %cst_193 {dimension_numbers = #tpu.dot_dimension_numbers<[1], [0], [0], [1], [0, 0, 1, 1], [], []>} : vector<8x256xbf16>, vector<256x256xbf16>, vector<8x256xf32> -> vector<8x256xf32>
    %220 = arith.truncf %219 : vector<8x256xf32> to vector<8x256xbf16>
    %c5_194 = arith.constant 5 : index
    %c0_195 = arith.constant 0 : index
    %c0_196 = arith.constant 0 : index
    %221 = vector.load %arg11[%c5_194, %c0_195, %c0_196] : memref<9x8x8xbf16, #tpu.memory_space<vmem>>, vector<1x8x8xbf16>
    %222 = vector.shape_cast %221 : vector<1x8x8xbf16> to vector<8x8xbf16>
    %cst_197 = arith.constant dense<0.000000e+00> : vector<8x256xf32>
    %223 = tpu.matmul %222, %220, %cst_197 {dimension_numbers = #tpu.dot_dimension_numbers<[1], [0], [0], [1], [0, 0, 1, 1], [], []>} : vector<8x8xbf16>, vector<8x256xbf16>, vector<8x256xf32> -> vector<8x256xf32>
    %224 = arith.addf %216, %223 : vector<8x256xf32>
    %c6_198 = arith.constant 6 : index
    %c0_199 = arith.constant 0 : index
    %c0_200 = arith.constant 0 : index
    %225 = vector.load %arg2[%c6_198, %c0_199, %c0_200] : memref<9x256x256xbf16, #tpu.memory_space<vmem>>, vector<1x256x256xbf16>
    %226 = vector.shape_cast %225 : vector<1x256x256xbf16> to vector<256x256xbf16>
    %cst_201 = arith.constant dense<0.000000e+00> : vector<8x256xf32>
    %227 = tpu.matmul %177, %226, %cst_201 {dimension_numbers = #tpu.dot_dimension_numbers<[1], [0], [0], [1], [0, 0, 1, 1], [], []>} : vector<8x256xbf16>, vector<256x256xbf16>, vector<8x256xf32> -> vector<8x256xf32>
    %228 = arith.truncf %227 : vector<8x256xf32> to vector<8x256xbf16>
    %c6_202 = arith.constant 6 : index
    %c0_203 = arith.constant 0 : index
    %c0_204 = arith.constant 0 : index
    %229 = vector.load %arg11[%c6_202, %c0_203, %c0_204] : memref<9x8x8xbf16, #tpu.memory_space<vmem>>, vector<1x8x8xbf16>
    %230 = vector.shape_cast %229 : vector<1x8x8xbf16> to vector<8x8xbf16>
    %cst_205 = arith.constant dense<0.000000e+00> : vector<8x256xf32>
    %231 = tpu.matmul %230, %228, %cst_205 {dimension_numbers = #tpu.dot_dimension_numbers<[1], [0], [0], [1], [0, 0, 1, 1], [], []>} : vector<8x8xbf16>, vector<8x256xbf16>, vector<8x256xf32> -> vector<8x256xf32>
    %232 = arith.addf %224, %231 : vector<8x256xf32>
    %c7_206 = arith.constant 7 : index
    %c0_207 = arith.constant 0 : index
    %c0_208 = arith.constant 0 : index
    %233 = vector.load %arg2[%c7_206, %c0_207, %c0_208] : memref<9x256x256xbf16, #tpu.memory_space<vmem>>, vector<1x256x256xbf16>
    %234 = vector.shape_cast %233 : vector<1x256x256xbf16> to vector<256x256xbf16>
    %cst_209 = arith.constant dense<0.000000e+00> : vector<8x256xf32>
    %235 = tpu.matmul %177, %234, %cst_209 {dimension_numbers = #tpu.dot_dimension_numbers<[1], [0], [0], [1], [0, 0, 1, 1], [], []>} : vector<8x256xbf16>, vector<256x256xbf16>, vector<8x256xf32> -> vector<8x256xf32>
    %236 = arith.truncf %235 : vector<8x256xf32> to vector<8x256xbf16>
    %c7_210 = arith.constant 7 : index
    %c0_211 = arith.constant 0 : index
    %c0_212 = arith.constant 0 : index
    %237 = vector.load %arg11[%c7_210, %c0_211, %c0_212] : memref<9x8x8xbf16, #tpu.memory_space<vmem>>, vector<1x8x8xbf16>
    %238 = vector.shape_cast %237 : vector<1x8x8xbf16> to vector<8x8xbf16>
    %cst_213 = arith.constant dense<0.000000e+00> : vector<8x256xf32>
    %239 = tpu.matmul %238, %236, %cst_213 {dimension_numbers = #tpu.dot_dimension_numbers<[1], [0], [0], [1], [0, 0, 1, 1], [], []>} : vector<8x8xbf16>, vector<8x256xbf16>, vector<8x256xf32> -> vector<8x256xf32>
    %240 = arith.addf %232, %239 : vector<8x256xf32>
    %c8_214 = arith.constant 8 : index
    %c0_215 = arith.constant 0 : index
    %c0_216 = arith.constant 0 : index
    %241 = vector.load %arg2[%c8_214, %c0_215, %c0_216] : memref<9x256x256xbf16, #tpu.memory_space<vmem>>, vector<1x256x256xbf16>
    %242 = vector.shape_cast %241 : vector<1x256x256xbf16> to vector<256x256xbf16>
    %cst_217 = arith.constant dense<0.000000e+00> : vector<8x256xf32>
    %243 = tpu.matmul %177, %242, %cst_217 {dimension_numbers = #tpu.dot_dimension_numbers<[1], [0], [0], [1], [0, 0, 1, 1], [], []>} : vector<8x256xbf16>, vector<256x256xbf16>, vector<8x256xf32> -> vector<8x256xf32>
    %244 = arith.truncf %243 : vector<8x256xf32> to vector<8x256xbf16>
    %c8_218 = arith.constant 8 : index
    %c0_219 = arith.constant 0 : index
    %c0_220 = arith.constant 0 : index
    %245 = vector.load %arg11[%c8_218, %c0_219, %c0_220] : memref<9x8x8xbf16, #tpu.memory_space<vmem>>, vector<1x8x8xbf16>
    %246 = vector.shape_cast %245 : vector<1x8x8xbf16> to vector<8x8xbf16>
    %cst_221 = arith.constant dense<0.000000e+00> : vector<8x256xf32>
    %247 = tpu.matmul %246, %244, %cst_221 {dimension_numbers = #tpu.dot_dimension_numbers<[1], [0], [0], [1], [0, 0, 1, 1], [], []>} : vector<8x8xbf16>, vector<8x256xbf16>, vector<8x256xf32> -> vector<8x256xf32>
    %248 = arith.addf %240, %247 : vector<8x256xf32>
    %c0_222 = arith.constant 0 : index
    %c0_223 = arith.constant 0 : index
    %249 = vector.load %arg12[%c0_222, %c0_223] : memref<8x1xf32, #tpu.memory_space<vmem>>, vector<8x1xf32>
    %250 = vector.broadcast %249 : vector<8x1xf32> to vector<8x256xf32>
    %251 = arith.addf %248, %250 : vector<8x256xf32>
    %252 = arith.negf %251 : vector<8x256xf32>
    %253 = math.exp %252 : vector<8x256xf32>
    %cst_224 = arith.constant 1.000000e+00 : f32
    %254 = vector.broadcast %cst_224 : f32 to vector<8x256xf32>
    %255 = arith.addf %254, %253 : vector<8x256xf32>
    %256 = arith.divf %254, %255 : vector<8x256xf32>
    %257 = arith.mulf %251, %256 : vector<8x256xf32>
    %c0_225 = arith.constant 0 : index
    %c0_226 = arith.constant 0 : index
    %c0_227 = arith.constant 0 : index
    %258 = vector.load %arg13[%c0_225, %c0_226, %c0_227] : memref<1x8x256xf32, #tpu.memory_space<vmem>>, vector<1x8x256xf32>
    %259 = vector.shape_cast %258 : vector<1x8x256xf32> to vector<8x256xf32>
    %260 = vector.shape_cast %257 : vector<8x256xf32> to vector<1x8x256xf32>
    tpu.vector_store %arg13[%c0_225, %c0_226, %c0_227], %260 {strides = array<i32>} : memref<1x8x256xf32, #tpu.memory_space<vmem>>, vector<1x8x256xf32>,
    return
  }
  func.func @transform_0(%arg0: i32) -> (i32, i32, i32) {
    %c0_i32 = arith.constant 0 : i32
    %c0_i32_0 = arith.constant 0 : i32
    %c0_i32_1 = arith.constant 0 : i32
    return %arg0, %c0_i32, %c0_i32_0 : i32, i32, i32
  }
  func.func @transform_1(%arg0: i32) -> (i32, i32, i32) {
    %c0_i32 = arith.constant 0 : i32
    %c0_i32_0 = arith.constant 0 : i32
    %c0_i32_1 = arith.constant 0 : i32
    %c0_i32_2 = arith.constant 0 : i32
    return %c0_i32, %c0_i32_0, %c0_i32_1 : i32, i32, i32
  }
  func.func @transform_2(%arg0: i32) -> (i32, i32, i32) {
    %c0_i32 = arith.constant 0 : i32
    %c0_i32_0 = arith.constant 0 : i32
    %c0_i32_1 = arith.constant 0 : i32
    %c0_i32_2 = arith.constant 0 : i32
    return %c0_i32, %c0_i32_0, %c0_i32_1 : i32, i32, i32
  }
  func.func @transform_3(%arg0: i32) -> (i32, i32) {
    %c0_i32 = arith.constant 0 : i32
    %c0_i32_0 = arith.constant 0 : i32
    %c0_i32_1 = arith.constant 0 : i32
    return %c0_i32, %c0_i32_0 : i32, i32
  }
  func.func @transform_4(%arg0: i32) -> (i32, i32, i32) {
    %c0_i32 = arith.constant 0 : i32
    %c0_i32_0 = arith.constant 0 : i32
    %c0_i32_1 = arith.constant 0 : i32
    %c0_i32_2 = arith.constant 0 : i32
    return %c0_i32, %c0_i32_0, %c0_i32_1 : i32, i32, i32
  }
  func.func @transform_5(%arg0: i32) -> (i32, i32) {
    %c0_i32 = arith.constant 0 : i32
    %c0_i32_0 = arith.constant 0 : i32
    %c0_i32_1 = arith.constant 0 : i32
    return %c0_i32, %c0_i32_0 : i32, i32
  }
  func.func @transform_6(%arg0: i32) -> (i32, i32, i32) {
    %c0_i32 = arith.constant 0 : i32
    %c0_i32_0 = arith.constant 0 : i32
    %c0_i32_1 = arith.constant 0 : i32
    %c0_i32_2 = arith.constant 0 : i32
    return %c0_i32, %c0_i32_0, %c0_i32_1 : i32, i32, i32
  }
  func.func @transform_7(%arg0: i32) -> (i32, i32) {
    %c0_i32 = arith.constant 0 : i32
    %c0_i32_0 = arith.constant 0 : i32
    %c0_i32_1 = arith.constant 0 : i32
    return %c0_i32, %c0_i32_0 : i32, i32
  }
  func.func @transform_8(%arg0: i32) -> (i32, i32, i32) {
    %c0_i32 = arith.constant 0 : i32
    %c0_i32_0 = arith.constant 0 : i32
    %c0_i32_1 = arith.constant 0 : i32
    %c0_i32_2 = arith.constant 0 : i32
    return %c0_i32, %c0_i32_0, %c0_i32_1 : i32, i32, i32
  }
  func.func @transform_9(%arg0: i32) -> (i32, i32) {
    %c0_i32 = arith.constant 0 : i32
    %c0_i32_0 = arith.constant 0 : i32
    %c0_i32_1 = arith.constant 0 : i32
    return %c0_i32, %c0_i32_0 : i32, i32
  }
  func.func @transform_10(%arg0: i32) -> (i32, i32, i32) {
    %c0_i32 = arith.constant 0 : i32
    %c0_i32_0 = arith.constant 0 : i32
    %c0_i32_1 = arith.constant 0 : i32
    %c0_i32_2 = arith.constant 0 : i32
    return %c0_i32, %c0_i32_0, %c0_i32_1 : i32, i32, i32
  }
  func.func @transform_11(%arg0: i32) -> (i32, i32) {
    %c0_i32 = arith.constant 0 : i32
    %c0_i32_0 = arith.constant 0 : i32
    %c0_i32_1 = arith.constant 0 : i32
    return %c0_i32, %c0_i32_0 : i32, i32
  }
  func.func @transform_12(%arg0: i32) -> (i32, i32, i32) {
    %c0_i32 = arith.constant 0 : i32
    %c0_i32_0 = arith.constant 0 : i32
    %c0_i32_1 = arith.constant 0 : i32
    return %arg0, %c0_i32, %c0_i32_0 : i32, i32, i32
  }
}

</mosaic_0001>

<llo_original>
// kernel: apply.1
$region0: #{apply.1}
  #allocation0 [shape = 'u32[]', space=smem, size = 0x4, offset = 0x4, fixed_abs, tag = 'smem constant byte address 0x4 - core index']
  #allocation1 [shape = 'u32[72,128]{1,0:T(1,128)}', space=vmem, size = 0x9000, scoped, tag = 'internal scratch']
  %s0 = inlined_call_operand.vmem [shape: f32[2,8,256], index: 0, kind: input, shape index: {}]
  %s1 = inlined_call_operand.hbm [shape: bf16[9,256,256], index: 1, kind: input, shape index: {}]
  %s2 = inlined_call_operand.hbm [shape: bf16[9,8,8], index: 2, kind: input, shape index: {}]
  %s3 = inlined_call_operand.hbm [shape: f32[8,1], index: 3, kind: input, shape index: {}]
  %s4 = inlined_call_operand.hbm [shape: bf16[9,8,8], index: 4, kind: input, shape index: {}]
  %s5 = inlined_call_operand.hbm [shape: f32[8,1], index: 5, kind: input, shape index: {}]
  %s6 = inlined_call_operand.hbm [shape: bf16[1,8,8], index: 6, kind: input, shape index: {}]
  %s7 = inlined_call_operand.hbm [shape: f32[8,1], index: 7, kind: input, shape index: {}]
  %s8 = inlined_call_operand.hbm [shape: bf16[1,8,16], index: 8, kind: input, shape index: {}]
  %s9 = inlined_call_operand.hbm [shape: f32[8,1], index: 9, kind: input, shape index: {}]
  %s10 = inlined_call_operand.hbm [shape: bf16[9,8,8], index: 10, kind: input, shape index: {}]
  %s11 = inlined_call_operand.hbm [shape: f32[8,1], index: 11, kind: input, shape index: {}]
  %s12 = inlined_call_operand.vmem [shape: f32[2,8,256], index: 12, kind: output, shape index: {}]
  %s13 = sld [smem:[#allocation0]]
  $region125: #{apply.1} parent=0
    _
  %s15 = ssub.s32 1, %s13
  %s16 = scalar_select 0, %s15, %s13
  $region1: #{apply.1} parent=0
    #allocation2 [shape = 'u8[1179648]{0}', space=vmem, size = 0x120000, scoped, tag = 'input window, operand 1, single buffered']
    #allocation3 [shape = 's32[2]{0}', space=sflag, size = 0x8, scoped, tag = 'scoped memory for apply.1']
    #allocation4 [shape = 'u8[18432]{0}', space=vmem, size = 0x4800, scoped, tag = 'input window, operand 2, single buffered']
    #allocation5 [shape = 's32[1]{0}', space=sflag, size = 0x4, scoped, tag = 'scoped memory for apply.1']
    #allocation6 [shape = 'u8[4096]{0}', space=vmem, size = 0x1000, scoped, tag = 'input window, operand 3, single buffered']
    #allocation7 [shape = 'u8[18432]{0}', space=vmem, size = 0x4800, scoped, tag = 'input window, operand 4, single buffered']
    #allocation8 [shape = 's32[1]{0}', space=sflag, size = 0x4, scoped, tag = 'scoped memory for apply.1']
    #allocation9 [shape = 'u8[4096]{0}', space=vmem, size = 0x1000, scoped, tag = 'input window, operand 5, single buffered']
    #allocation10 [shape = 'u8[2048]{0}', space=vmem, size = 0x800, scoped, tag = 'input window, operand 6, single buffered']
    #allocation11 [shape = 's32[1]{0}', space=sflag, size = 0x4, scoped, tag = 'scoped memory for apply.1']
    #allocation12 [shape = 'u8[4096]{0}', space=vmem, size = 0x1000, scoped, tag = 'input window, operand 7, single buffered']
    #allocation13 [shape = 'u8[2048]{0}', space=vmem, size = 0x800, scoped, tag = 'input window, operand 8, single buffered']
    #allocation14 [shape = 's32[1]{0}', space=sflag, size = 0x4, scoped, tag = 'scoped memory for apply.1']
    #allocation15 [shape = 'u8[4096]{0}', space=vmem, size = 0x1000, scoped, tag = 'input window, operand 9, single buffered']
    #allocation16 [shape = 'u8[18432]{0}', space=vmem, size = 0x4800, scoped, tag = 'input window, operand 10, single buffered']
    #allocation17 [shape = 's32[1]{0}', space=sflag, size = 0x4, scoped, tag = 'scoped memory for apply.1']
    #allocation18 [shape = 'u8[4096]{0}', space=vmem, size = 0x1000, scoped, tag = 'input window, operand 11, single buffered']
    %17 = vsyncpa [#allocation3], 0
    %18 = vsyncpa [#allocation5], 0
    %19 = vsyncpa [#allocation8], 0
    %20 = vsyncpa [#allocation11], 0
    %21 = vsyncpa [#allocation14], 0
    %22 = vsyncpa [#allocation17], 0
    loop: start=0, step=1, limit=4
    $region2: #{apply.1} parent=1 // loop_pre_header
      _
    $region3: #{apply.1} parent=1 // loop_header
      %s24 = sphi 0, %s28
      %p25 = scmp.ge.s32.totalorder %s24, 4
      %s34 = sphi 0, %s36
      %s37 = sphi 0, %s34
      %s38 = sphi 0, %s37
      %s54 = sphi 0, %s38
      %s58 = sphi 0, %s58
      %s60 = sphi 0, %s58
      %s61 = sphi 0, %s60
      %s75 = sphi 0, %s61
      %s79 = sphi 0, %s79
      %s81 = sphi 0, %s79
      %s82 = sphi 0, %s81
      %s96 = sphi 0, %s82
      %s100 = sphi 0, %s100
      %s102 = sphi 0, %s100
      %s103 = sphi 0, %s102
      %s117 = sphi 0, %s103
      %s121 = sphi 0, %s121
      %s123 = sphi 0, %s121
      %s124 = sphi 0, %s123
      %s138 = sphi 0, %s124
      %s142 = sphi 0, %s142
      %s144 = sphi 0, %s142
      %s145 = sphi 0, %s144
      %s159 = sphi 0, %s145
      %s163 = sphi 0, %s163
      %s165 = sphi 0, %s163
      %s166 = sphi 0, %s165
      %s180 = sphi 0, %s166
      %s184 = sphi 0, %s184
      %s186 = sphi 0, %s184
      %s187 = sphi 0, %s186
      %s201 = sphi 0, %s187
      %s205 = sphi 0, %s205
      %s207 = sphi 0, %s205
      %s208 = sphi 0, %s207
      %s222 = sphi 0, %s208
      %s226 = sphi 0, %s226
      %s228 = sphi 0, %s226
      %s229 = sphi 0, %s228
      %s243 = sphi 0, %s229
      %s247 = sphi 0, %s247
      %s249 = sphi 0, %s247
      %s250 = sphi 0, %s249
      %s264 = sphi 0, %s250
      %s268 = sphi 0, %s268
      %s270 = sphi 0, %s268
      %s271 = sphi 0, %s270
      %s285 = sphi 0, %s271
      %s291 = sphi 0, %s293
      %s294 = sphi 0, %s291
      %s295 = sphi 0, %s294
      %s311 = sphi 0, %s295
    $region4: #{apply.1} parent=1 // loop_header_branch
      %27 = sbr.rel (%p25) target = $region8
    $region5: #{apply.1} parent=1 // loop_body
      %s29 = ssub.s32 %s24, 1
      %s30 = ssub.s32 %s24, 2
      %s31 = sadd.s32 %s24, 1
      %s32 = ssub.s32 %s24, %s31
      %p33 = scmp.eq.s32.totalorder %s32, 0
      %s35 = sadd.s32 %s34, 1
      %s36 = scalar_select %p33, %s34, %s35
      %p39 = pneg %p33
      %p40 = scmp.eq.s32.totalorder %s24, 1
      %p41 = por %p39, %p40
      %p42 = scmp.ne.s32.totalorder %s34, %s37
      %p43 = scmp.eq.s32.totalorder %s24, 0
      %p44 = por %p42, %p43
      %p45 = scmp.ne.s32.totalorder %s34, %s37
      %p46 = scmp.eq.s32.totalorder %s29, 1
      %p47 = por %p45, %p46
      %p48 = scmp.ne.s32.totalorder %s37, %s38
      %p49 = scmp.eq.s32.totalorder %s29, 0
      %p50 = por %p48, %p49
      %p51 = scmp.ne.s32.totalorder %s37, %s38
      %p52 = scmp.eq.s32.totalorder %s30, 1
      %p53 = por %p51, %p52
      %p55 = scmp.ne.s32.totalorder %s38, %s54
      %p56 = scmp.eq.s32.totalorder %s30, 0
      %p57 = por %p55, %p56
      %s59 = sadd.s32 %s58, 1
      %p62 = scmp.eq.s32.totalorder %s24, 1
      %p63 = scmp.ne.s32.totalorder %s58, %s60
      %p64 = scmp.eq.s32.totalorder %s24, 0
      %p65 = por %p63, %p64
      %p66 = scmp.ne.s32.totalorder %s58, %s60
      %p67 = scmp.eq.s32.totalorder %s29, 1
      %p68 = por %p66, %p67
      %p69 = scmp.ne.s32.totalorder %s60, %s61
      %p70 = scmp.eq.s32.totalorder %s29, 0
      %p71 = por %p69, %p70
      %p72 = scmp.ne.s32.totalorder %s60, %s61
      %p73 = scmp.eq.s32.totalorder %s30, 1
      %p74 = por %p72, %p73
      %p76 = scmp.ne.s32.totalorder %s61, %s75
      %p77 = scmp.eq.s32.totalorder %s30, 0
      %p78 = por %p76, %p77
      %s80 = sadd.s32 %s79, 1
      %p83 = scmp.eq.s32.totalorder %s24, 1
      %p84 = scmp.ne.s32.totalorder %s79, %s81
      %p85 = scmp.eq.s32.totalorder %s24, 0
      %p86 = por %p84, %p85
      %p87 = scmp.ne.s32.totalorder %s79, %s81
      %p88 = scmp.eq.s32.totalorder %s29, 1
      %p89 = por %p87, %p88
      %p90 = scmp.ne.s32.totalorder %s81, %s82
      %p91 = scmp.eq.s32.totalorder %s29, 0
      %p92 = por %p90, %p91
      %p93 = scmp.ne.s32.totalorder %s81, %s82
      %p94 = scmp.eq.s32.totalorder %s30, 1
      %p95 = por %p93, %p94
      %p97 = scmp.ne.s32.totalorder %s82, %s96
      %p98 = scmp.eq.s32.totalorder %s30, 0
      %p99 = por %p97, %p98
      %s101 = sadd.s32 %s100, 1
      %p104 = scmp.eq.s32.totalorder %s24, 1
      %p105 = scmp.ne.s32.totalorder %s100, %s102
      %p106 = scmp.eq.s32.totalorder %s24, 0
      %p107 = por %p105, %p106
      %p108 = scmp.ne.s32.totalorder %s100, %s102
      %p109 = scmp.eq.s32.totalorder %s29, 1
      %p110 = por %p108, %p109
      %p111 = scmp.ne.s32.totalorder %s102, %s103
      %p112 = scmp.eq.s32.totalorder %s29, 0
      %p113 = por %p111, %p112
      %p114 = scmp.ne.s32.totalorder %s102, %s103
      %p115 = scmp.eq.s32.totalorder %s30, 1
      %p116 = por %p114, %p115
      %p118 = scmp.ne.s32.totalorder %s103, %s117
      %p119 = scmp.eq.s32.totalorder %s30, 0
      %p120 = por %p118, %p119
      %s122 = sadd.s32 %s121, 1
      %p125 = scmp.eq.s32.totalorder %s24, 1
      %p126 = scmp.ne.s32.totalorder %s121, %s123
      %p127 = scmp.eq.s32.totalorder %s24, 0
      %p128 = por %p126, %p127
      %p129 = scmp.ne.s32.totalorder %s121, %s123
      %p130 = scmp.eq.s32.totalorder %s29, 1
      %p131 = por %p129, %p130
      %p132 = scmp.ne.s32.totalorder %s123, %s124
      %p133 = scmp.eq.s32.totalorder %s29, 0
      %p134 = por %p132, %p133
      %p135 = scmp.ne.s32.totalorder %s123, %s124
      %p136 = scmp.eq.s32.totalorder %s30, 1
      %p137 = por %p135, %p136
      %p139 = scmp.ne.s32.totalorder %s124, %s138
      %p140 = scmp.eq.s32.totalorder %s30, 0
      %p141 = por %p139, %p140
      %s143 = sadd.s32 %s142, 1
      %p146 = scmp.eq.s32.totalorder %s24, 1
      %p147 = scmp.ne.s32.totalorder %s142, %s144
      %p148 = scmp.eq.s32.totalorder %s24, 0
      %p149 = por %p147, %p148
      %p150 = scmp.ne.s32.totalorder %s142, %s144
      %p151 = scmp.eq.s32.totalorder %s29, 1
      %p152 = por %p150, %p151
      %p153 = scmp.ne.s32.totalorder %s144, %s145
      %p154 = scmp.eq.s32.totalorder %s29, 0
      %p155 = por %p153, %p154
      %p156 = scmp.ne.s32.totalorder %s144, %s145
      %p157 = scmp.eq.s32.totalorder %s30, 1
      %p158 = por %p156, %p157
      %p160 = scmp.ne.s32.totalorder %s145, %s159
      %p161 = scmp.eq.s32.totalorder %s30, 0
      %p162 = por %p160, %p161
      %s164 = sadd.s32 %s163, 1
      %p167 = scmp.eq.s32.totalorder %s24, 1
      %p168 = scmp.ne.s32.totalorder %s163, %s165
      %p169 = scmp.eq.s32.totalorder %s24, 0
      %p170 = por %p168, %p169
      %p171 = scmp.ne.s32.totalorder %s163, %s165
      %p172 = scmp.eq.s32.totalorder %s29, 1
      %p173 = por %p171, %p172
      %p174 = scmp.ne.s32.totalorder %s165, %s166
      %p175 = scmp.eq.s32.totalorder %s29, 0
      %p176 = por %p174, %p175
      %p177 = scmp.ne.s32.totalorder %s165, %s166
      %p178 = scmp.eq.s32.totalorder %s30, 1
      %p179 = por %p177, %p178
      %p181 = scmp.ne.s32.totalorder %s166, %s180
      %p182 = scmp.eq.s32.totalorder %s30, 0
      %p183 = por %p181, %p182
      %s185 = sadd.s32 %s184, 1
      %p188 = scmp.eq.s32.totalorder %s24, 1
      %p189 = scmp.ne.s32.totalorder %s184, %s186
      %p190 = scmp.eq.s32.totalorder %s24, 0
      %p191 = por %p189, %p190
      %p192 = scmp.ne.s32.totalorder %s184, %s186
      %p193 = scmp.eq.s32.totalorder %s29, 1
      %p194 = por %p192, %p193
      %p195 = scmp.ne.s32.totalorder %s186, %s187
      %p196 = scmp.eq.s32.totalorder %s29, 0
      %p197 = por %p195, %p196
      %p198 = scmp.ne.s32.totalorder %s186, %s187
      %p199 = scmp.eq.s32.totalorder %s30, 1
      %p200 = por %p198, %p199
      %p202 = scmp.ne.s32.totalorder %s187, %s201
      %p203 = scmp.eq.s32.totalorder %s30, 0
      %p204 = por %p202, %p203
      %s206 = sadd.s32 %s205, 1
      %p209 = scmp.eq.s32.totalorder %s24, 1
      %p210 = scmp.ne.s32.totalorder %s205, %s207
      %p211 = scmp.eq.s32.totalorder %s24, 0
      %p212 = por %p210, %p211
      %p213 = scmp.ne.s32.totalorder %s205, %s207
      %p214 = scmp.eq.s32.totalorder %s29, 1
      %p215 = por %p213, %p214
      %p216 = scmp.ne.s32.totalorder %s207, %s208
      %p217 = scmp.eq.s32.totalorder %s29, 0
      %p218 = por %p216, %p217
      %p219 = scmp.ne.s32.totalorder %s207, %s208
      %p220 = scmp.eq.s32.totalorder %s30, 1
      %p221 = por %p219, %p220
      %p223 = scmp.ne.s32.totalorder %s208, %s222
      %p224 = scmp.eq.s32.totalorder %s30, 0
      %p225 = por %p223, %p224
      %s227 = sadd.s32 %s226, 1
      %p230 = scmp.eq.s32.totalorder %s24, 1
      %p231 = scmp.ne.s32.totalorder %s226, %s228
      %p232 = scmp.eq.s32.totalorder %s24, 0
      %p233 = por %p231, %p232
      %p234 = scmp.ne.s32.totalorder %s226, %s228
      %p235 = scmp.eq.s32.totalorder %s29, 1
      %p236 = por %p234, %p235
      %p237 = scmp.ne.s32.totalorder %s228, %s229
      %p238 = scmp.eq.s32.totalorder %s29, 0
      %p239 = por %p237, %p238
      %p240 = scmp.ne.s32.totalorder %s228, %s229
      %p241 = scmp.eq.s32.totalorder %s30, 1
      %p242 = por %p240, %p241
      %p244 = scmp.ne.s32.totalorder %s229, %s243
      %p245 = scmp.eq.s32.totalorder %s30, 0
      %p246 = por %p244, %p245
      %s248 = sadd.s32 %s247, 1
      %p251 = scmp.eq.s32.totalorder %s24, 1
      %p252 = scmp.ne.s32.totalorder %s247, %s249
      %p253 = scmp.eq.s32.totalorder %s24, 0
      %p254 = por %p252, %p253
      %p255 = scmp.ne.s32.totalorder %s247, %s249
      %p256 = scmp.eq.s32.totalorder %s29, 1
      %p257 = por %p255, %p256
      %p258 = scmp.ne.s32.totalorder %s249, %s250
      %p259 = scmp.eq.s32.totalorder %s29, 0
      %p260 = por %p258, %p259
      %p261 = scmp.ne.s32.totalorder %s249, %s250
      %p262 = scmp.eq.s32.totalorder %s30, 1
      %p263 = por %p261, %p262
      %p265 = scmp.ne.s32.totalorder %s250, %s264
      %p266 = scmp.eq.s32.totalorder %s30, 0
      %p267 = por %p265, %p266
      %s269 = sadd.s32 %s268, 1
      %p272 = scmp.eq.s32.totalorder %s24, 1
      %p273 = scmp.ne.s32.totalorder %s268, %s270
      %p274 = scmp.eq.s32.totalorder %s24, 0
      %p275 = por %p273, %p274
      %p276 = scmp.ne.s32.totalorder %s268, %s270
      %p277 = scmp.eq.s32.totalorder %s29, 1
      %p278 = por %p276, %p277
      %p279 = scmp.ne.s32.totalorder %s270, %s271
      %p280 = scmp.eq.s32.totalorder %s29, 0
      %p281 = por %p279, %p280
      %p282 = scmp.ne.s32.totalorder %s270, %s271
      %p283 = scmp.eq.s32.totalorder %s30, 1
      %p284 = por %p282, %p283
      %p286 = scmp.ne.s32.totalorder %s271, %s285
      %p287 = scmp.eq.s32.totalorder %s30, 0
      %p288 = por %p286, %p287
      %s289 = ssub.s32 %s24, %s31
      %p290 = scmp.eq.s32.totalorder %s289, 0
      %s292 = sadd.s32 %s291, 1
      %s293 = scalar_select %p290, %s291, %s292
      %p296 = pneg %p290
      %p297 = scmp.eq.s32.totalorder %s24, 1
      %p298 = por %p296, %p297
      %p299 = scmp.ne.s32.totalorder %s291, %s294
      %p300 = scmp.eq.s32.totalorder %s24, 0
      %p301 = por %p299, %p300
      %p302 = scmp.ne.s32.totalorder %s291, %s294
      %p303 = scmp.eq.s32.totalorder %s29, 1
      %p304 = por %p302, %p303
      %p305 = scmp.ne.s32.totalorder %s294, %s295
      %p306 = scmp.eq.s32.totalorder %s29, 0
      %p307 = por %p305, %p306
      %p308 = scmp.ne.s32.totalorder %s294, %s295
      %p309 = scmp.eq.s32.totalorder %s30, 1
      %p310 = por %p308, %p309
      %p312 = scmp.ne.s32.totalorder %s295, %s311
      %p313 = scmp.eq.s32.totalorder %s30, 0
      %p314 = por %p312, %p313
      %p315 = scmp.le.s32.totalorder 1, %s24
      %p316 = scmp.lt.s32.totalorder %s24, 3
      %p317 = pnand %p315, %p316
      %p318 = pneg %p317
      // Predicated region
      $region9: #{apply.1} parent=5 // pred_check
        _
      $region10: #{apply.1} parent=5 // pred_check_branch
        %320 = sbr.rel (%p317) target = $region12
      $region11: #{apply.1} parent=5 // pred_region
        %s321 = ssub.s32 %s24, 1
        // Predicated region
        $region13: #{apply.1} parent=11 // pred_check
          %p322 = pneg %p71
        $region14: #{apply.1} parent=11 // pred_check_branch
          %324 = sbr.rel (%p322) target = $region16
        $region15: #{apply.1} parent=11 // pred_region
          %326 = vsyncadd [#allocation3], 0
          %s327 = sshll.u32 %s1, 4
          %s328 = int_to_ptr.hbm [resolvable:$true] %s327
          %s329 = sshll.u32 [#allocation2], 4
          %s330 = int_to_ptr.vmem [resolvable:$true] %s329
          %335 = dma.hbm_to_vmem [thread:$0]  %s328, 36864, %s330, [#allocation3], 128, 128, 8
        $region16: #{apply.1} parent=11 // pred_fallthru
          _
        // Predicated region
        $region17: #{apply.1} parent=11 // pred_check
          %p336 = pneg %p92
        $region18: #{apply.1} parent=11 // pred_check_branch
          %338 = sbr.rel (%p336) target = $region20
        $region19: #{apply.1} parent=11 // pred_region
          %340 = vsyncadd [#allocation5], 0
          %s341 = sshll.u32 %s2, 4
          %s342 = int_to_ptr.hbm [resolvable:$true] %s341
          %s343 = sshll.u32 [#allocation4], 4
          %s344 = int_to_ptr.vmem [resolvable:$true] %s343
          %349 = dma.hbm_to_vmem [thread:$0]  %s342, 576, %s344, [#allocation5], 64, 64, 4
        $region20: #{apply.1} parent=11 // pred_fallthru
          _
        // Predicated region
        $region21: #{apply.1} parent=11 // pred_check
          %p350 = pneg %p113
        $region22: #{apply.1} parent=11 // pred_check_branch
          %352 = sbr.rel (%p350) target = $region24
        $region23: #{apply.1} parent=11 // pred_region
          %354 = vsyncadd [#allocation5], 0
          %s356 = sshll.u32 %s3, 4
          %s357 = int_to_ptr.hbm [resolvable:$true] %s356
          %s358 = sshll.u32 [#allocation6], 4
          %s359 = int_to_ptr.vmem [resolvable:$true] %s358
          %361 = dma.hbm_to_vmem [thread:$0]  %s357, 128, %s359, [#allocation5]
        $region24: #{apply.1} parent=11 // pred_fallthru
          _
        // Predicated region
        $region25: #{apply.1} parent=11 // pred_check
          %p362 = pneg %p134
        $region26: #{apply.1} parent=11 // pred_check_branch
          %364 = sbr.rel (%p362) target = $region28
        $region27: #{apply.1} parent=11 // pred_region
          %366 = vsyncadd [#allocation8], 0
          %s367 = sshll.u32 %s4, 4
          %s368 = int_to_ptr.hbm [resolvable:$true] %s367
          %s369 = sshll.u32 [#allocation7], 4
          %s370 = int_to_ptr.vmem [resolvable:$true] %s369
          %375 = dma.hbm_to_vmem [thread:$0]  %s368, 576, %s370, [#allocation8], 64, 64, 4
        $region28: #{apply.1} parent=11 // pred_fallthru
          _
        // Predicated region
        $region29: #{apply.1} parent=11 // pred_check
          %p376 = pneg %p155
        $region30: #{apply.1} parent=11 // pred_check_branch
          %378 = sbr.rel (%p376) target = $region32
        $region31: #{apply.1} parent=11 // pred_region
          %380 = vsyncadd [#allocation8], 0
          %s382 = sshll.u32 %s5, 4
          %s383 = int_to_ptr.hbm [resolvable:$true] %s382
          %s384 = sshll.u32 [#allocation9], 4
          %s385 = int_to_ptr.vmem [resolvable:$true] %s384
          %387 = dma.hbm_to_vmem [thread:$0]  %s383, 128, %s385, [#allocation8]
        $region32: #{apply.1} parent=11 // pred_fallthru
          _
        // Predicated region
        $region33: #{apply.1} parent=11 // pred_check
          %p388 = pneg %p176
        $region34: #{apply.1} parent=11 // pred_check_branch
          %390 = sbr.rel (%p388) target = $region36
        $region35: #{apply.1} parent=11 // pred_region
          %392 = vsyncadd [#allocation11], 0
          %s394 = sshll.u32 %s6, 4
          %s395 = int_to_ptr.hbm [resolvable:$true] %s394
          %s396 = sshll.u32 [#allocation10], 4
          %s397 = int_to_ptr.vmem [resolvable:$true] %s396
          %399 = dma.hbm_to_vmem [thread:$0]  %s395, 64, %s397, [#allocation11]
        $region36: #{apply.1} parent=11 // pred_fallthru
          _
        // Predicated region
        $region37: #{apply.1} parent=11 // pred_check
          %p400 = pneg %p197
        $region38: #{apply.1} parent=11 // pred_check_branch
          %402 = sbr.rel (%p400) target = $region40
        $region39: #{apply.1} parent=11 // pred_region
          %404 = vsyncadd [#allocation11], 0
          %s406 = sshll.u32 %s7, 4
          %s407 = int_to_ptr.hbm [resolvable:$true] %s406
          %s408 = sshll.u32 [#allocation12], 4
          %s409 = int_to_ptr.vmem [resolvable:$true] %s408
          %411 = dma.hbm_to_vmem [thread:$0]  %s407, 128, %s409, [#allocation11]
        $region40: #{apply.1} parent=11 // pred_fallthru
          _
        // Predicated region
        $region41: #{apply.1} parent=11 // pred_check
          %p412 = pneg %p218
        $region42: #{apply.1} parent=11 // pred_check_branch
          %414 = sbr.rel (%p412) target = $region44
        $region43: #{apply.1} parent=11 // pred_region
          %416 = vsyncadd [#allocation14], 0
          %s418 = sshll.u32 %s8, 4
          %s419 = int_to_ptr.hbm [resolvable:$true] %s418
          %s420 = sshll.u32 [#allocation13], 4
          %s421 = int_to_ptr.vmem [resolvable:$true] %s420
          %423 = dma.hbm_to_vmem [thread:$0]  %s419, 64, %s421, [#allocation14]
        $region44: #{apply.1} parent=11 // pred_fallthru
          _
        // Predicated region
        $region45: #{apply.1} parent=11 // pred_check
          %p424 = pneg %p239
        $region46: #{apply.1} parent=11 // pred_check_branch
          %426 = sbr.rel (%p424) target = $region48
        $region47: #{apply.1} parent=11 // pred_region
          %428 = vsyncadd [#allocation14], 0
          %s430 = sshll.u32 %s9, 4
          %s431 = int_to_ptr.hbm [resolvable:$true] %s430
          %s432 = sshll.u32 [#allocation15], 4
          %s433 = int_to_ptr.vmem [resolvable:$true] %s432
          %435 = dma.hbm_to_vmem [thread:$0]  %s431, 128, %s433, [#allocation14]
        $region48: #{apply.1} parent=11 // pred_fallthru
          _
        // Predicated region
        $region49: #{apply.1} parent=11 // pred_check
          %p436 = pneg %p260
        $region50: #{apply.1} parent=11 // pred_check_branch
          %438 = sbr.rel (%p436) target = $region52
        $region51: #{apply.1} parent=11 // pred_region
          %440 = vsyncadd [#allocation17], 0
          %s441 = sshll.u32 %s10, 4
          %s442 = int_to_ptr.hbm [resolvable:$true] %s441
          %s443 = sshll.u32 [#allocation16], 4
          %s444 = int_to_ptr.vmem [resolvable:$true] %s443
          %449 = dma.hbm_to_vmem [thread:$0]  %s442, 576, %s444, [#allocation17], 64, 64, 4
        $region52: #{apply.1} parent=11 // pred_fallthru
          _
        // Predicated region
        $region53: #{apply.1} parent=11 // pred_check
          %p450 = pneg %p281
        $region54: #{apply.1} parent=11 // pred_check_branch
          %452 = sbr.rel (%p450) target = $region56
        $region55: #{apply.1} parent=11 // pred_region
          %454 = vsyncadd [#allocation17], 0
          %s456 = sshll.u32 %s11, 4
          %s457 = int_to_ptr.hbm [resolvable:$true] %s456
          %s458 = sshll.u32 [#allocation18], 4
          %s459 = int_to_ptr.vmem [resolvable:$true] %s458
          %461 = dma.hbm_to_vmem [thread:$0]  %s457, 128, %s459, [#allocation17]
        $region56: #{apply.1} parent=11 // pred_fallthru
          _
      $region12: #{apply.1} parent=5 // pred_fallthru
        _
      %p462 = scmp.lt.s32.totalorder %s24, 2
      // Predicated region
      $region57: #{apply.1} parent=5 // pred_check
        %p463 = pneg %p462
      $region58: #{apply.1} parent=5 // pred_check_branch
        %465 = sbr.rel (%p463) target = $region60
      $region59: #{apply.1} parent=5 // pred_region
        // Predicated region
        $region61: #{apply.1} parent=59 // pred_check
          %p466 = pneg %p44
        $region62: #{apply.1} parent=59 // pred_check_branch
          %468 = sbr.rel (%p466) target = $region64
        $region63: #{apply.1} parent=59 // pred_region
          %p469 = scmp.lt.s32.totalorder %s24, 1
          %s470 = scalar_select %p469, %s24, 1
          %s471 = smul.addr %s470, 2
          %s472 = smul.addr %s471, 8
          %s473 = scalar_lea.vmem %s0, %s472
        $region64: #{apply.1} parent=59 // pred_fallthru
          _
      $region60: #{apply.1} parent=5 // pred_fallthru
        _
      %p474 = scmp.le.s32.totalorder 1, %s24
      %p475 = scmp.lt.s32.totalorder %s24, 3
      %p476 = pnand %p474, %p475
      %p477 = pneg %p476
      // Predicated region
      $region65: #{apply.1} parent=5 // pred_check
        _
      $region66: #{apply.1} parent=5 // pred_check_branch
        %479 = sbr.rel (%p476) target = $region68
      $region67: #{apply.1} parent=5 // pred_region
        %s480 = ssub.s32 %s24, 1
        // Predicated region
        $region69: #{apply.1} parent=67 // pred_check
          %p481 = pneg %p71
        $region70: #{apply.1} parent=67 // pred_check_branch
          %483 = sbr.rel (%p481) target = $region72
        $region71: #{apply.1} parent=67 // pred_region
          %485 = dma.done [#allocation3], 36864
        $region72: #{apply.1} parent=67 // pred_fallthru
          _
        // Predicated region
        $region73: #{apply.1} parent=67 // pred_check
          %p486 = pneg %p92
        $region74: #{apply.1} parent=67 // pred_check_branch
          %488 = sbr.rel (%p486) target = $region76
        $region75: #{apply.1} parent=67 // pred_region
          %490 = dma.done [#allocation5], 576
        $region76: #{apply.1} parent=67 // pred_fallthru
          _
        // Predicated region
        $region77: #{apply.1} parent=67 // pred_check
          %p491 = pneg %p113
        $region78: #{apply.1} parent=67 // pred_check_branch
          %493 = sbr.rel (%p491) target = $region80
        $region79: #{apply.1} parent=67 // pred_region
          %495 = dma.done [#allocation5], 128
        $region80: #{apply.1} parent=67 // pred_fallthru
          _
        // Predicated region
        $region81: #{apply.1} parent=67 // pred_check
          %p496 = pneg %p134
        $region82: #{apply.1} parent=67 // pred_check_branch
          %498 = sbr.rel (%p496) target = $region84
        $region83: #{apply.1} parent=67 // pred_region
          %500 = dma.done [#allocation8], 576
        $region84: #{apply.1} parent=67 // pred_fallthru
          _
        // Predicated region
        $region85: #{apply.1} parent=67 // pred_check
          %p501 = pneg %p155
        $region86: #{apply.1} parent=67 // pred_check_branch
          %503 = sbr.rel (%p501) target = $region88
        $region87: #{apply.1} parent=67 // pred_region
          %505 = dma.done [#allocation8], 128
        $region88: #{apply.1} parent=67 // pred_fallthru
          _
        // Predicated region
        $region89: #{apply.1} parent=67 // pred_check
          %p506 = pneg %p176
        $region90: #{apply.1} parent=67 // pred_check_branch
          %508 = sbr.rel (%p506) target = $region92
        $region91: #{apply.1} parent=67 // pred_region
          %510 = dma.done [#allocation11], 64
        $region92: #{apply.1} parent=67 // pred_fallthru
          _
        // Predicated region
        $region93: #{apply.1} parent=67 // pred_check
          %p511 = pneg %p197
        $region94: #{apply.1} parent=67 // pred_check_branch
          %513 = sbr.rel (%p511) target = $region96
        $region95: #{apply.1} parent=67 // pred_region
          %515 = dma.done [#allocation11], 128
        $region96: #{apply.1} parent=67 // pred_fallthru
          _
        // Predicated region
        $region97: #{apply.1} parent=67 // pred_check
          %p516 = pneg %p218
        $region98: #{apply.1} parent=67 // pred_check_branch
          %518 = sbr.rel (%p516) target = $region100
        $region99: #{apply.1} parent=67 // pred_region
          %520 = dma.done [#allocation14], 64
        $region100: #{apply.1} parent=67 // pred_fallthru
          _
        // Predicated region
        $region101: #{apply.1} parent=67 // pred_check
          %p521 = pneg %p239
        $region102: #{apply.1} parent=67 // pred_check_branch
          %523 = sbr.rel (%p521) target = $region104
        $region103: #{apply.1} parent=67 // pred_region
          %525 = dma.done [#allocation14], 128
        $region104: #{apply.1} parent=67 // pred_fallthru
          _
        // Predicated region
        $region105: #{apply.1} parent=67 // pred_check
          %p526 = pneg %p260
        $region106: #{apply.1} parent=67 // pred_check_branch
          %528 = sbr.rel (%p526) target = $region108
        $region107: #{apply.1} parent=67 // pred_region
          %530 = dma.done [#allocation17], 576
        $region108: #{apply.1} parent=67 // pred_fallthru
          _
        // Predicated region
        $region109: #{apply.1} parent=67 // pred_check
          %p531 = pneg %p281
        $region110: #{apply.1} parent=67 // pred_check_branch
          %533 = sbr.rel (%p531) target = $region112
        $region111: #{apply.1} parent=67 // pred_region
          %535 = dma.done [#allocation17], 128
        $region112: #{apply.1} parent=67 // pred_fallthru
          _
        %p536 = scmp.lt.s32.totalorder %s29, 1
        %s537 = scalar_select %p536, %s29, 1
        %s538 = smul.addr %s537, 2
        %s539 = smul.addr %s538, 8
        %s540 = scalar_lea.vmem %s0, %s539
        %p541 = pneg %p50
        %p542 = pneg %p47
        %p543 = pneg %p71
        %p544 = pneg %p68
        %p545 = pneg %p92
        %p546 = pneg %p89
        %p547 = pneg %p113
        %p548 = pneg %p110
        %p549 = pneg %p134
        %p550 = pneg %p131
        %p551 = pneg %p155
        %p552 = pneg %p152
        %p553 = pneg %p176
        %p554 = pneg %p173
        %p555 = pneg %p197
        %p556 = pneg %p194
        %p557 = pneg %p218
        %p558 = pneg %p215
        %p559 = pneg %p239
        %p560 = pneg %p236
        %p561 = pneg %p260
        %p562 = pneg %p257
        %p563 = pneg %p281
        %p564 = pneg %p278
        %p565 = pneg %p307
        %p566 = pneg %p304
        %p567 = scmp.lt.s32.totalorder %s29, 1
        %s568 = scalar_select %p567, %s29, 1
        %s569 = smul.addr %s568, 2
        %s570 = smul.addr %s569, 8
        %s571 = scalar_lea.vmem %s12, %s570
        %p572 = scmp.lt.s32.totalorder %s29, 1
        %s573 = scalar_select %p572, %s29, 1
        %s574 = smul.addr %s573, 2
        %s575 = smul.addr %s574, 8
        %s576 = scalar_lea.vmem %s0, %s575
        %p577 = scmp.lt.s32.totalorder %s29, 1
        %s578 = scalar_select %p577, %s29, 1
        %s579 = smul.addr %s578, 2
        %s580 = smul.addr %s579, 8
        %s581 = scalar_lea.vmem %s12, %s580
        %v583 = vld [vmem:[%s576] sm:$0xff]
        %v584 = vld [vmem:[%s576 + $0x8] sm:$0xff]
        %v585 = vpack.c.bf16 %v583, %v583
        %v586 = vpack.c.bf16 %v584, %v584
        %v587 = vld [vmem:[#allocation2] sm:$0xff]
        %v588 = vld [vmem:[#allocation2 + $0x8] sm:$0xff]
        %v589 = vld [vmem:[#allocation2 + $0x10] sm:$0xff]
        %v590 = vld [vmem:[#allocation2 + $0x18] sm:$0xff]
        %v591 = vld [vmem:[#allocation2 + $0x20] sm:$0xff]
        %v592 = vld [vmem:[#allocation2 + $0x28] sm:$0xff]
        %v593 = vld [vmem:[#allocation2 + $0x30] sm:$0xff]
        %v594 = vld [vmem:[#allocation2 + $0x38] sm:$0xff]
        %v595 = vld [vmem:[#allocation2 + $0x40] sm:$0xff]
        %v596 = vld [vmem:[#allocation2 + $0x48] sm:$0xff]
        %v597 = vld [vmem:[#allocation2 + $0x50] sm:$0xff]
        %v598 = vld [vmem:[#allocation2 + $0x58] sm:$0xff]
        %v599 = vld [vmem:[#allocation2 + $0x60] sm:$0xff]
        %v600 = vld [vmem:[#allocation2 + $0x68] sm:$0xff]
        %v601 = vld [vmem:[#allocation2 + $0x70] sm:$0xff]
        %v602 = vld [vmem:[#allocation2 + $0x78] sm:$0xff]
        %v603 = vld [vmem:[#allocation2 + $0x80] sm:$0xff]
        %v604 = vld [vmem:[#allocation2 + $0x88] sm:$0xff]
        %v605 = vld [vmem:[#allocation2 + $0x90] sm:$0xff]
        %v606 = vld [vmem:[#allocation2 + $0x98] sm:$0xff]
        %v607 = vld [vmem:[#allocation2 + $0xa0] sm:$0xff]
        %v608 = vld [vmem:[#allocation2 + $0xa8] sm:$0xff]
        %v609 = vld [vmem:[#allocation2 + $0xb0] sm:$0xff]
        %v610 = vld [vmem:[#allocation2 + $0xb8] sm:$0xff]
        %v611 = vld [vmem:[#allocation2 + $0xc0] sm:$0xff]
        %v612 = vld [vmem:[#allocation2 + $0xc8] sm:$0xff]
        %v613 = vld [vmem:[#allocation2 + $0xd0] sm:$0xff]
        %v614 = vld [vmem:[#allocation2 + $0xd8] sm:$0xff]
        %v615 = vld [vmem:[#allocation2 + $0xe0] sm:$0xff]
        %v616 = vld [vmem:[#allocation2 + $0xe8] sm:$0xff]
        %v617 = vld [vmem:[#allocation2 + $0xf0] sm:$0xff]
        %v618 = vld [vmem:[#allocation2 + $0xf8] sm:$0xff]
        %v651 = vunpack.c.l.b16 %v587
        %v652 = vunpack.c.h.b16 %v587
        %v653 = vunpack.c.l.b16 %v588
        %v654 = vunpack.c.h.b16 %v588
        %v655 = vunpack.c.l.b16 %v589
        %v656 = vunpack.c.h.b16 %v589
        %v657 = vunpack.c.l.b16 %v590
        %v658 = vunpack.c.h.b16 %v590
        %v659 = vunpack.c.l.b16 %v591
        %v660 = vunpack.c.h.b16 %v591
        %v661 = vunpack.c.l.b16 %v592
        %v662 = vunpack.c.h.b16 %v592
        %v663 = vunpack.c.l.b16 %v593
        %v664 = vunpack.c.h.b16 %v593
        %v665 = vunpack.c.l.b16 %v594
        %v666 = vunpack.c.h.b16 %v594
        %v667 = vunpack.c.l.b16 %v595
        %v668 = vunpack.c.h.b16 %v595
        %v669 = vunpack.c.l.b16 %v596
        %v670 = vunpack.c.h.b16 %v596
        %v671 = vunpack.c.l.b16 %v597
        %v672 = vunpack.c.h.b16 %v597
        %v673 = vunpack.c.l.b16 %v598
        %v674 = vunpack.c.h.b16 %v598
        %v675 = vunpack.c.l.b16 %v599
        %v676 = vunpack.c.h.b16 %v599
        %v677 = vunpack.c.l.b16 %v600
        %v678 = vunpack.c.h.b16 %v600
        %v679 = vunpack.c.l.b16 %v601
        %v680 = vunpack.c.h.b16 %v601
        %v681 = vunpack.c.l.b16 %v602
        %v682 = vunpack.c.h.b16 %v602
        %v683 = vunpack.c.l.b16 %v603
        %v684 = vunpack.c.h.b16 %v603
        %v685 = vunpack.c.l.b16 %v604
        %v686 = vunpack.c.h.b16 %v604
        %v687 = vunpack.c.l.b16 %v605
        %v688 = vunpack.c.h.b16 %v605
        %v689 = vunpack.c.l.b16 %v606
        %v690 = vunpack.c.h.b16 %v606
        %v691 = vunpack.c.l.b16 %v607
        %v692 = vunpack.c.h.b16 %v607
        %v693 = vunpack.c.l.b16 %v608
        %v694 = vunpack.c.h.b16 %v608
        %v695 = vunpack.c.l.b16 %v609
        %v696 = vunpack.c.h.b16 %v609
        %v697 = vunpack.c.l.b16 %v610
        %v698 = vunpack.c.h.b16 %v610
        %v699 = vunpack.c.l.b16 %v611
        %v700 = vunpack.c.h.b16 %v611
        %v701 = vunpack.c.l.b16 %v612
        %v702 = vunpack.c.h.b16 %v612
        %v703 = vunpack.c.l.b16 %v613
        %v704 = vunpack.c.h.b16 %v613
        %v705 = vunpack.c.l.b16 %v614
        %v706 = vunpack.c.h.b16 %v614
        %v707 = vunpack.c.l.b16 %v615
        %v708 = vunpack.c.h.b16 %v615
        %v709 = vunpack.c.l.b16 %v616
        %v710 = vunpack.c.h.b16 %v616
        %v711 = vunpack.c.l.b16 %v617
        %v712 = vunpack.c.h.b16 %v617
        %v713 = vunpack.c.l.b16 %v618
        %v714 = vunpack.c.h.b16 %v618
        %v715 = vpack.c.b16 %v653, %v651
        %v716 = vpack.c.b16 %v654, %v652
        %v717 = vpack.c.b16 %v657, %v655
        %v718 = vpack.c.b16 %v658, %v656
        %v719 = vpack.c.b16 %v661, %v659
        %v720 = vpack.c.b16 %v662, %v660
        %v721 = vpack.c.b16 %v665, %v663
        %v722 = vpack.c.b16 %v666, %v664
        %v723 = vpack.c.b16 %v669, %v667
        %v724 = vpack.c.b16 %v670, %v668
        %v725 = vpack.c.b16 %v673, %v671
        %v726 = vpack.c.b16 %v674, %v672
        %v727 = vpack.c.b16 %v677, %v675
        %v728 = vpack.c.b16 %v678, %v676
        %v729 = vpack.c.b16 %v681, %v679
        %v730 = vpack.c.b16 %v682, %v680
        %v731 = vpack.c.b16 %v685, %v683
        %v732 = vpack.c.b16 %v686, %v684
        %v733 = vpack.c.b16 %v689, %v687
        %v734 = vpack.c.b16 %v690, %v688
        %v735 = vpack.c.b16 %v693, %v691
        %v736 = vpack.c.b16 %v694, %v692
        %v737 = vpack.c.b16 %v697, %v695
        %v738 = vpack.c.b16 %v698, %v696
        %v739 = vpack.c.b16 %v701, %v699
        %v740 = vpack.c.b16 %v702, %v700
        %v741 = vpack.c.b16 %v705, %v703
        %v742 = vpack.c.b16 %v706, %v704
        %v743 = vpack.c.b16 %v709, %v707
        %v744 = vpack.c.b16 %v710, %v708
        %v745 = vpack.c.b16 %v713, %v711
        %v746 = vpack.c.b16 %v714, %v712
        %779 = vmatpush.bf16.msra.mxu0 %v729
        %780 = vmatpush.bf16.msra.mxu0 %v727
        %781 = vmatpush.bf16.msra.mxu0 %v725
        %782 = vmatpush.bf16.msra.mxu0 %v723
        %783 = vmatpush.bf16.msra.mxu0 %v721
        %784 = vmatpush.bf16.msra.mxu0 %v719
        %785 = vmatpush.bf16.msra.mxu0 %v717
        %786 = vmatpush.bf16.msra.mxu0 %v715
        %787 = vmatmul.bf16.gmra.mxu0 %v585
        %v788 = vpop.f32.mrf.mxu0
        %v789 = vadd.f32 0.0, %v788
        %v790 = vpop.f32.mrf.mxu0
        %791 = vdwg.mxu0
        %792 = vmatpush.bf16.msra.mxu0 %v745
        %793 = vmatpush.bf16.msra.mxu0 %v743
        %794 = vmatpush.bf16.msra.mxu0 %v741
        %795 = vmatpush.bf16.msra.mxu0 %v739
        %796 = vmatpush.bf16.msra.mxu0 %v737
        %797 = vmatpush.bf16.msra.mxu0 %v735
        %798 = vmatpush.bf16.msra.mxu0 %v733
        %799 = vmatpush.bf16.msra.mxu0 %v731
        %800 = vmatmul.bf16.gmra.mxu0 %v586
        %v801 = vpop.f32.mrf.mxu0
        %v802 = vadd.f32 %v789, %v801
        %v803 = vpop.f32.mrf.mxu0
        %804 = vdwg.mxu0
        %805 = vmatpush.bf16.msra.mxu0 %v730
        %806 = vmatpush.bf16.msra.mxu0 %v728
        %807 = vmatpush.bf16.msra.mxu0 %v726
        %808 = vmatpush.bf16.msra.mxu0 %v724
        %809 = vmatpush.bf16.msra.mxu0 %v722
        %810 = vmatpush.bf16.msra.mxu0 %v720
        %811 = vmatpush.bf16.msra.mxu0 %v718
        %812 = vmatpush.bf16.msra.mxu0 %v716
        %813 = vmatmul.bf16.gmra.mxu0 %v585
        %v814 = vpop.f32.mrf.mxu0
        %v815 = vadd.f32 0.0, %v814
        %v816 = vpop.f32.mrf.mxu0
        %817 = vdwg.mxu0
        %818 = vmatpush.bf16.msra.mxu0 %v746
        %819 = vmatpush.bf16.msra.mxu0 %v744
        %820 = vmatpush.bf16.msra.mxu0 %v742
        %821 = vmatpush.bf16.msra.mxu0 %v740
        %822 = vmatpush.bf16.msra.mxu0 %v738
        %823 = vmatpush.bf16.msra.mxu0 %v736
        %824 = vmatpush.bf16.msra.mxu0 %v734
        %825 = vmatpush.bf16.msra.mxu0 %v732
        %826 = vmatmul.bf16.gmra.mxu0 %v586
        %v827 = vpop.f32.mrf.mxu0
        %v828 = vadd.f32 %v815, %v827
        %v829 = vpop.f32.mrf.mxu0
        %830 = vdwg.mxu0
        %v831 = vpack.c.bf16 %v802, %v802
        %v832 = vpack.c.bf16 %v828, %v828
        %v833 = vld [vmem:[#allocation4] sm:$0xf]
        %s834 = scalar_lea.vmem [#allocation2], 256
        %v835 = vld [vmem:[%s834] sm:$0xff]
        %v836 = vld [vmem:[%s834 + $0x8] sm:$0xff]
        %v837 = vld [vmem:[%s834 + $0x10] sm:$0xff]
        %v838 = vld [vmem:[%s834 + $0x18] sm:$0xff]
        %v839 = vld [vmem:[%s834 + $0x20] sm:$0xff]
        %v840 = vld [vmem:[%s834 + $0x28] sm:$0xff]
        %v841 = vld [vmem:[%s834 + $0x30] sm:$0xff]
        %v842 = vld [vmem:[%s834 + $0x38] sm:$0xff]
        %v843 = vld [vmem:[%s834 + $0x40] sm:$0xff]
        %v844 = vld [vmem:[%s834 + $0x48] sm:$0xff]
        %v845 = vld [vmem:[%s834 + $0x50] sm:$0xff]
        %v846 = vld [vmem:[%s834 + $0x58] sm:$0xff]
        %v847 = vld [vmem:[%s834 + $0x60] sm:$0xff]
        %v848 = vld [vmem:[%s834 + $0x68] sm:$0xff]
        %v849 = vld [vmem:[%s834 + $0x70] sm:$0xff]
        %v850 = vld [vmem:[%s834 + $0x78] sm:$0xff]
        %v851 = vld [vmem:[%s834 + $0x80] sm:$0xff]
        %v852 = vld [vmem:[%s834 + $0x88] sm:$0xff]
        %v853 = vld [vmem:[%s834 + $0x90] sm:$0xff]
        %v854 = vld [vmem:[%s834 + $0x98] sm:$0xff]
        %v855 = vld [vmem:[%s834 + $0xa0] sm:$0xff]
        %v856 = vld [vmem:[%s834 + $0xa8] sm:$0xff]
        %v857 = vld [vmem:[%s834 + $0xb0] sm:$0xff]
        %v858 = vld [vmem:[%s834 + $0xb8] sm:$0xff]
        %v859 = vld [vmem:[%s834 + $0xc0] sm:$0xff]
        %v860 = vld [vmem:[%s834 + $0xc8] sm:$0xff]
        %v861 = vld [vmem:[%s834 + $0xd0] sm:$0xff]
        %v862 = vld [vmem:[%s834 + $0xd8] sm:$0xff]
        %v863 = vld [vmem:[%s834 + $0xe0] sm:$0xff]
        %v864 = vld [vmem:[%s834 + $0xe8] sm:$0xff]
        %v865 = vld [vmem:[%s834 + $0xf0] sm:$0xff]
        %v866 = vld [vmem:[%s834 + $0xf8] sm:$0xff]
        %v899 = vunpack.c.l.b16 %v835
        %v900 = vunpack.c.h.b16 %v835
        %v901 = vunpack.c.l.b16 %v836
        %v902 = vunpack.c.h.b16 %v836
        %v903 = vunpack.c.l.b16 %v837
        %v904 = vunpack.c.h.b16 %v837
        %v905 = vunpack.c.l.b16 %v838
        %v906 = vunpack.c.h.b16 %v838
        %v907 = vunpack.c.l.b16 %v839
        %v908 = vunpack.c.h.b16 %v839
        %v909 = vunpack.c.l.b16 %v840
        %v910 = vunpack.c.h.b16 %v840
        %v911 = vunpack.c.l.b16 %v841
        %v912 = vunpack.c.h.b16 %v841
        %v913 = vunpack.c.l.b16 %v842
        %v914 = vunpack.c.h.b16 %v842
        %v915 = vunpack.c.l.b16 %v843
        %v916 = vunpack.c.h.b16 %v843
        %v917 = vunpack.c.l.b16 %v844
        %v918 = vunpack.c.h.b16 %v844
        %v919 = vunpack.c.l.b16 %v845
        %v920 = vunpack.c.h.b16 %v845
        %v921 = vunpack.c.l.b16 %v846
        %v922 = vunpack.c.h.b16 %v846
        %v923 = vunpack.c.l.b16 %v847
        %v924 = vunpack.c.h.b16 %v847
        %v925 = vunpack.c.l.b16 %v848
        %v926 = vunpack.c.h.b16 %v848
        %v927 = vunpack.c.l.b16 %v849
        %v928 = vunpack.c.h.b16 %v849
        %v929 = vunpack.c.l.b16 %v850
        %v930 = vunpack.c.h.b16 %v850
        %v931 = vunpack.c.l.b16 %v851
        %v932 = vunpack.c.h.b16 %v851
        %v933 = vunpack.c.l.b16 %v852
        %v934 = vunpack.c.h.b16 %v852
        %v935 = vunpack.c.l.b16 %v853
        %v936 = vunpack.c.h.b16 %v853
        %v937 = vunpack.c.l.b16 %v854
        %v938 = vunpack.c.h.b16 %v854
        %v939 = vunpack.c.l.b16 %v855
        %v940 = vunpack.c.h.b16 %v855
        %v941 = vunpack.c.l.b16 %v856
        %v942 = vunpack.c.h.b16 %v856
        %v943 = vunpack.c.l.b16 %v857
        %v944 = vunpack.c.h.b16 %v857
        %v945 = vunpack.c.l.b16 %v858
        %v946 = vunpack.c.h.b16 %v858
        %v947 = vunpack.c.l.b16 %v859
        %v948 = vunpack.c.h.b16 %v859
        %v949 = vunpack.c.l.b16 %v860
        %v950 = vunpack.c.h.b16 %v860
        %v951 = vunpack.c.l.b16 %v861
        %v952 = vunpack.c.h.b16 %v861
        %v953 = vunpack.c.l.b16 %v862
        %v954 = vunpack.c.h.b16 %v862
        %v955 = vunpack.c.l.b16 %v863
        %v956 = vunpack.c.h.b16 %v863
        %v957 = vunpack.c.l.b16 %v864
        %v958 = vunpack.c.h.b16 %v864
        %v959 = vunpack.c.l.b16 %v865
        %v960 = vunpack.c.h.b16 %v865
        %v961 = vunpack.c.l.b16 %v866
        %v962 = vunpack.c.h.b16 %v866
        %v963 = vpack.c.b16 %v901, %v899
        %v964 = vpack.c.b16 %v902, %v900
        %v965 = vpack.c.b16 %v905, %v903
        %v966 = vpack.c.b16 %v906, %v904
        %v967 = vpack.c.b16 %v909, %v907
        %v968 = vpack.c.b16 %v910, %v908
        %v969 = vpack.c.b16 %v913, %v911
        %v970 = vpack.c.b16 %v914, %v912
        %v971 = vpack.c.b16 %v917, %v915
        %v972 = vpack.c.b16 %v918, %v916
        %v973 = vpack.c.b16 %v921, %v919
        %v974 = vpack.c.b16 %v922, %v920
        %v975 = vpack.c.b16 %v925, %v923
        %v976 = vpack.c.b16 %v926, %v924
        %v977 = vpack.c.b16 %v929, %v927
        %v978 = vpack.c.b16 %v930, %v928
        %v979 = vpack.c.b16 %v933, %v931
        %v980 = vpack.c.b16 %v934, %v932
        %v981 = vpack.c.b16 %v937, %v935
        %v982 = vpack.c.b16 %v938, %v936
        %v983 = vpack.c.b16 %v941, %v939
        %v984 = vpack.c.b16 %v942, %v940
        %v985 = vpack.c.b16 %v945, %v943
        %v986 = vpack.c.b16 %v946, %v944
        %v987 = vpack.c.b16 %v949, %v947
        %v988 = vpack.c.b16 %v950, %v948
        %v989 = vpack.c.b16 %v953, %v951
        %v990 = vpack.c.b16 %v954, %v952
        %v991 = vpack.c.b16 %v957, %v955
        %v992 = vpack.c.b16 %v958, %v956
        %v993 = vpack.c.b16 %v961, %v959
        %v994 = vpack.c.b16 %v962, %v960
        %1027 = vmatpush.bf16.msra.mxu0 %v977
        %1028 = vmatpush.bf16.msra.mxu0 %v975
        %1029 = vmatpush.bf16.msra.mxu0 %v973
        %1030 = vmatpush.bf16.msra.mxu0 %v971
        %1031 = vmatpush.bf16.msra.mxu0 %v969
        %1032 = vmatpush.bf16.msra.mxu0 %v967
        %1033 = vmatpush.bf16.msra.mxu0 %v965
        %1034 = vmatpush.bf16.msra.mxu0 %v963
        %1035 = vmatmul.bf16.gmra.mxu0 %v585
        %v1036 = vpop.f32.mrf.mxu0
        %v1037 = vadd.f32 0.0, %v1036
        %v1038 = vpop.f32.mrf.mxu0
        %1039 = vdwg.mxu0
        %1040 = vmatpush.bf16.msra.mxu0 %v993
        %1041 = vmatpush.bf16.msra.mxu0 %v991
        %1042 = vmatpush.bf16.msra.mxu0 %v989
        %1043 = vmatpush.bf16.msra.mxu0 %v987
        %1044 = vmatpush.bf16.msra.mxu0 %v985
        %1045 = vmatpush.bf16.msra.mxu0 %v983
        %1046 = vmatpush.bf16.msra.mxu0 %v981
        %1047 = vmatpush.bf16.msra.mxu0 %v979
        %1048 = vmatmul.bf16.gmra.mxu0 %v586
        %v1049 = vpop.f32.mrf.mxu0
        %v1050 = vadd.f32 %v1037, %v1049
        %v1051 = vpop.f32.mrf.mxu0
        %1052 = vdwg.mxu0
        %1053 = vmatpush.bf16.msra.mxu0 %v978
        %1054 = vmatpush.bf16.msra.mxu0 %v976
        %1055 = vmatpush.bf16.msra.mxu0 %v974
        %1056 = vmatpush.bf16.msra.mxu0 %v972
        %1057 = vmatpush.bf16.msra.mxu0 %v970
        %1058 = vmatpush.bf16.msra.mxu0 %v968
        %1059 = vmatpush.bf16.msra.mxu0 %v966
        %1060 = vmatpush.bf16.msra.mxu0 %v964
        %1061 = vmatmul.bf16.gmra.mxu0 %v585
        %v1062 = vpop.f32.mrf.mxu0
        %v1063 = vadd.f32 0.0, %v1062
        %v1064 = vpop.f32.mrf.mxu0
        %1065 = vdwg.mxu0
        %1066 = vmatpush.bf16.msra.mxu0 %v994
        %1067 = vmatpush.bf16.msra.mxu0 %v992
        %1068 = vmatpush.bf16.msra.mxu0 %v990
        %1069 = vmatpush.bf16.msra.mxu0 %v988
        %1070 = vmatpush.bf16.msra.mxu0 %v986
        %1071 = vmatpush.bf16.msra.mxu0 %v984
        %1072 = vmatpush.bf16.msra.mxu0 %v982
        %1073 = vmatpush.bf16.msra.mxu0 %v980
        %1074 = vmatmul.bf16.gmra.mxu0 %v586
        %v1075 = vpop.f32.mrf.mxu0
        %v1076 = vadd.f32 %v1063, %v1075
        %v1077 = vpop.f32.mrf.mxu0
        %1078 = vdwg.mxu0
        %v1079 = vpack.c.bf16 %v1050, %v1050
        %v1080 = vpack.c.bf16 %v1076, %v1076
        %s1081 = scalar_lea.vmem [#allocation4], 4
        %v1082 = vld [vmem:[%s1081] sm:$0xf]
        %vm1083 = vcmask 64512
        %v1085 = vsel %vm1083, %v1082, 0
        %vm1087 = vcmask 1043456
        %v1089 = vsel %vm1087, %v1079, 0
        %v1092 = vsel %vm1087, %v1080, 0
        %1094 = vmatpush.bf16.msra.mxu0 0
        %1095 = vmatpush.bf16.msra.mxu0 0
        %1096 = vmatpush.bf16.msra.mxu0 0
        %1097 = vmatpush.bf16.msra.mxu0 0
        %1098 = vmatpush.bf16.msra.mxu0 0
        %1099 = vmatpush.bf16.msra.mxu0 0
        %1100 = vmatpush.bf16.msra.mxu0 0
        %1101 = vmatpush.bf16.msra.mxu0 %v1089
        %1102 = vmatmul.bf16.gmra.mxu0 %v1085
        %v1103 = vpop.f32.mrf.mxu0
        %v1104 = vadd.f32 0.0, %v1103
        %v1105 = vpop.f32.mrf.mxu0
        %1106 = vdwg.mxu0
        %1107 = vmatpush.bf16.msra.mxu0 0
        %1108 = vmatpush.bf16.msra.mxu0 0
        %1109 = vmatpush.bf16.msra.mxu0 0
        %1110 = vmatpush.bf16.msra.mxu0 0
        %1111 = vmatpush.bf16.msra.mxu0 0
        %1112 = vmatpush.bf16.msra.mxu0 0
        %1113 = vmatpush.bf16.msra.mxu0 0
        %1114 = vmatpush.bf16.msra.mxu0 %v1092
        %1115 = vmatmul.bf16.gmra.mxu0 %v1085
        %v1116 = vpop.f32.mrf.mxu0
        %v1117 = vadd.f32 0.0, %v1116
        %v1118 = vpop.f32.mrf.mxu0
        %1119 = vdwg.mxu0
        %v1121 = vsel %vm1083, %v833, 0
        %v1124 = vsel %vm1087, %v831, 0
        %v1127 = vsel %vm1087, %v832, 0
        %1129 = vmatpush.bf16.msra.mxu0 0
        %1130 = vmatpush.bf16.msra.mxu0 0
        %1131 = vmatpush.bf16.msra.mxu0 0
        %1132 = vmatpush.bf16.msra.mxu0 0
        %1133 = vmatpush.bf16.msra.mxu0 0
        %1134 = vmatpush.bf16.msra.mxu0 0
        %1135 = vmatpush.bf16.msra.mxu0 0
        %1136 = vmatpush.bf16.msra.mxu0 %v1124
        %1137 = vmatmul.bf16.gmra.mxu0 %v1121
        %v1138 = vpop.f32.mrf.mxu0
        %v1139 = vadd.f32 %v1104, %v1138
        %v1140 = vpop.f32.mrf.mxu0
        %1141 = vdwg.mxu0
        %1142 = vmatpush.bf16.msra.mxu0 0
        %1143 = vmatpush.bf16.msra.mxu0 0
        %1144 = vmatpush.bf16.msra.mxu0 0
        %1145 = vmatpush.bf16.msra.mxu0 0
        %1146 = vmatpush.bf16.msra.mxu0 0
        %1147 = vmatpush.bf16.msra.mxu0 0
        %1148 = vmatpush.bf16.msra.mxu0 0
        %1149 = vmatpush.bf16.msra.mxu0 %v1127
        %1150 = vmatmul.bf16.gmra.mxu0 %v1121
        %v1151 = vpop.f32.mrf.mxu0
        %v1152 = vadd.f32 %v1117, %v1151
        %v1153 = vpop.f32.mrf.mxu0
        %1154 = vdwg.mxu0
        %s1155 = scalar_lea.vmem [#allocation2], 512
        %v1156 = vld [vmem:[%s1155] sm:$0xff]
        %v1157 = vld [vmem:[%s1155 + $0x8] sm:$0xff]
        %v1158 = vld [vmem:[%s1155 + $0x10] sm:$0xff]
        %v1159 = vld [vmem:[%s1155 + $0x18] sm:$0xff]
        %v1160 = vld [vmem:[%s1155 + $0x20] sm:$0xff]
        %v1161 = vld [vmem:[%s1155 + $0x28] sm:$0xff]
        %v1162 = vld [vmem:[%s1155 + $0x30] sm:$0xff]
        %v1163 = vld [vmem:[%s1155 + $0x38] sm:$0xff]
        %v1164 = vld [vmem:[%s1155 + $0x40] sm:$0xff]
        %v1165 = vld [vmem:[%s1155 + $0x48] sm:$0xff]
        %v1166 = vld [vmem:[%s1155 + $0x50] sm:$0xff]
        %v1167 = vld [vmem:[%s1155 + $0x58] sm:$0xff]
        %v1168 = vld [vmem:[%s1155 + $0x60] sm:$0xff]
        %v1169 = vld [vmem:[%s1155 + $0x68] sm:$0xff]
        %v1170 = vld [vmem:[%s1155 + $0x70] sm:$0xff]
        %v1171 = vld [vmem:[%s1155 + $0x78] sm:$0xff]
        %v1172 = vld [vmem:[%s1155 + $0x80] sm:$0xff]
        %v1173 = vld [vmem:[%s1155 + $0x88] sm:$0xff]
        %v1174 = vld [vmem:[%s1155 + $0x90] sm:$0xff]
        %v1175 = vld [vmem:[%s1155 + $0x98] sm:$0xff]
        %v1176 = vld [vmem:[%s1155 + $0xa0] sm:$0xff]
        %v1177 = vld [vmem:[%s1155 + $0xa8] sm:$0xff]
        %v1178 = vld [vmem:[%s1155 + $0xb0] sm:$0xff]
        %v1179 = vld [vmem:[%s1155 + $0xb8] sm:$0xff]
        %v1180 = vld [vmem:[%s1155 + $0xc0] sm:$0xff]
        %v1181 = vld [vmem:[%s1155 + $0xc8] sm:$0xff]
        %v1182 = vld [vmem:[%s1155 + $0xd0] sm:$0xff]
        %v1183 = vld [vmem:[%s1155 + $0xd8] sm:$0xff]
        %v1184 = vld [vmem:[%s1155 + $0xe0] sm:$0xff]
        %v1185 = vld [vmem:[%s1155 + $0xe8] sm:$0xff]
        %v1186 = vld [vmem:[%s1155 + $0xf0] sm:$0xff]
        %v1187 = vld [vmem:[%s1155 + $0xf8] sm:$0xff]
        %v1220 = vunpack.c.l.b16 %v1156
        %v1221 = vunpack.c.h.b16 %v1156
        %v1222 = vunpack.c.l.b16 %v1157
        %v1223 = vunpack.c.h.b16 %v1157
        %v1224 = vunpack.c.l.b16 %v1158
        %v1225 = vunpack.c.h.b16 %v1158
        %v1226 = vunpack.c.l.b16 %v1159
        %v1227 = vunpack.c.h.b16 %v1159
        %v1228 = vunpack.c.l.b16 %v1160
        %v1229 = vunpack.c.h.b16 %v1160
        %v1230 = vunpack.c.l.b16 %v1161
        %v1231 = vunpack.c.h.b16 %v1161
        %v1232 = vunpack.c.l.b16 %v1162
        %v1233 = vunpack.c.h.b16 %v1162
        %v1234 = vunpack.c.l.b16 %v1163
        %v1235 = vunpack.c.h.b16 %v1163
        %v1236 = vunpack.c.l.b16 %v1164
        %v1237 = vunpack.c.h.b16 %v1164
        %v1238 = vunpack.c.l.b16 %v1165
        %v1239 = vunpack.c.h.b16 %v1165
        %v1240 = vunpack.c.l.b16 %v1166
        %v1241 = vunpack.c.h.b16 %v1166
        %v1242 = vunpack.c.l.b16 %v1167
        %v1243 = vunpack.c.h.b16 %v1167
        %v1244 = vunpack.c.l.b16 %v1168
        %v1245 = vunpack.c.h.b16 %v1168
        %v1246 = vunpack.c.l.b16 %v1169
        %v1247 = vunpack.c.h.b16 %v1169
        %v1248 = vunpack.c.l.b16 %v1170
        %v1249 = vunpack.c.h.b16 %v1170
        %v1250 = vunpack.c.l.b16 %v1171
        %v1251 = vunpack.c.h.b16 %v1171
        %v1252 = vunpack.c.l.b16 %v1172
        %v1253 = vunpack.c.h.b16 %v1172
        %v1254 = vunpack.c.l.b16 %v1173
        %v1255 = vunpack.c.h.b16 %v1173
        %v1256 = vunpack.c.l.b16 %v1174
        %v1257 = vunpack.c.h.b16 %v1174
        %v1258 = vunpack.c.l.b16 %v1175
        %v1259 = vunpack.c.h.b16 %v1175
        %v1260 = vunpack.c.l.b16 %v1176
        %v1261 = vunpack.c.h.b16 %v1176
        %v1262 = vunpack.c.l.b16 %v1177
        %v1263 = vunpack.c.h.b16 %v1177
        %v1264 = vunpack.c.l.b16 %v1178
        %v1265 = vunpack.c.h.b16 %v1178
        %v1266 = vunpack.c.l.b16 %v1179
        %v1267 = vunpack.c.h.b16 %v1179
        %v1268 = vunpack.c.l.b16 %v1180
        %v1269 = vunpack.c.h.b16 %v1180
        %v1270 = vunpack.c.l.b16 %v1181
        %v1271 = vunpack.c.h.b16 %v1181
        %v1272 = vunpack.c.l.b16 %v1182
        %v1273 = vunpack.c.h.b16 %v1182
        %v1274 = vunpack.c.l.b16 %v1183
        %v1275 = vunpack.c.h.b16 %v1183
        %v1276 = vunpack.c.l.b16 %v1184
        %v1277 = vunpack.c.h.b16 %v1184
        %v1278 = vunpack.c.l.b16 %v1185
        %v1279 = vunpack.c.h.b16 %v1185
        %v1280 = vunpack.c.l.b16 %v1186
        %v1281 = vunpack.c.h.b16 %v1186
        %v1282 = vunpack.c.l.b16 %v1187
        %v1283 = vunpack.c.h.b16 %v1187
        %v1284 = vpack.c.b16 %v1222, %v1220
        %v1285 = vpack.c.b16 %v1223, %v1221
        %v1286 = vpack.c.b16 %v1226, %v1224
        %v1287 = vpack.c.b16 %v1227, %v1225
        %v1288 = vpack.c.b16 %v1230, %v1228
        %v1289 = vpack.c.b16 %v1231, %v1229
        %v1290 = vpack.c.b16 %v1234, %v1232
        %v1291 = vpack.c.b16 %v1235, %v1233
        %v1292 = vpack.c.b16 %v1238, %v1236
        %v1293 = vpack.c.b16 %v1239, %v1237
        %v1294 = vpack.c.b16 %v1242, %v1240
        %v1295 = vpack.c.b16 %v1243, %v1241
        %v1296 = vpack.c.b16 %v1246, %v1244
        %v1297 = vpack.c.b16 %v1247, %v1245
        %v1298 = vpack.c.b16 %v1250, %v1248
        %v1299 = vpack.c.b16 %v1251, %v1249
        %v1300 = vpack.c.b16 %v1254, %v1252
        %v1301 = vpack.c.b16 %v1255, %v1253
        %v1302 = vpack.c.b16 %v1258, %v1256
        %v1303 = vpack.c.b16 %v1259, %v1257
        %v1304 = vpack.c.b16 %v1262, %v1260
        %v1305 = vpack.c.b16 %v1263, %v1261
        %v1306 = vpack.c.b16 %v1266, %v1264
        %v1307 = vpack.c.b16 %v1267, %v1265
        %v1308 = vpack.c.b16 %v1270, %v1268
        %v1309 = vpack.c.b16 %v1271, %v1269
        %v1310 = vpack.c.b16 %v1274, %v1272
        %v1311 = vpack.c.b16 %v1275, %v1273
        %v1312 = vpack.c.b16 %v1278, %v1276
        %v1313 = vpack.c.b16 %v1279, %v1277
        %v1314 = vpack.c.b16 %v1282, %v1280
        %v1315 = vpack.c.b16 %v1283, %v1281
        %1348 = vmatpush.bf16.msra.mxu0 %v1298
        %1349 = vmatpush.bf16.msra.mxu0 %v1296
        %1350 = vmatpush.bf16.msra.mxu0 %v1294
        %1351 = vmatpush.bf16.msra.mxu0 %v1292
        %1352 = vmatpush.bf16.msra.mxu0 %v1290
        %1353 = vmatpush.bf16.msra.mxu0 %v1288
        %1354 = vmatpush.bf16.msra.mxu0 %v1286
        %1355 = vmatpush.bf16.msra.mxu0 %v1284
        %1356 = vmatmul.bf16.gmra.mxu0 %v585
        %v1357 = vpop.f32.mrf.mxu0
        %v1358 = vadd.f32 0.0, %v1357
        %v1359 = vpop.f32.mrf.mxu0
        %1360 = vdwg.mxu0
        %1361 = vmatpush.bf16.msra.mxu0 %v1314
        %1362 = vmatpush.bf16.msra.mxu0 %v1312
        %1363 = vmatpush.bf16.msra.mxu0 %v1310
        %1364 = vmatpush.bf16.msra.mxu0 %v1308
        %1365 = vmatpush.bf16.msra.mxu0 %v1306
        %1366 = vmatpush.bf16.msra.mxu0 %v1304
        %1367 = vmatpush.bf16.msra.mxu0 %v1302
        %1368 = vmatpush.bf16.msra.mxu0 %v1300
        %1369 = vmatmul.bf16.gmra.mxu0 %v586
        %v1370 = vpop.f32.mrf.mxu0
        %v1371 = vadd.f32 %v1358, %v1370
        %v1372 = vpop.f32.mrf.mxu0
        %1373 = vdwg.mxu0
        %1374 = vmatpush.bf16.msra.mxu0 %v1299
        %1375 = vmatpush.bf16.msra.mxu0 %v1297
        %1376 = vmatpush.bf16.msra.mxu0 %v1295
        %1377 = vmatpush.bf16.msra.mxu0 %v1293
        %1378 = vmatpush.bf16.msra.mxu0 %v1291
        %1379 = vmatpush.bf16.msra.mxu0 %v1289
        %1380 = vmatpush.bf16.msra.mxu0 %v1287
        %1381 = vmatpush.bf16.msra.mxu0 %v1285
        %1382 = vmatmul.bf16.gmra.mxu0 %v585
        %v1383 = vpop.f32.mrf.mxu0
        %v1384 = vadd.f32 0.0, %v1383
        %v1385 = vpop.f32.mrf.mxu0
        %1386 = vdwg.mxu0
        %1387 = vmatpush.bf16.msra.mxu0 %v1315
        %1388 = vmatpush.bf16.msra.mxu0 %v1313
        %1389 = vmatpush.bf16.msra.mxu0 %v1311
        %1390 = vmatpush.bf16.msra.mxu0 %v1309
        %1391 = vmatpush.bf16.msra.mxu0 %v1307
        %1392 = vmatpush.bf16.msra.mxu0 %v1305
        %1393 = vmatpush.bf16.msra.mxu0 %v1303
        %1394 = vmatpush.bf16.msra.mxu0 %v1301
        %1395 = vmatmul.bf16.gmra.mxu0 %v586
        %v1396 = vpop.f32.mrf.mxu0
        %v1397 = vadd.f32 %v1384, %v1396
        %v1398 = vpop.f32.mrf.mxu0
        %1399 = vdwg.mxu0
        %v1400 = vpack.c.bf16 %v1371, %v1371
        %v1401 = vpack.c.bf16 %v1397, %v1397
        %s1402 = scalar_lea.vmem [#allocation4], 8
        %v1403 = vld [vmem:[%s1402] sm:$0xf]
        %v1405 = vsel %vm1083, %v1403, 0
        %v1408 = vsel %vm1087, %v1400, 0
        %v1411 = vsel %vm1087, %v1401, 0
        %1413 = vmatpush.bf16.msra.mxu0 0
        %1414 = vmatpush.bf16.msra.mxu0 0
        %1415 = vmatpush.bf16.msra.mxu0 0
        %1416 = vmatpush.bf16.msra.mxu0 0
        %1417 = vmatpush.bf16.msra.mxu0 0
        %1418 = vmatpush.bf16.msra.mxu0 0
        %1419 = vmatpush.bf16.msra.mxu0 0
        %1420 = vmatpush.bf16.msra.mxu0 %v1408
        %1421 = vmatmul.bf16.gmra.mxu0 %v1405
        %v1422 = vpop.f32.mrf.mxu0
        %v1423 = vadd.f32 0.0, %v1422
        %v1424 = vpop.f32.mrf.mxu0
        %1425 = vdwg.mxu0
        %1426 = vmatpush.bf16.msra.mxu0 0
        %1427 = vmatpush.bf16.msra.mxu0 0
        %1428 = vmatpush.bf16.msra.mxu0 0
        %1429 = vmatpush.bf16.msra.mxu0 0
        %1430 = vmatpush.bf16.msra.mxu0 0
        %1431 = vmatpush.bf16.msra.mxu0 0
        %1432 = vmatpush.bf16.msra.mxu0 0
        %1433 = vmatpush.bf16.msra.mxu0 %v1411
        %1434 = vmatmul.bf16.gmra.mxu0 %v1405
        %v1435 = vpop.f32.mrf.mxu0
        %v1436 = vadd.f32 0.0, %v1435
        %v1437 = vpop.f32.mrf.mxu0
        %1438 = vdwg.mxu0
        %v1439 = vadd.f32 %v1139, %v1423
        %v1440 = vadd.f32 %v1152, %v1436
        %s1441 = scalar_lea.vmem [#allocation2], 768
        %v1442 = vld [vmem:[%s1441] sm:$0xff]
        %v1443 = vld [vmem:[%s1441 + $0x8] sm:$0xff]
        %v1444 = vld [vmem:[%s1441 + $0x10] sm:$0xff]
        %v1445 = vld [vmem:[%s1441 + $0x18] sm:$0xff]
        %v1446 = vld [vmem:[%s1441 + $0x20] sm:$0xff]
        %v1447 = vld [vmem:[%s1441 + $0x28] sm:$0xff]
        %v1448 = vld [vmem:[%s1441 + $0x30] sm:$0xff]
        %v1449 = vld [vmem:[%s1441 + $0x38] sm:$0xff]
        %v1450 = vld [vmem:[%s1441 + $0x40] sm:$0xff]
        %v1451 = vld [vmem:[%s1441 + $0x48] sm:$0xff]
        %v1452 = vld [vmem:[%s1441 + $0x50] sm:$0xff]
        %v1453 = vld [vmem:[%s1441 + $0x58] sm:$0xff]
        %v1454 = vld [vmem:[%s1441 + $0x60] sm:$0xff]
        %v1455 = vld [vmem:[%s1441 + $0x68] sm:$0xff]
        %v1456 = vld [vmem:[%s1441 + $0x70] sm:$0xff]
        %v1457 = vld [vmem:[%s1441 + $0x78] sm:$0xff]
        %v1458 = vld [vmem:[%s1441 + $0x80] sm:$0xff]
        %v1459 = vld [vmem:[%s1441 + $0x88] sm:$0xff]
        %v1460 = vld [vmem:[%s1441 + $0x90] sm:$0xff]
        %v1461 = vld [vmem:[%s1441 + $0x98] sm:$0xff]
        %v1462 = vld [vmem:[%s1441 + $0xa0] sm:$0xff]
        %v1463 = vld [vmem:[%s1441 + $0xa8] sm:$0xff]
        %v1464 = vld [vmem:[%s1441 + $0xb0] sm:$0xff]
        %v1465 = vld [vmem:[%s1441 + $0xb8] sm:$0xff]
        %v1466 = vld [vmem:[%s1441 + $0xc0] sm:$0xff]
        %v1467 = vld [vmem:[%s1441 + $0xc8] sm:$0xff]
        %v1468 = vld [vmem:[%s1441 + $0xd0] sm:$0xff]
        %v1469 = vld [vmem:[%s1441 + $0xd8] sm:$0xff]
        %v1470 = vld [vmem:[%s1441 + $0xe0] sm:$0xff]
        %v1471 = vld [vmem:[%s1441 + $0xe8] sm:$0xff]
        %v1472 = vld [vmem:[%s1441 + $0xf0] sm:$0xff]
        %v1473 = vld [vmem:[%s1441 + $0xf8] sm:$0xff]
        %v1506 = vunpack.c.l.b16 %v1442
        %v1507 = vunpack.c.h.b16 %v1442
        %v1508 = vunpack.c.l.b16 %v1443
        %v1509 = vunpack.c.h.b16 %v1443
        %v1510 = vunpack.c.l.b16 %v1444
        %v1511 = vunpack.c.h.b16 %v1444
        %v1512 = vunpack.c.l.b16 %v1445
        %v1513 = vunpack.c.h.b16 %v1445
        %v1514 = vunpack.c.l.b16 %v1446
        %v1515 = vunpack.c.h.b16 %v1446
        %v1516 = vunpack.c.l.b16 %v1447
        %v1517 = vunpack.c.h.b16 %v1447
        %v1518 = vunpack.c.l.b16 %v1448
        %v1519 = vunpack.c.h.b16 %v1448
        %v1520 = vunpack.c.l.b16 %v1449
        %v1521 = vunpack.c.h.b16 %v1449
        %v1522 = vunpack.c.l.b16 %v1450
        %v1523 = vunpack.c.h.b16 %v1450
        %v1524 = vunpack.c.l.b16 %v1451
        %v1525 = vunpack.c.h.b16 %v1451
        %v1526 = vunpack.c.l.b16 %v1452
        %v1527 = vunpack.c.h.b16 %v1452
        %v1528 = vunpack.c.l.b16 %v1453
        %v1529 = vunpack.c.h.b16 %v1453
        %v1530 = vunpack.c.l.b16 %v1454
        %v1531 = vunpack.c.h.b16 %v1454
        %v1532 = vunpack.c.l.b16 %v1455
        %v1533 = vunpack.c.h.b16 %v1455
        %v1534 = vunpack.c.l.b16 %v1456
        %v1535 = vunpack.c.h.b16 %v1456
        %v1536 = vunpack.c.l.b16 %v1457
        %v1537 = vunpack.c.h.b16 %v1457
        %v1538 = vunpack.c.l.b16 %v1458
        %v1539 = vunpack.c.h.b16 %v1458
        %v1540 = vunpack.c.l.b16 %v1459
        %v1541 = vunpack.c.h.b16 %v1459
        %v1542 = vunpack.c.l.b16 %v1460
        %v1543 = vunpack.c.h.b16 %v1460
        %v1544 = vunpack.c.l.b16 %v1461
        %v1545 = vunpack.c.h.b16 %v1461
        %v1546 = vunpack.c.l.b16 %v1462
        %v1547 = vunpack.c.h.b16 %v1462
        %v1548 = vunpack.c.l.b16 %v1463
        %v1549 = vunpack.c.h.b16 %v1463
        %v1550 = vunpack.c.l.b16 %v1464
        %v1551 = vunpack.c.h.b16 %v1464
        %v1552 = vunpack.c.l.b16 %v1465
        %v1553 = vunpack.c.h.b16 %v1465
        %v1554 = vunpack.c.l.b16 %v1466
        %v1555 = vunpack.c.h.b16 %v1466
        %v1556 = vunpack.c.l.b16 %v1467
        %v1557 = vunpack.c.h.b16 %v1467
        %v1558 = vunpack.c.l.b16 %v1468
        %v1559 = vunpack.c.h.b16 %v1468
        %v1560 = vunpack.c.l.b16 %v1469
        %v1561 = vunpack.c.h.b16 %v1469
        %v1562 = vunpack.c.l.b16 %v1470
        %v1563 = vunpack.c.h.b16 %v1470
        %v1564 = vunpack.c.l.b16 %v1471
        %v1565 = vunpack.c.h.b16 %v1471
        %v1566 = vunpack.c.l.b16 %v1472
        %v1567 = vunpack.c.h.b16 %v1472
        %v1568 = vunpack.c.l.b16 %v1473
        %v1569 = vunpack.c.h.b16 %v1473
        %v1570 = vpack.c.b16 %v1508, %v1506
        %v1571 = vpack.c.b16 %v1509, %v1507
        %v1572 = vpack.c.b16 %v1512, %v1510
        %v1573 = vpack.c.b16 %v1513, %v1511
        %v1574 = vpack.c.b16 %v1516, %v1514
        %v1575 = vpack.c.b16 %v1517, %v1515
        %v1576 = vpack.c.b16 %v1520, %v1518
        %v1577 = vpack.c.b16 %v1521, %v1519
        %v1578 = vpack.c.b16 %v1524, %v1522
        %v1579 = vpack.c.b16 %v1525, %v1523
        %v1580 = vpack.c.b16 %v1528, %v1526
        %v1581 = vpack.c.b16 %v1529, %v1527
        %v1582 = vpack.c.b16 %v1532, %v1530
        %v1583 = vpack.c.b16 %v1533, %v1531
        %v1584 = vpack.c.b16 %v1536, %v1534
        %v1585 = vpack.c.b16 %v1537, %v1535
        %v1586 = vpack.c.b16 %v1540, %v1538
        %v1587 = vpack.c.b16 %v1541, %v1539
        %v1588 = vpack.c.b16 %v1544, %v1542
        %v1589 = vpack.c.b16 %v1545, %v1543
        %v1590 = vpack.c.b16 %v1548, %v1546
        %v1591 = vpack.c.b16 %v1549, %v1547
        %v1592 = vpack.c.b16 %v1552, %v1550
        %v1593 = vpack.c.b16 %v1553, %v1551
        %v1594 = vpack.c.b16 %v1556, %v1554
        %v1595 = vpack.c.b16 %v1557, %v1555
        %v1596 = vpack.c.b16 %v1560, %v1558
        %v1597 = vpack.c.b16 %v1561, %v1559
        %v1598 = vpack.c.b16 %v1564, %v1562
        %v1599 = vpack.c.b16 %v1565, %v1563
        %v1600 = vpack.c.b16 %v1568, %v1566
        %v1601 = vpack.c.b16 %v1569, %v1567
        %1634 = vmatpush.bf16.msra.mxu0 %v1584
        %1635 = vmatpush.bf16.msra.mxu0 %v1582
        %1636 = vmatpush.bf16.msra.mxu0 %v1580
        %1637 = vmatpush.bf16.msra.mxu0 %v1578
        %1638 = vmatpush.bf16.msra.mxu0 %v1576
        %1639 = vmatpush.bf16.msra.mxu0 %v1574
        %1640 = vmatpush.bf16.msra.mxu0 %v1572
        %1641 = vmatpush.bf16.msra.mxu0 %v1570
        %1642 = vmatmul.bf16.gmra.mxu0 %v585
        %v1643 = vpop.f32.mrf.mxu0
        %v1644 = vadd.f32 0.0, %v1643
        %v1645 = vpop.f32.mrf.mxu0
        %1646 = vdwg.mxu0
        %1647 = vmatpush.bf16.msra.mxu0 %v1600
        %1648 = vmatpush.bf16.msra.mxu0 %v1598
        %1649 = vmatpush.bf16.msra.mxu0 %v1596
        %1650 = vmatpush.bf16.msra.mxu0 %v1594
        %1651 = vmatpush.bf16.msra.mxu0 %v1592
        %1652 = vmatpush.bf16.msra.mxu0 %v1590
        %1653 = vmatpush.bf16.msra.mxu0 %v1588
        %1654 = vmatpush.bf16.msra.mxu0 %v1586
        %1655 = vmatmul.bf16.gmra.mxu0 %v586
        %v1656 = vpop.f32.mrf.mxu0
        %v1657 = vadd.f32 %v1644, %v1656
        %v1658 = vpop.f32.mrf.mxu0
        %1659 = vdwg.mxu0
        %1660 = vmatpush.bf16.msra.mxu0 %v1585
        %1661 = vmatpush.bf16.msra.mxu0 %v1583
        %1662 = vmatpush.bf16.msra.mxu0 %v1581
        %1663 = vmatpush.bf16.msra.mxu0 %v1579
        %1664 = vmatpush.bf16.msra.mxu0 %v1577
        %1665 = vmatpush.bf16.msra.mxu0 %v1575
        %1666 = vmatpush.bf16.msra.mxu0 %v1573
        %1667 = vmatpush.bf16.msra.mxu0 %v1571
        %1668 = vmatmul.bf16.gmra.mxu0 %v585
        %v1669 = vpop.f32.mrf.mxu0
        %v1670 = vadd.f32 0.0, %v1669
        %v1671 = vpop.f32.mrf.mxu0
        %1672 = vdwg.mxu0
        %1673 = vmatpush.bf16.msra.mxu0 %v1601
        %1674 = vmatpush.bf16.msra.mxu0 %v1599
        %1675 = vmatpush.bf16.msra.mxu0 %v1597
        %1676 = vmatpush.bf16.msra.mxu0 %v1595
        %1677 = vmatpush.bf16.msra.mxu0 %v1593
        %1678 = vmatpush.bf16.msra.mxu0 %v1591
        %1679 = vmatpush.bf16.msra.mxu0 %v1589
        %1680 = vmatpush.bf16.msra.mxu0 %v1587
        %1681 = vmatmul.bf16.gmra.mxu0 %v586
        %v1682 = vpop.f32.mrf.mxu0
        %v1683 = vadd.f32 %v1670, %v1682
        %v1684 = vpop.f32.mrf.mxu0
        %1685 = vdwg.mxu0
        %v1686 = vpack.c.bf16 %v1657, %v1657
        %v1687 = vpack.c.bf16 %v1683, %v1683
        %s1688 = scalar_lea.vmem [#allocation4], 12
        %v1689 = vld [vmem:[%s1688] sm:$0xf]
        %v1691 = vsel %vm1083, %v1689, 0
        %v1694 = vsel %vm1087, %v1686, 0
        %v1697 = vsel %vm1087, %v1687, 0
        %1699 = vmatpush.bf16.msra.mxu0 0
        %1700 = vmatpush.bf16.msra.mxu0 0
        %1701 = vmatpush.bf16.msra.mxu0 0
        %1702 = vmatpush.bf16.msra.mxu0 0
        %1703 = vmatpush.bf16.msra.mxu0 0
        %1704 = vmatpush.bf16.msra.mxu0 0
        %1705 = vmatpush.bf16.msra.mxu0 0
        %1706 = vmatpush.bf16.msra.mxu0 %v1694
        %1707 = vmatmul.bf16.gmra.mxu0 %v1691
        %v1708 = vpop.f32.mrf.mxu0
        %v1709 = vadd.f32 0.0, %v1708
        %v1710 = vpop.f32.mrf.mxu0
        %1711 = vdwg.mxu0
        %1712 = vmatpush.bf16.msra.mxu0 0
        %1713 = vmatpush.bf16.msra.mxu0 0
        %1714 = vmatpush.bf16.msra.mxu0 0
        %1715 = vmatpush.bf16.msra.mxu0 0
        %1716 = vmatpush.bf16.msra.mxu0 0
        %1717 = vmatpush.bf16.msra.mxu0 0
        %1718 = vmatpush.bf16.msra.mxu0 0
        %1719 = vmatpush.bf16.msra.mxu0 %v1697
        %1720 = vmatmul.bf16.gmra.mxu0 %v1691
        %v1721 = vpop.f32.mrf.mxu0
        %v1722 = vadd.f32 0.0, %v1721
        %v1723 = vpop.f32.mrf.mxu0
        %1724 = vdwg.mxu0
        %v1725 = vadd.f32 %v1439, %v1709
        %v1726 = vadd.f32 %v1440, %v1722
        %s1727 = scalar_lea.vmem [#allocation2], 1024
        %v1728 = vld [vmem:[%s1727] sm:$0xff]
        %v1729 = vld [vmem:[%s1727 + $0x8] sm:$0xff]
        %v1730 = vld [vmem:[%s1727 + $0x10] sm:$0xff]
        %v1731 = vld [vmem:[%s1727 + $0x18] sm:$0xff]
        %v1732 = vld [vmem:[%s1727 + $0x20] sm:$0xff]
        %v1733 = vld [vmem:[%s1727 + $0x28] sm:$0xff]
        %v1734 = vld [vmem:[%s1727 + $0x30] sm:$0xff]
        %v1735 = vld [vmem:[%s1727 + $0x38] sm:$0xff]
        %v1736 = vld [vmem:[%s1727 + $0x40] sm:$0xff]
        %v1737 = vld [vmem:[%s1727 + $0x48] sm:$0xff]
        %v1738 = vld [vmem:[%s1727 + $0x50] sm:$0xff]
        %v1739 = vld [vmem:[%s1727 + $0x58] sm:$0xff]
        %v1740 = vld [vmem:[%s1727 + $0x60] sm:$0xff]
        %v1741 = vld [vmem:[%s1727 + $0x68] sm:$0xff]
        %v1742 = vld [vmem:[%s1727 + $0x70] sm:$0xff]
        %v1743 = vld [vmem:[%s1727 + $0x78] sm:$0xff]
        %v1744 = vld [vmem:[%s1727 + $0x80] sm:$0xff]
        %v1745 = vld [vmem:[%s1727 + $0x88] sm:$0xff]
        %v1746 = vld [vmem:[%s1727 + $0x90] sm:$0xff]
        %v1747 = vld [vmem:[%s1727 + $0x98] sm:$0xff]
        %v1748 = vld [vmem:[%s1727 + $0xa0] sm:$0xff]
        %v1749 = vld [vmem:[%s1727 + $0xa8] sm:$0xff]
        %v1750 = vld [vmem:[%s1727 + $0xb0] sm:$0xff]
        %v1751 = vld [vmem:[%s1727 + $0xb8] sm:$0xff]
        %v1752 = vld [vmem:[%s1727 + $0xc0] sm:$0xff]
        %v1753 = vld [vmem:[%s1727 + $0xc8] sm:$0xff]
        %v1754 = vld [vmem:[%s1727 + $0xd0] sm:$0xff]
        %v1755 = vld [vmem:[%s1727 + $0xd8] sm:$0xff]
        %v1756 = vld [vmem:[%s1727 + $0xe0] sm:$0xff]
        %v1757 = vld [vmem:[%s1727 + $0xe8] sm:$0xff]
        %v1758 = vld [vmem:[%s1727 + $0xf0] sm:$0xff]
        %v1759 = vld [vmem:[%s1727 + $0xf8] sm:$0xff]
        %v1792 = vunpack.c.l.b16 %v1728
        %v1793 = vunpack.c.h.b16 %v1728
        %v1794 = vunpack.c.l.b16 %v1729
        %v1795 = vunpack.c.h.b16 %v1729
        %v1796 = vunpack.c.l.b16 %v1730
        %v1797 = vunpack.c.h.b16 %v1730
        %v1798 = vunpack.c.l.b16 %v1731
        %v1799 = vunpack.c.h.b16 %v1731
        %v1800 = vunpack.c.l.b16 %v1732
        %v1801 = vunpack.c.h.b16 %v1732
        %v1802 = vunpack.c.l.b16 %v1733
        %v1803 = vunpack.c.h.b16 %v1733
        %v1804 = vunpack.c.l.b16 %v1734
        %v1805 = vunpack.c.h.b16 %v1734
        %v1806 = vunpack.c.l.b16 %v1735
        %v1807 = vunpack.c.h.b16 %v1735
        %v1808 = vunpack.c.l.b16 %v1736
        %v1809 = vunpack.c.h.b16 %v1736
        %v1810 = vunpack.c.l.b16 %v1737
        %v1811 = vunpack.c.h.b16 %v1737
        %v1812 = vunpack.c.l.b16 %v1738
        %v1813 = vunpack.c.h.b16 %v1738
        %v1814 = vunpack.c.l.b16 %v1739
        %v1815 = vunpack.c.h.b16 %v1739
        %v1816 = vunpack.c.l.b16 %v1740
        %v1817 = vunpack.c.h.b16 %v1740
        %v1818 = vunpack.c.l.b16 %v1741
        %v1819 = vunpack.c.h.b16 %v1741
        %v1820 = vunpack.c.l.b16 %v1742
        %v1821 = vunpack.c.h.b16 %v1742
        %v1822 = vunpack.c.l.b16 %v1743
        %v1823 = vunpack.c.h.b16 %v1743
        %v1824 = vunpack.c.l.b16 %v1744
        %v1825 = vunpack.c.h.b16 %v1744
        %v1826 = vunpack.c.l.b16 %v1745
        %v1827 = vunpack.c.h.b16 %v1745
        %v1828 = vunpack.c.l.b16 %v1746
        %v1829 = vunpack.c.h.b16 %v1746
        %v1830 = vunpack.c.l.b16 %v1747
        %v1831 = vunpack.c.h.b16 %v1747
        %v1832 = vunpack.c.l.b16 %v1748
        %v1833 = vunpack.c.h.b16 %v1748
        %v1834 = vunpack.c.l.b16 %v1749
        %v1835 = vunpack.c.h.b16 %v1749
        %v1836 = vunpack.c.l.b16 %v1750
        %v1837 = vunpack.c.h.b16 %v1750
        %v1838 = vunpack.c.l.b16 %v1751
        %v1839 = vunpack.c.h.b16 %v1751
        %v1840 = vunpack.c.l.b16 %v1752
        %v1841 = vunpack.c.h.b16 %v1752
        %v1842 = vunpack.c.l.b16 %v1753
        %v1843 = vunpack.c.h.b16 %v1753
        %v1844 = vunpack.c.l.b16 %v1754
        %v1845 = vunpack.c.h.b16 %v1754
        %v1846 = vunpack.c.l.b16 %v1755
        %v1847 = vunpack.c.h.b16 %v1755
        %v1848 = vunpack.c.l.b16 %v1756
        %v1849 = vunpack.c.h.b16 %v1756
        %v1850 = vunpack.c.l.b16 %v1757
        %v1851 = vunpack.c.h.b16 %v1757
        %v1852 = vunpack.c.l.b16 %v1758
        %v1853 = vunpack.c.h.b16 %v1758
        %v1854 = vunpack.c.l.b16 %v1759
        %v1855 = vunpack.c.h.b16 %v1759
        %v1856 = vpack.c.b16 %v1794, %v1792
        %v1857 = vpack.c.b16 %v1795, %v1793
        %v1858 = vpack.c.b16 %v1798, %v1796
        %v1859 = vpack.c.b16 %v1799, %v1797
        %v1860 = vpack.c.b16 %v1802, %v1800
        %v1861 = vpack.c.b16 %v1803, %v1801
        %v1862 = vpack.c.b16 %v1806, %v1804
        %v1863 = vpack.c.b16 %v1807, %v1805
        %v1864 = vpack.c.b16 %v1810, %v1808
        %v1865 = vpack.c.b16 %v1811, %v1809
        %v1866 = vpack.c.b16 %v1814, %v1812
        %v1867 = vpack.c.b16 %v1815, %v1813
        %v1868 = vpack.c.b16 %v1818, %v1816
        %v1869 = vpack.c.b16 %v1819, %v1817
        %v1870 = vpack.c.b16 %v1822, %v1820
        %v1871 = vpack.c.b16 %v1823, %v1821
        %v1872 = vpack.c.b16 %v1826, %v1824
        %v1873 = vpack.c.b16 %v1827, %v1825
        %v1874 = vpack.c.b16 %v1830, %v1828
        %v1875 = vpack.c.b16 %v1831, %v1829
        %v1876 = vpack.c.b16 %v1834, %v1832
        %v1877 = vpack.c.b16 %v1835, %v1833
        %v1878 = vpack.c.b16 %v1838, %v1836
        %v1879 = vpack.c.b16 %v1839, %v1837
        %v1880 = vpack.c.b16 %v1842, %v1840
        %v1881 = vpack.c.b16 %v1843, %v1841
        %v1882 = vpack.c.b16 %v1846, %v1844
        %v1883 = vpack.c.b16 %v1847, %v1845
        %v1884 = vpack.c.b16 %v1850, %v1848
        %v1885 = vpack.c.b16 %v1851, %v1849
        %v1886 = vpack.c.b16 %v1854, %v1852
        %v1887 = vpack.c.b16 %v1855, %v1853
        %1920 = vmatpush.bf16.msra.mxu0 %v1870
        %1921 = vmatpush.bf16.msra.mxu0 %v1868
        %1922 = vmatpush.bf16.msra.mxu0 %v1866
        %1923 = vmatpush.bf16.msra.mxu0 %v1864
        %1924 = vmatpush.bf16.msra.mxu0 %v1862
        %1925 = vmatpush.bf16.msra.mxu0 %v1860
        %1926 = vmatpush.bf16.msra.mxu0 %v1858
        %1927 = vmatpush.bf16.msra.mxu0 %v1856
        %1928 = vmatmul.bf16.gmra.mxu0 %v585
        %v1929 = vpop.f32.mrf.mxu0
        %v1930 = vadd.f32 0.0, %v1929
        %v1931 = vpop.f32.mrf.mxu0
        %1932 = vdwg.mxu0
        %1933 = vmatpush.bf16.msra.mxu0 %v1886
        %1934 = vmatpush.bf16.msra.mxu0 %v1884
        %1935 = vmatpush.bf16.msra.mxu0 %v1882
        %1936 = vmatpush.bf16.msra.mxu0 %v1880
        %1937 = vmatpush.bf16.msra.mxu0 %v1878
        %1938 = vmatpush.bf16.msra.mxu0 %v1876
        %1939 = vmatpush.bf16.msra.mxu0 %v1874
        %1940 = vmatpush.bf16.msra.mxu0 %v1872
        %1941 = vmatmul.bf16.gmra.mxu0 %v586
        %v1942 = vpop.f32.mrf.mxu0
        %v1943 = vadd.f32 %v1930, %v1942
        %v1944 = vpop.f32.mrf.mxu0
        %1945 = vdwg.mxu0
        %1946 = vmatpush.bf16.msra.mxu0 %v1871
        %1947 = vmatpush.bf16.msra.mxu0 %v1869
        %1948 = vmatpush.bf16.msra.mxu0 %v1867
        %1949 = vmatpush.bf16.msra.mxu0 %v1865
        %1950 = vmatpush.bf16.msra.mxu0 %v1863
        %1951 = vmatpush.bf16.msra.mxu0 %v1861
        %1952 = vmatpush.bf16.msra.mxu0 %v1859
        %1953 = vmatpush.bf16.msra.mxu0 %v1857
        %1954 = vmatmul.bf16.gmra.mxu0 %v585
        %v1955 = vpop.f32.mrf.mxu0
        %v1956 = vadd.f32 0.0, %v1955
        %v1957 = vpop.f32.mrf.mxu0
        %1958 = vdwg.mxu0
        %1959 = vmatpush.bf16.msra.mxu0 %v1887
        %1960 = vmatpush.bf16.msra.mxu0 %v1885
        %1961 = vmatpush.bf16.msra.mxu0 %v1883
        %1962 = vmatpush.bf16.msra.mxu0 %v1881
        %1963 = vmatpush.bf16.msra.mxu0 %v1879
        %1964 = vmatpush.bf16.msra.mxu0 %v1877
        %1965 = vmatpush.bf16.msra.mxu0 %v1875
        %1966 = vmatpush.bf16.msra.mxu0 %v1873
        %1967 = vmatmul.bf16.gmra.mxu0 %v586
        %v1968 = vpop.f32.mrf.mxu0
        %v1969 = vadd.f32 %v1956, %v1968
        %v1970 = vpop.f32.mrf.mxu0
        %1971 = vdwg.mxu0
        %v1972 = vpack.c.bf16 %v1943, %v1943
        %v1973 = vpack.c.bf16 %v1969, %v1969
        %s1974 = scalar_lea.vmem [#allocation4], 16
        %v1975 = vld [vmem:[%s1974] sm:$0xf]
        %v1977 = vsel %vm1083, %v1975, 0
        %v1980 = vsel %vm1087, %v1972, 0
        %v1983 = vsel %vm1087, %v1973, 0
        %1985 = vmatpush.bf16.msra.mxu0 0
        %1986 = vmatpush.bf16.msra.mxu0 0
        %1987 = vmatpush.bf16.msra.mxu0 0
        %1988 = vmatpush.bf16.msra.mxu0 0
        %1989 = vmatpush.bf16.msra.mxu0 0
        %1990 = vmatpush.bf16.msra.mxu0 0
        %1991 = vmatpush.bf16.msra.mxu0 0
        %1992 = vmatpush.bf16.msra.mxu0 %v1980
        %1993 = vmatmul.bf16.gmra.mxu0 %v1977
        %v1994 = vpop.f32.mrf.mxu0
        %v1995 = vadd.f32 0.0, %v1994
        %v1996 = vpop.f32.mrf.mxu0
        %1997 = vdwg.mxu0
        %1998 = vmatpush.bf16.msra.mxu0 0
        %1999 = vmatpush.bf16.msra.mxu0 0
        %2000 = vmatpush.bf16.msra.mxu0 0
        %2001 = vmatpush.bf16.msra.mxu0 0
        %2002 = vmatpush.bf16.msra.mxu0 0
        %2003 = vmatpush.bf16.msra.mxu0 0
        %2004 = vmatpush.bf16.msra.mxu0 0
        %2005 = vmatpush.bf16.msra.mxu0 %v1983
        %2006 = vmatmul.bf16.gmra.mxu0 %v1977
        %v2007 = vpop.f32.mrf.mxu0
        %v2008 = vadd.f32 0.0, %v2007
        %v2009 = vpop.f32.mrf.mxu0
        %2010 = vdwg.mxu0
        %v2011 = vadd.f32 %v1725, %v1995
        %v2012 = vadd.f32 %v1726, %v2008
        %s2013 = scalar_lea.vmem [#allocation2], 1280
        %v2014 = vld [vmem:[%s2013] sm:$0xff]
        %v2015 = vld [vmem:[%s2013 + $0x8] sm:$0xff]
        %v2016 = vld [vmem:[%s2013 + $0x10] sm:$0xff]
        %v2017 = vld [vmem:[%s2013 + $0x18] sm:$0xff]
        %v2018 = vld [vmem:[%s2013 + $0x20] sm:$0xff]
        %v2019 = vld [vmem:[%s2013 + $0x28] sm:$0xff]
        %v2020 = vld [vmem:[%s2013 + $0x30] sm:$0xff]
        %v2021 = vld [vmem:[%s2013 + $0x38] sm:$0xff]
        %v2022 = vld [vmem:[%s2013 + $0x40] sm:$0xff]
        %v2023 = vld [vmem:[%s2013 + $0x48] sm:$0xff]
        %v2024 = vld [vmem:[%s2013 + $0x50] sm:$0xff]
        %v2025 = vld [vmem:[%s2013 + $0x58] sm:$0xff]
        %v2026 = vld [vmem:[%s2013 + $0x60] sm:$0xff]
        %v2027 = vld [vmem:[%s2013 + $0x68] sm:$0xff]
        %v2028 = vld [vmem:[%s2013 + $0x70] sm:$0xff]
        %v2029 = vld [vmem:[%s2013 + $0x78] sm:$0xff]
        %v2030 = vld [vmem:[%s2013 + $0x80] sm:$0xff]
        %v2031 = vld [vmem:[%s2013 + $0x88] sm:$0xff]
        %v2032 = vld [vmem:[%s2013 + $0x90] sm:$0xff]
        %v2033 = vld [vmem:[%s2013 + $0x98] sm:$0xff]
        %v2034 = vld [vmem:[%s2013 + $0xa0] sm:$0xff]
        %v2035 = vld [vmem:[%s2013 + $0xa8] sm:$0xff]
        %v2036 = vld [vmem:[%s2013 + $0xb0] sm:$0xff]
        %v2037 = vld [vmem:[%s2013 + $0xb8] sm:$0xff]
        %v2038 = vld [vmem:[%s2013 + $0xc0] sm:$0xff]
        %v2039 = vld [vmem:[%s2013 + $0xc8] sm:$0xff]
        %v2040 = vld [vmem:[%s2013 + $0xd0] sm:$0xff]
        %v2041 = vld [vmem:[%s2013 + $0xd8] sm:$0xff]
        %v2042 = vld [vmem:[%s2013 + $0xe0] sm:$0xff]
        %v2043 = vld [vmem:[%s2013 + $0xe8] sm:$0xff]
        %v2044 = vld [vmem:[%s2013 + $0xf0] sm:$0xff]
        %v2045 = vld [vmem:[%s2013 + $0xf8] sm:$0xff]
        %v2078 = vunpack.c.l.b16 %v2014
        %v2079 = vunpack.c.h.b16 %v2014
        %v2080 = vunpack.c.l.b16 %v2015
        %v2081 = vunpack.c.h.b16 %v2015
        %v2082 = vunpack.c.l.b16 %v2016
        %v2083 = vunpack.c.h.b16 %v2016
        %v2084 = vunpack.c.l.b16 %v2017
        %v2085 = vunpack.c.h.b16 %v2017
        %v2086 = vunpack.c.l.b16 %v2018
        %v2087 = vunpack.c.h.b16 %v2018
        %v2088 = vunpack.c.l.b16 %v2019
        %v2089 = vunpack.c.h.b16 %v2019
        %v2090 = vunpack.c.l.b16 %v2020
        %v2091 = vunpack.c.h.b16 %v2020
        %v2092 = vunpack.c.l.b16 %v2021
        %v2093 = vunpack.c.h.b16 %v2021
        %v2094 = vunpack.c.l.b16 %v2022
        %v2095 = vunpack.c.h.b16 %v2022
        %v2096 = vunpack.c.l.b16 %v2023
        %v2097 = vunpack.c.h.b16 %v2023
        %v2098 = vunpack.c.l.b16 %v2024
        %v2099 = vunpack.c.h.b16 %v2024
        %v2100 = vunpack.c.l.b16 %v2025
        %v2101 = vunpack.c.h.b16 %v2025
        %v2102 = vunpack.c.l.b16 %v2026
        %v2103 = vunpack.c.h.b16 %v2026
        %v2104 = vunpack.c.l.b16 %v2027
        %v2105 = vunpack.c.h.b16 %v2027
        %v2106 = vunpack.c.l.b16 %v2028
        %v2107 = vunpack.c.h.b16 %v2028
        %v2108 = vunpack.c.l.b16 %v2029
        %v2109 = vunpack.c.h.b16 %v2029
        %v2110 = vunpack.c.l.b16 %v2030
        %v2111 = vunpack.c.h.b16 %v2030
        %v2112 = vunpack.c.l.b16 %v2031
        %v2113 = vunpack.c.h.b16 %v2031
        %v2114 = vunpack.c.l.b16 %v2032
        %v2115 = vunpack.c.h.b16 %v2032
        %v2116 = vunpack.c.l.b16 %v2033
        %v2117 = vunpack.c.h.b16 %v2033
        %v2118 = vunpack.c.l.b16 %v2034
        %v2119 = vunpack.c.h.b16 %v2034
        %v2120 = vunpack.c.l.b16 %v2035
        %v2121 = vunpack.c.h.b16 %v2035
        %v2122 = vunpack.c.l.b16 %v2036
        %v2123 = vunpack.c.h.b16 %v2036
        %v2124 = vunpack.c.l.b16 %v2037
        %v2125 = vunpack.c.h.b16 %v2037
        %v2126 = vunpack.c.l.b16 %v2038
        %v2127 = vunpack.c.h.b16 %v2038
        %v2128 = vunpack.c.l.b16 %v2039
        %v2129 = vunpack.c.h.b16 %v2039
        %v2130 = vunpack.c.l.b16 %v2040
        %v2131 = vunpack.c.h.b16 %v2040
        %v2132 = vunpack.c.l.b16 %v2041
        %v2133 = vunpack.c.h.b16 %v2041
        %v2134 = vunpack.c.l.b16 %v2042
        %v2135 = vunpack.c.h.b16 %v2042
        %v2136 = vunpack.c.l.b16 %v2043
        %v2137 = vunpack.c.h.b16 %v2043
        %v2138 = vunpack.c.l.b16 %v2044
        %v2139 = vunpack.c.h.b16 %v2044
        %v2140 = vunpack.c.l.b16 %v2045
        %v2141 = vunpack.c.h.b16 %v2045
        %v2142 = vpack.c.b16 %v2080, %v2078
        %v2143 = vpack.c.b16 %v2081, %v2079
        %v2144 = vpack.c.b16 %v2084, %v2082
        %v2145 = vpack.c.b16 %v2085, %v2083
        %v2146 = vpack.c.b16 %v2088, %v2086
        %v2147 = vpack.c.b16 %v2089, %v2087
        %v2148 = vpack.c.b16 %v2092, %v2090
        %v2149 = vpack.c.b16 %v2093, %v2091
        %v2150 = vpack.c.b16 %v2096, %v2094
        %v2151 = vpack.c.b16 %v2097, %v2095
        %v2152 = vpack.c.b16 %v2100, %v2098
        %v2153 = vpack.c.b16 %v2101, %v2099
        %v2154 = vpack.c.b16 %v2104, %v2102
        %v2155 = vpack.c.b16 %v2105, %v2103
        %v2156 = vpack.c.b16 %v2108, %v2106
        %v2157 = vpack.c.b16 %v2109, %v2107
        %v2158 = vpack.c.b16 %v2112, %v2110
        %v2159 = vpack.c.b16 %v2113, %v2111
        %v2160 = vpack.c.b16 %v2116, %v2114
        %v2161 = vpack.c.b16 %v2117, %v2115
        %v2162 = vpack.c.b16 %v2120, %v2118
        %v2163 = vpack.c.b16 %v2121, %v2119
        %v2164 = vpack.c.b16 %v2124, %v2122
        %v2165 = vpack.c.b16 %v2125, %v2123
        %v2166 = vpack.c.b16 %v2128, %v2126
        %v2167 = vpack.c.b16 %v2129, %v2127
        %v2168 = vpack.c.b16 %v2132, %v2130
        %v2169 = vpack.c.b16 %v2133, %v2131
        %v2170 = vpack.c.b16 %v2136, %v2134
        %v2171 = vpack.c.b16 %v2137, %v2135
        %v2172 = vpack.c.b16 %v2140, %v2138
        %v2173 = vpack.c.b16 %v2141, %v2139
        %2206 = vmatpush.bf16.msra.mxu0 %v2156
        %2207 = vmatpush.bf16.msra.mxu0 %v2154
        %2208 = vmatpush.bf16.msra.mxu0 %v2152
        %2209 = vmatpush.bf16.msra.mxu0 %v2150
        %2210 = vmatpush.bf16.msra.mxu0 %v2148
        %2211 = vmatpush.bf16.msra.mxu0 %v2146
        %2212 = vmatpush.bf16.msra.mxu0 %v2144
        %2213 = vmatpush.bf16.msra.mxu0 %v2142
        %2214 = vmatmul.bf16.gmra.mxu0 %v585
        %v2215 = vpop.f32.mrf.mxu0
        %v2216 = vadd.f32 0.0, %v2215
        %v2217 = vpop.f32.mrf.mxu0
        %2218 = vdwg.mxu0
        %2219 = vmatpush.bf16.msra.mxu0 %v2172
        %2220 = vmatpush.bf16.msra.mxu0 %v2170
        %2221 = vmatpush.bf16.msra.mxu0 %v2168
        %2222 = vmatpush.bf16.msra.mxu0 %v2166
        %2223 = vmatpush.bf16.msra.mxu0 %v2164
        %2224 = vmatpush.bf16.msra.mxu0 %v2162
        %2225 = vmatpush.bf16.msra.mxu0 %v2160
        %2226 = vmatpush.bf16.msra.mxu0 %v2158
        %2227 = vmatmul.bf16.gmra.mxu0 %v586
        %v2228 = vpop.f32.mrf.mxu0
        %v2229 = vadd.f32 %v2216, %v2228
        %v2230 = vpop.f32.mrf.mxu0
        %2231 = vdwg.mxu0
        %2232 = vmatpush.bf16.msra.mxu0 %v2157
        %2233 = vmatpush.bf16.msra.mxu0 %v2155
        %2234 = vmatpush.bf16.msra.mxu0 %v2153
        %2235 = vmatpush.bf16.msra.mxu0 %v2151
        %2236 = vmatpush.bf16.msra.mxu0 %v2149
        %2237 = vmatpush.bf16.msra.mxu0 %v2147
        %2238 = vmatpush.bf16.msra.mxu0 %v2145
        %2239 = vmatpush.bf16.msra.mxu0 %v2143
        %2240 = vmatmul.bf16.gmra.mxu0 %v585
        %v2241 = vpop.f32.mrf.mxu0
        %v2242 = vadd.f32 0.0, %v2241
        %v2243 = vpop.f32.mrf.mxu0
        %2244 = vdwg.mxu0
        %2245 = vmatpush.bf16.msra.mxu0 %v2173
        %2246 = vmatpush.bf16.msra.mxu0 %v2171
        %2247 = vmatpush.bf16.msra.mxu0 %v2169
        %2248 = vmatpush.bf16.msra.mxu0 %v2167
        %2249 = vmatpush.bf16.msra.mxu0 %v2165
        %2250 = vmatpush.bf16.msra.mxu0 %v2163
        %2251 = vmatpush.bf16.msra.mxu0 %v2161
        %2252 = vmatpush.bf16.msra.mxu0 %v2159
        %2253 = vmatmul.bf16.gmra.mxu0 %v586
        %v2254 = vpop.f32.mrf.mxu0
        %v2255 = vadd.f32 %v2242, %v2254
        %v2256 = vpop.f32.mrf.mxu0
        %2257 = vdwg.mxu0
        %v2258 = vpack.c.bf16 %v2229, %v2229
        %v2259 = vpack.c.bf16 %v2255, %v2255
        %s2260 = scalar_lea.vmem [#allocation4], 20
        %v2261 = vld [vmem:[%s2260] sm:$0xf]
        %v2263 = vsel %vm1083, %v2261, 0
        %v2266 = vsel %vm1087, %v2258, 0
        %v2269 = vsel %vm1087, %v2259, 0
        %2271 = vmatpush.bf16.msra.mxu0 0
        %2272 = vmatpush.bf16.msra.mxu0 0
        %2273 = vmatpush.bf16.msra.mxu0 0
        %2274 = vmatpush.bf16.msra.mxu0 0
        %2275 = vmatpush.bf16.msra.mxu0 0
        %2276 = vmatpush.bf16.msra.mxu0 0
        %2277 = vmatpush.bf16.msra.mxu0 0
        %2278 = vmatpush.bf16.msra.mxu0 %v2266
        %2279 = vmatmul.bf16.gmra.mxu0 %v2263
        %v2280 = vpop.f32.mrf.mxu0
        %v2281 = vadd.f32 0.0, %v2280
        %v2282 = vpop.f32.mrf.mxu0
        %2283 = vdwg.mxu0
        %2284 = vmatpush.bf16.msra.mxu0 0
        %2285 = vmatpush.bf16.msra.mxu0 0
        %2286 = vmatpush.bf16.msra.mxu0 0
        %2287 = vmatpush.bf16.msra.mxu0 0
        %2288 = vmatpush.bf16.msra.mxu0 0
        %2289 = vmatpush.bf16.msra.mxu0 0
        %2290 = vmatpush.bf16.msra.mxu0 0
        %2291 = vmatpush.bf16.msra.mxu0 %v2269
        %2292 = vmatmul.bf16.gmra.mxu0 %v2263
        %v2293 = vpop.f32.mrf.mxu0
        %v2294 = vadd.f32 0.0, %v2293
        %v2295 = vpop.f32.mrf.mxu0
        %2296 = vdwg.mxu0
        %v2297 = vadd.f32 %v2011, %v2281
        %v2298 = vadd.f32 %v2012, %v2294
        %s2299 = scalar_lea.vmem [#allocation2], 1536
        %v2300 = vld [vmem:[%s2299] sm:$0xff]
        %v2301 = vld [vmem:[%s2299 + $0x8] sm:$0xff]
        %v2302 = vld [vmem:[%s2299 + $0x10] sm:$0xff]
        %v2303 = vld [vmem:[%s2299 + $0x18] sm:$0xff]
        %v2304 = vld [vmem:[%s2299 + $0x20] sm:$0xff]
        %v2305 = vld [vmem:[%s2299 + $0x28] sm:$0xff]
        %v2306 = vld [vmem:[%s2299 + $0x30] sm:$0xff]
        %v2307 = vld [vmem:[%s2299 + $0x38] sm:$0xff]
        %v2308 = vld [vmem:[%s2299 + $0x40] sm:$0xff]
        %v2309 = vld [vmem:[%s2299 + $0x48] sm:$0xff]
        %v2310 = vld [vmem:[%s2299 + $0x50] sm:$0xff]
        %v2311 = vld [vmem:[%s2299 + $0x58] sm:$0xff]
        %v2312 = vld [vmem:[%s2299 + $0x60] sm:$0xff]
        %v2313 = vld [vmem:[%s2299 + $0x68] sm:$0xff]
        %v2314 = vld [vmem:[%s2299 + $0x70] sm:$0xff]
        %v2315 = vld [vmem:[%s2299 + $0x78] sm:$0xff]
        %v2316 = vld [vmem:[%s2299 + $0x80] sm:$0xff]
        %v2317 = vld [vmem:[%s2299 + $0x88] sm:$0xff]
        %v2318 = vld [vmem:[%s2299 + $0x90] sm:$0xff]
        %v2319 = vld [vmem:[%s2299 + $0x98] sm:$0xff]
        %v2320 = vld [vmem:[%s2299 + $0xa0] sm:$0xff]
        %v2321 = vld [vmem:[%s2299 + $0xa8] sm:$0xff]
        %v2322 = vld [vmem:[%s2299 + $0xb0] sm:$0xff]
        %v2323 = vld [vmem:[%s2299 + $0xb8] sm:$0xff]
        %v2324 = vld [vmem:[%s2299 + $0xc0] sm:$0xff]
        %v2325 = vld [vmem:[%s2299 + $0xc8] sm:$0xff]
        %v2326 = vld [vmem:[%s2299 + $0xd0] sm:$0xff]
        %v2327 = vld [vmem:[%s2299 + $0xd8] sm:$0xff]
        %v2328 = vld [vmem:[%s2299 + $0xe0] sm:$0xff]
        %v2329 = vld [vmem:[%s2299 + $0xe8] sm:$0xff]
        %v2330 = vld [vmem:[%s2299 + $0xf0] sm:$0xff]
        %v2331 = vld [vmem:[%s2299 + $0xf8] sm:$0xff]
        %v2364 = vunpack.c.l.b16 %v2300
        %v2365 = vunpack.c.h.b16 %v2300
        %v2366 = vunpack.c.l.b16 %v2301
        %v2367 = vunpack.c.h.b16 %v2301
        %v2368 = vunpack.c.l.b16 %v2302
        %v2369 = vunpack.c.h.b16 %v2302
        %v2370 = vunpack.c.l.b16 %v2303
        %v2371 = vunpack.c.h.b16 %v2303
        %v2372 = vunpack.c.l.b16 %v2304
        %v2373 = vunpack.c.h.b16 %v2304
        %v2374 = vunpack.c.l.b16 %v2305
        %v2375 = vunpack.c.h.b16 %v2305
        %v2376 = vunpack.c.l.b16 %v2306
        %v2377 = vunpack.c.h.b16 %v2306
        %v2378 = vunpack.c.l.b16 %v2307
        %v2379 = vunpack.c.h.b16 %v2307
        %v2380 = vunpack.c.l.b16 %v2308
        %v2381 = vunpack.c.h.b16 %v2308
        %v2382 = vunpack.c.l.b16 %v2309
        %v2383 = vunpack.c.h.b16 %v2309
        %v2384 = vunpack.c.l.b16 %v2310
        %v2385 = vunpack.c.h.b16 %v2310
        %v2386 = vunpack.c.l.b16 %v2311
        %v2387 = vunpack.c.h.b16 %v2311
        %v2388 = vunpack.c.l.b16 %v2312
        %v2389 = vunpack.c.h.b16 %v2312
        %v2390 = vunpack.c.l.b16 %v2313
        %v2391 = vunpack.c.h.b16 %v2313
        %v2392 = vunpack.c.l.b16 %v2314
        %v2393 = vunpack.c.h.b16 %v2314
        %v2394 = vunpack.c.l.b16 %v2315
        %v2395 = vunpack.c.h.b16 %v2315
        %v2396 = vunpack.c.l.b16 %v2316
        %v2397 = vunpack.c.h.b16 %v2316
        %v2398 = vunpack.c.l.b16 %v2317
        %v2399 = vunpack.c.h.b16 %v2317
        %v2400 = vunpack.c.l.b16 %v2318
        %v2401 = vunpack.c.h.b16 %v2318
        %v2402 = vunpack.c.l.b16 %v2319
        %v2403 = vunpack.c.h.b16 %v2319
        %v2404 = vunpack.c.l.b16 %v2320
        %v2405 = vunpack.c.h.b16 %v2320
        %v2406 = vunpack.c.l.b16 %v2321
        %v2407 = vunpack.c.h.b16 %v2321
        %v2408 = vunpack.c.l.b16 %v2322
        %v2409 = vunpack.c.h.b16 %v2322
        %v2410 = vunpack.c.l.b16 %v2323
        %v2411 = vunpack.c.h.b16 %v2323
        %v2412 = vunpack.c.l.b16 %v2324
        %v2413 = vunpack.c.h.b16 %v2324
        %v2414 = vunpack.c.l.b16 %v2325
        %v2415 = vunpack.c.h.b16 %v2325
        %v2416 = vunpack.c.l.b16 %v2326
        %v2417 = vunpack.c.h.b16 %v2326
        %v2418 = vunpack.c.l.b16 %v2327
        %v2419 = vunpack.c.h.b16 %v2327
        %v2420 = vunpack.c.l.b16 %v2328
        %v2421 = vunpack.c.h.b16 %v2328
        %v2422 = vunpack.c.l.b16 %v2329
        %v2423 = vunpack.c.h.b16 %v2329
        %v2424 = vunpack.c.l.b16 %v2330
        %v2425 = vunpack.c.h.b16 %v2330
        %v2426 = vunpack.c.l.b16 %v2331
        %v2427 = vunpack.c.h.b16 %v2331
        %v2428 = vpack.c.b16 %v2366, %v2364
        %v2429 = vpack.c.b16 %v2367, %v2365
        %v2430 = vpack.c.b16 %v2370, %v2368
        %v2431 = vpack.c.b16 %v2371, %v2369
        %v2432 = vpack.c.b16 %v2374, %v2372
        %v2433 = vpack.c.b16 %v2375, %v2373
        %v2434 = vpack.c.b16 %v2378, %v2376
        %v2435 = vpack.c.b16 %v2379, %v2377
        %v2436 = vpack.c.b16 %v2382, %v2380
        %v2437 = vpack.c.b16 %v2383, %v2381
        %v2438 = vpack.c.b16 %v2386, %v2384
        %v2439 = vpack.c.b16 %v2387, %v2385
        %v2440 = vpack.c.b16 %v2390, %v2388
        %v2441 = vpack.c.b16 %v2391, %v2389
        %v2442 = vpack.c.b16 %v2394, %v2392
        %v2443 = vpack.c.b16 %v2395, %v2393
        %v2444 = vpack.c.b16 %v2398, %v2396
        %v2445 = vpack.c.b16 %v2399, %v2397
        %v2446 = vpack.c.b16 %v2402, %v2400
        %v2447 = vpack.c.b16 %v2403, %v2401
        %v2448 = vpack.c.b16 %v2406, %v2404
        %v2449 = vpack.c.b16 %v2407, %v2405
        %v2450 = vpack.c.b16 %v2410, %v2408
        %v2451 = vpack.c.b16 %v2411, %v2409
        %v2452 = vpack.c.b16 %v2414, %v2412
        %v2453 = vpack.c.b16 %v2415, %v2413
        %v2454 = vpack.c.b16 %v2418, %v2416
        %v2455 = vpack.c.b16 %v2419, %v2417
        %v2456 = vpack.c.b16 %v2422, %v2420
        %v2457 = vpack.c.b16 %v2423, %v2421
        %v2458 = vpack.c.b16 %v2426, %v2424
        %v2459 = vpack.c.b16 %v2427, %v2425
        %2492 = vmatpush.bf16.msra.mxu0 %v2442
        %2493 = vmatpush.bf16.msra.mxu0 %v2440
        %2494 = vmatpush.bf16.msra.mxu0 %v2438
        %2495 = vmatpush.bf16.msra.mxu0 %v2436
        %2496 = vmatpush.bf16.msra.mxu0 %v2434
        %2497 = vmatpush.bf16.msra.mxu0 %v2432
        %2498 = vmatpush.bf16.msra.mxu0 %v2430
        %2499 = vmatpush.bf16.msra.mxu0 %v2428
        %2500 = vmatmul.bf16.gmra.mxu0 %v585
        %v2501 = vpop.f32.mrf.mxu0
        %v2502 = vadd.f32 0.0, %v2501
        %v2503 = vpop.f32.mrf.mxu0
        %2504 = vdwg.mxu0
        %2505 = vmatpush.bf16.msra.mxu0 %v2458
        %2506 = vmatpush.bf16.msra.mxu0 %v2456
        %2507 = vmatpush.bf16.msra.mxu0 %v2454
        %2508 = vmatpush.bf16.msra.mxu0 %v2452
        %2509 = vmatpush.bf16.msra.mxu0 %v2450
        %2510 = vmatpush.bf16.msra.mxu0 %v2448
        %2511 = vmatpush.bf16.msra.mxu0 %v2446
        %2512 = vmatpush.bf16.msra.mxu0 %v2444
        %2513 = vmatmul.bf16.gmra.mxu0 %v586
        %v2514 = vpop.f32.mrf.mxu0
        %v2515 = vadd.f32 %v2502, %v2514
        %v2516 = vpop.f32.mrf.mxu0
        %2517 = vdwg.mxu0
        %2518 = vmatpush.bf16.msra.mxu0 %v2443
        %2519 = vmatpush.bf16.msra.mxu0 %v2441
        %2520 = vmatpush.bf16.msra.mxu0 %v2439
        %2521 = vmatpush.bf16.msra.mxu0 %v2437
        %2522 = vmatpush.bf16.msra.mxu0 %v2435
        %2523 = vmatpush.bf16.msra.mxu0 %v2433
        %2524 = vmatpush.bf16.msra.mxu0 %v2431
        %2525 = vmatpush.bf16.msra.mxu0 %v2429
        %2526 = vmatmul.bf16.gmra.mxu0 %v585
        %v2527 = vpop.f32.mrf.mxu0
        %v2528 = vadd.f32 0.0, %v2527
        %v2529 = vpop.f32.mrf.mxu0
        %2530 = vdwg.mxu0
        %2531 = vmatpush.bf16.msra.mxu0 %v2459
        %2532 = vmatpush.bf16.msra.mxu0 %v2457
        %2533 = vmatpush.bf16.msra.mxu0 %v2455
        %2534 = vmatpush.bf16.msra.mxu0 %v2453
        %2535 = vmatpush.bf16.msra.mxu0 %v2451
        %2536 = vmatpush.bf16.msra.mxu0 %v2449
        %2537 = vmatpush.bf16.msra.mxu0 %v2447
        %2538 = vmatpush.bf16.msra.mxu0 %v2445
        %2539 = vmatmul.bf16.gmra.mxu0 %v586
        %v2540 = vpop.f32.mrf.mxu0
        %v2541 = vadd.f32 %v2528, %v2540
        %v2542 = vpop.f32.mrf.mxu0
        %2543 = vdwg.mxu0
        %v2544 = vpack.c.bf16 %v2515, %v2515
        %v2545 = vpack.c.bf16 %v2541, %v2541
        %s2546 = scalar_lea.vmem [#allocation4], 24
        %v2547 = vld [vmem:[%s2546] sm:$0xf]
        %v2549 = vsel %vm1083, %v2547, 0
        %v2552 = vsel %vm1087, %v2544, 0
        %v2555 = vsel %vm1087, %v2545, 0
        %2557 = vmatpush.bf16.msra.mxu0 0
        %2558 = vmatpush.bf16.msra.mxu0 0
        %2559 = vmatpush.bf16.msra.mxu0 0
        %2560 = vmatpush.bf16.msra.mxu0 0
        %2561 = vmatpush.bf16.msra.mxu0 0
        %2562 = vmatpush.bf16.msra.mxu0 0
        %2563 = vmatpush.bf16.msra.mxu0 0
        %2564 = vmatpush.bf16.msra.mxu0 %v2552
        %2565 = vmatmul.bf16.gmra.mxu0 %v2549
        %v2566 = vpop.f32.mrf.mxu0
        %v2567 = vadd.f32 0.0, %v2566
        %v2568 = vpop.f32.mrf.mxu0
        %2569 = vdwg.mxu0
        %2570 = vmatpush.bf16.msra.mxu0 0
        %2571 = vmatpush.bf16.msra.mxu0 0
        %2572 = vmatpush.bf16.msra.mxu0 0
        %2573 = vmatpush.bf16.msra.mxu0 0
        %2574 = vmatpush.bf16.msra.mxu0 0
        %2575 = vmatpush.bf16.msra.mxu0 0
        %2576 = vmatpush.bf16.msra.mxu0 0
        %2577 = vmatpush.bf16.msra.mxu0 %v2555
        %2578 = vmatmul.bf16.gmra.mxu0 %v2549
        %v2579 = vpop.f32.mrf.mxu0
        %v2580 = vadd.f32 0.0, %v2579
        %v2581 = vpop.f32.mrf.mxu0
        %2582 = vdwg.mxu0
        %v2583 = vadd.f32 %v2297, %v2567
        %v2584 = vadd.f32 %v2298, %v2580
        %s2585 = scalar_lea.vmem [#allocation2], 1792
        %v2586 = vld [vmem:[%s2585] sm:$0xff]
        %v2587 = vld [vmem:[%s2585 + $0x8] sm:$0xff]
        %v2588 = vld [vmem:[%s2585 + $0x10] sm:$0xff]
        %v2589 = vld [vmem:[%s2585 + $0x18] sm:$0xff]
        %v2590 = vld [vmem:[%s2585 + $0x20] sm:$0xff]
        %v2591 = vld [vmem:[%s2585 + $0x28] sm:$0xff]
        %v2592 = vld [vmem:[%s2585 + $0x30] sm:$0xff]
        %v2593 = vld [vmem:[%s2585 + $0x38] sm:$0xff]
        %v2594 = vld [vmem:[%s2585 + $0x40] sm:$0xff]
        %v2595 = vld [vmem:[%s2585 + $0x48] sm:$0xff]
        %v2596 = vld [vmem:[%s2585 + $0x50] sm:$0xff]
        %v2597 = vld [vmem:[%s2585 + $0x58] sm:$0xff]
        %v2598 = vld [vmem:[%s2585 + $0x60] sm:$0xff]
        %v2599 = vld [vmem:[%s2585 + $0x68] sm:$0xff]
        %v2600 = vld [vmem:[%s2585 + $0x70] sm:$0xff]
        %v2601 = vld [vmem:[%s2585 + $0x78] sm:$0xff]
        %v2602 = vld [vmem:[%s2585 + $0x80] sm:$0xff]
        %v2603 = vld [vmem:[%s2585 + $0x88] sm:$0xff]
        %v2604 = vld [vmem:[%s2585 + $0x90] sm:$0xff]
        %v2605 = vld [vmem:[%s2585 + $0x98] sm:$0xff]
        %v2606 = vld [vmem:[%s2585 + $0xa0] sm:$0xff]
        %v2607 = vld [vmem:[%s2585 + $0xa8] sm:$0xff]
        %v2608 = vld [vmem:[%s2585 + $0xb0] sm:$0xff]
        %v2609 = vld [vmem:[%s2585 + $0xb8] sm:$0xff]
        %v2610 = vld [vmem:[%s2585 + $0xc0] sm:$0xff]
        %v2611 = vld [vmem:[%s2585 + $0xc8] sm:$0xff]
        %v2612 = vld [vmem:[%s2585 + $0xd0] sm:$0xff]
        %v2613 = vld [vmem:[%s2585 + $0xd8] sm:$0xff]
        %v2614 = vld [vmem:[%s2585 + $0xe0] sm:$0xff]
        %v2615 = vld [vmem:[%s2585 + $0xe8] sm:$0xff]
        %v2616 = vld [vmem:[%s2585 + $0xf0] sm:$0xff]
        %v2617 = vld [vmem:[%s2585 + $0xf8] sm:$0xff]
        %v2650 = vunpack.c.l.b16 %v2586
        %v2651 = vunpack.c.h.b16 %v2586
        %v2652 = vunpack.c.l.b16 %v2587
        %v2653 = vunpack.c.h.b16 %v2587
        %v2654 = vunpack.c.l.b16 %v2588
        %v2655 = vunpack.c.h.b16 %v2588
        %v2656 = vunpack.c.l.b16 %v2589
        %v2657 = vunpack.c.h.b16 %v2589
        %v2658 = vunpack.c.l.b16 %v2590
        %v2659 = vunpack.c.h.b16 %v2590
        %v2660 = vunpack.c.l.b16 %v2591
        %v2661 = vunpack.c.h.b16 %v2591
        %v2662 = vunpack.c.l.b16 %v2592
        %v2663 = vunpack.c.h.b16 %v2592
        %v2664 = vunpack.c.l.b16 %v2593
        %v2665 = vunpack.c.h.b16 %v2593
        %v2666 = vunpack.c.l.b16 %v2594
        %v2667 = vunpack.c.h.b16 %v2594
        %v2668 = vunpack.c.l.b16 %v2595
        %v2669 = vunpack.c.h.b16 %v2595
        %v2670 = vunpack.c.l.b16 %v2596
        %v2671 = vunpack.c.h.b16 %v2596
        %v2672 = vunpack.c.l.b16 %v2597
        %v2673 = vunpack.c.h.b16 %v2597
        %v2674 = vunpack.c.l.b16 %v2598
        %v2675 = vunpack.c.h.b16 %v2598
        %v2676 = vunpack.c.l.b16 %v2599
        %v2677 = vunpack.c.h.b16 %v2599
        %v2678 = vunpack.c.l.b16 %v2600
        %v2679 = vunpack.c.h.b16 %v2600
        %v2680 = vunpack.c.l.b16 %v2601
        %v2681 = vunpack.c.h.b16 %v2601
        %v2682 = vunpack.c.l.b16 %v2602
        %v2683 = vunpack.c.h.b16 %v2602
        %v2684 = vunpack.c.l.b16 %v2603
        %v2685 = vunpack.c.h.b16 %v2603
        %v2686 = vunpack.c.l.b16 %v2604
        %v2687 = vunpack.c.h.b16 %v2604
        %v2688 = vunpack.c.l.b16 %v2605
        %v2689 = vunpack.c.h.b16 %v2605
        %v2690 = vunpack.c.l.b16 %v2606
        %v2691 = vunpack.c.h.b16 %v2606
        %v2692 = vunpack.c.l.b16 %v2607
        %v2693 = vunpack.c.h.b16 %v2607
        %v2694 = vunpack.c.l.b16 %v2608
        %v2695 = vunpack.c.h.b16 %v2608
        %v2696 = vunpack.c.l.b16 %v2609
        %v2697 = vunpack.c.h.b16 %v2609
        %v2698 = vunpack.c.l.b16 %v2610
        %v2699 = vunpack.c.h.b16 %v2610
        %v2700 = vunpack.c.l.b16 %v2611
        %v2701 = vunpack.c.h.b16 %v2611
        %v2702 = vunpack.c.l.b16 %v2612
        %v2703 = vunpack.c.h.b16 %v2612
        %v2704 = vunpack.c.l.b16 %v2613
        %v2705 = vunpack.c.h.b16 %v2613
        %v2706 = vunpack.c.l.b16 %v2614
        %v2707 = vunpack.c.h.b16 %v2614
        %v2708 = vunpack.c.l.b16 %v2615
        %v2709 = vunpack.c.h.b16 %v2615
        %v2710 = vunpack.c.l.b16 %v2616
        %v2711 = vunpack.c.h.b16 %v2616
        %v2712 = vunpack.c.l.b16 %v2617
        %v2713 = vunpack.c.h.b16 %v2617
        %v2714 = vpack.c.b16 %v2652, %v2650
        %v2715 = vpack.c.b16 %v2653, %v2651
        %v2716 = vpack.c.b16 %v2656, %v2654
        %v2717 = vpack.c.b16 %v2657, %v2655
        %v2718 = vpack.c.b16 %v2660, %v2658
        %v2719 = vpack.c.b16 %v2661, %v2659
        %v2720 = vpack.c.b16 %v2664, %v2662
        %v2721 = vpack.c.b16 %v2665, %v2663
        %v2722 = vpack.c.b16 %v2668, %v2666
        %v2723 = vpack.c.b16 %v2669, %v2667
        %v2724 = vpack.c.b16 %v2672, %v2670
        %v2725 = vpack.c.b16 %v2673, %v2671
        %v2726 = vpack.c.b16 %v2676, %v2674
        %v2727 = vpack.c.b16 %v2677, %v2675
        %v2728 = vpack.c.b16 %v2680, %v2678
        %v2729 = vpack.c.b16 %v2681, %v2679
        %v2730 = vpack.c.b16 %v2684, %v2682
        %v2731 = vpack.c.b16 %v2685, %v2683
        %v2732 = vpack.c.b16 %v2688, %v2686
        %v2733 = vpack.c.b16 %v2689, %v2687
        %v2734 = vpack.c.b16 %v2692, %v2690
        %v2735 = vpack.c.b16 %v2693, %v2691
        %v2736 = vpack.c.b16 %v2696, %v2694
        %v2737 = vpack.c.b16 %v2697, %v2695
        %v2738 = vpack.c.b16 %v2700, %v2698
        %v2739 = vpack.c.b16 %v2701, %v2699
        %v2740 = vpack.c.b16 %v2704, %v2702
        %v2741 = vpack.c.b16 %v2705, %v2703
        %v2742 = vpack.c.b16 %v2708, %v2706
        %v2743 = vpack.c.b16 %v2709, %v2707
        %v2744 = vpack.c.b16 %v2712, %v2710
        %v2745 = vpack.c.b16 %v2713, %v2711
        %2778 = vmatpush.bf16.msra.mxu0 %v2728
        %2779 = vmatpush.bf16.msra.mxu0 %v2726
        %2780 = vmatpush.bf16.msra.mxu0 %v2724
        %2781 = vmatpush.bf16.msra.mxu0 %v2722
        %2782 = vmatpush.bf16.msra.mxu0 %v2720
        %2783 = vmatpush.bf16.msra.mxu0 %v2718
        %2784 = vmatpush.bf16.msra.mxu0 %v2716
        %2785 = vmatpush.bf16.msra.mxu0 %v2714
        %2786 = vmatmul.bf16.gmra.mxu0 %v585
        %v2787 = vpop.f32.mrf.mxu0
        %v2788 = vadd.f32 0.0, %v2787
        %v2789 = vpop.f32.mrf.mxu0
        %2790 = vdwg.mxu0
        %2791 = vmatpush.bf16.msra.mxu0 %v2744
        %2792 = vmatpush.bf16.msra.mxu0 %v2742
        %2793 = vmatpush.bf16.msra.mxu0 %v2740
        %2794 = vmatpush.bf16.msra.mxu0 %v2738
        %2795 = vmatpush.bf16.msra.mxu0 %v2736
        %2796 = vmatpush.bf16.msra.mxu0 %v2734
        %2797 = vmatpush.bf16.msra.mxu0 %v2732
        %2798 = vmatpush.bf16.msra.mxu0 %v2730
        %2799 = vmatmul.bf16.gmra.mxu0 %v586
        %v2800 = vpop.f32.mrf.mxu0
        %v2801 = vadd.f32 %v2788, %v2800
        %v2802 = vpop.f32.mrf.mxu0
        %2803 = vdwg.mxu0
        %2804 = vmatpush.bf16.msra.mxu0 %v2729
        %2805 = vmatpush.bf16.msra.mxu0 %v2727
        %2806 = vmatpush.bf16.msra.mxu0 %v2725
        %2807 = vmatpush.bf16.msra.mxu0 %v2723
        %2808 = vmatpush.bf16.msra.mxu0 %v2721
        %2809 = vmatpush.bf16.msra.mxu0 %v2719
        %2810 = vmatpush.bf16.msra.mxu0 %v2717
        %2811 = vmatpush.bf16.msra.mxu0 %v2715
        %2812 = vmatmul.bf16.gmra.mxu0 %v585
        %v2813 = vpop.f32.mrf.mxu0
        %v2814 = vadd.f32 0.0, %v2813
        %v2815 = vpop.f32.mrf.mxu0
        %2816 = vdwg.mxu0
        %2817 = vmatpush.bf16.msra.mxu0 %v2745
        %2818 = vmatpush.bf16.msra.mxu0 %v2743
        %2819 = vmatpush.bf16.msra.mxu0 %v2741
        %2820 = vmatpush.bf16.msra.mxu0 %v2739
        %2821 = vmatpush.bf16.msra.mxu0 %v2737
        %2822 = vmatpush.bf16.msra.mxu0 %v2735
        %2823 = vmatpush.bf16.msra.mxu0 %v2733
        %2824 = vmatpush.bf16.msra.mxu0 %v2731
        %2825 = vmatmul.bf16.gmra.mxu0 %v586
        %v2826 = vpop.f32.mrf.mxu0
        %v2827 = vadd.f32 %v2814, %v2826
        %v2828 = vpop.f32.mrf.mxu0
        %2829 = vdwg.mxu0
        %v2830 = vpack.c.bf16 %v2801, %v2801
        %v2831 = vpack.c.bf16 %v2827, %v2827
        %s2832 = scalar_lea.vmem [#allocation4], 28
        %v2833 = vld [vmem:[%s2832] sm:$0xf]
        %v2835 = vsel %vm1083, %v2833, 0
        %v2838 = vsel %vm1087, %v2830, 0
        %v2841 = vsel %vm1087, %v2831, 0
        %2843 = vmatpush.bf16.msra.mxu0 0
        %2844 = vmatpush.bf16.msra.mxu0 0
        %2845 = vmatpush.bf16.msra.mxu0 0
        %2846 = vmatpush.bf16.msra.mxu0 0
        %2847 = vmatpush.bf16.msra.mxu0 0
        %2848 = vmatpush.bf16.msra.mxu0 0
        %2849 = vmatpush.bf16.msra.mxu0 0
        %2850 = vmatpush.bf16.msra.mxu0 %v2838
        %2851 = vmatmul.bf16.gmra.mxu0 %v2835
        %v2852 = vpop.f32.mrf.mxu0
        %v2853 = vadd.f32 0.0, %v2852
        %v2854 = vpop.f32.mrf.mxu0
        %2855 = vdwg.mxu0
        %2856 = vmatpush.bf16.msra.mxu0 0
        %2857 = vmatpush.bf16.msra.mxu0 0
        %2858 = vmatpush.bf16.msra.mxu0 0
        %2859 = vmatpush.bf16.msra.mxu0 0
        %2860 = vmatpush.bf16.msra.mxu0 0
        %2861 = vmatpush.bf16.msra.mxu0 0
        %2862 = vmatpush.bf16.msra.mxu0 0
        %2863 = vmatpush.bf16.msra.mxu0 %v2841
        %2864 = vmatmul.bf16.gmra.mxu0 %v2835
        %v2865 = vpop.f32.mrf.mxu0
        %v2866 = vadd.f32 0.0, %v2865
        %v2867 = vpop.f32.mrf.mxu0
        %2868 = vdwg.mxu0
        %v2869 = vadd.f32 %v2583, %v2853
        %v2870 = vadd.f32 %v2584, %v2866
        %s2871 = scalar_lea.vmem [#allocation2], 2048
        %v2872 = vld [vmem:[%s2871] sm:$0xff]
        %v2873 = vld [vmem:[%s2871 + $0x8] sm:$0xff]
        %v2874 = vld [vmem:[%s2871 + $0x10] sm:$0xff]
        %v2875 = vld [vmem:[%s2871 + $0x18] sm:$0xff]
        %v2876 = vld [vmem:[%s2871 + $0x20] sm:$0xff]
        %v2877 = vld [vmem:[%s2871 + $0x28] sm:$0xff]
        %v2878 = vld [vmem:[%s2871 + $0x30] sm:$0xff]
        %v2879 = vld [vmem:[%s2871 + $0x38] sm:$0xff]
        %v2880 = vld [vmem:[%s2871 + $0x40] sm:$0xff]
        %v2881 = vld [vmem:[%s2871 + $0x48] sm:$0xff]
        %v2882 = vld [vmem:[%s2871 + $0x50] sm:$0xff]
        %v2883 = vld [vmem:[%s2871 + $0x58] sm:$0xff]
        %v2884 = vld [vmem:[%s2871 + $0x60] sm:$0xff]
        %v2885 = vld [vmem:[%s2871 + $0x68] sm:$0xff]
        %v2886 = vld [vmem:[%s2871 + $0x70] sm:$0xff]
        %v2887 = vld [vmem:[%s2871 + $0x78] sm:$0xff]
        %v2888 = vld [vmem:[%s2871 + $0x80] sm:$0xff]
        %v2889 = vld [vmem:[%s2871 + $0x88] sm:$0xff]
        %v2890 = vld [vmem:[%s2871 + $0x90] sm:$0xff]
        %v2891 = vld [vmem:[%s2871 + $0x98] sm:$0xff]
        %v2892 = vld [vmem:[%s2871 + $0xa0] sm:$0xff]
        %v2893 = vld [vmem:[%s2871 + $0xa8] sm:$0xff]
        %v2894 = vld [vmem:[%s2871 + $0xb0] sm:$0xff]
        %v2895 = vld [vmem:[%s2871 + $0xb8] sm:$0xff]
        %v2896 = vld [vmem:[%s2871 + $0xc0] sm:$0xff]
        %v2897 = vld [vmem:[%s2871 + $0xc8] sm:$0xff]
        %v2898 = vld [vmem:[%s2871 + $0xd0] sm:$0xff]
        %v2899 = vld [vmem:[%s2871 + $0xd8] sm:$0xff]
        %v2900 = vld [vmem:[%s2871 + $0xe0] sm:$0xff]
        %v2901 = vld [vmem:[%s2871 + $0xe8] sm:$0xff]
        %v2902 = vld [vmem:[%s2871 + $0xf0] sm:$0xff]
        %v2903 = vld [vmem:[%s2871 + $0xf8] sm:$0xff]
        %v2936 = vunpack.c.l.b16 %v2872
        %v2937 = vunpack.c.h.b16 %v2872
        %v2938 = vunpack.c.l.b16 %v2873
        %v2939 = vunpack.c.h.b16 %v2873
        %v2940 = vunpack.c.l.b16 %v2874
        %v2941 = vunpack.c.h.b16 %v2874
        %v2942 = vunpack.c.l.b16 %v2875
        %v2943 = vunpack.c.h.b16 %v2875
        %v2944 = vunpack.c.l.b16 %v2876
        %v2945 = vunpack.c.h.b16 %v2876
        %v2946 = vunpack.c.l.b16 %v2877
        %v2947 = vunpack.c.h.b16 %v2877
        %v2948 = vunpack.c.l.b16 %v2878
        %v2949 = vunpack.c.h.b16 %v2878
        %v2950 = vunpack.c.l.b16 %v2879
        %v2951 = vunpack.c.h.b16 %v2879
        %v2952 = vunpack.c.l.b16 %v2880
        %v2953 = vunpack.c.h.b16 %v2880
        %v2954 = vunpack.c.l.b16 %v2881
        %v2955 = vunpack.c.h.b16 %v2881
        %v2956 = vunpack.c.l.b16 %v2882
        %v2957 = vunpack.c.h.b16 %v2882
        %v2958 = vunpack.c.l.b16 %v2883
        %v2959 = vunpack.c.h.b16 %v2883
        %v2960 = vunpack.c.l.b16 %v2884
        %v2961 = vunpack.c.h.b16 %v2884
        %v2962 = vunpack.c.l.b16 %v2885
        %v2963 = vunpack.c.h.b16 %v2885
        %v2964 = vunpack.c.l.b16 %v2886
        %v2965 = vunpack.c.h.b16 %v2886
        %v2966 = vunpack.c.l.b16 %v2887
        %v2967 = vunpack.c.h.b16 %v2887
        %v2968 = vunpack.c.l.b16 %v2888
        %v2969 = vunpack.c.h.b16 %v2888
        %v2970 = vunpack.c.l.b16 %v2889
        %v2971 = vunpack.c.h.b16 %v2889
        %v2972 = vunpack.c.l.b16 %v2890
        %v2973 = vunpack.c.h.b16 %v2890
        %v2974 = vunpack.c.l.b16 %v2891
        %v2975 = vunpack.c.h.b16 %v2891
        %v2976 = vunpack.c.l.b16 %v2892
        %v2977 = vunpack.c.h.b16 %v2892
        %v2978 = vunpack.c.l.b16 %v2893
        %v2979 = vunpack.c.h.b16 %v2893
        %v2980 = vunpack.c.l.b16 %v2894
        %v2981 = vunpack.c.h.b16 %v2894
        %v2982 = vunpack.c.l.b16 %v2895
        %v2983 = vunpack.c.h.b16 %v2895
        %v2984 = vunpack.c.l.b16 %v2896
        %v2985 = vunpack.c.h.b16 %v2896
        %v2986 = vunpack.c.l.b16 %v2897
        %v2987 = vunpack.c.h.b16 %v2897
        %v2988 = vunpack.c.l.b16 %v2898
        %v2989 = vunpack.c.h.b16 %v2898
        %v2990 = vunpack.c.l.b16 %v2899
        %v2991 = vunpack.c.h.b16 %v2899
        %v2992 = vunpack.c.l.b16 %v2900
        %v2993 = vunpack.c.h.b16 %v2900
        %v2994 = vunpack.c.l.b16 %v2901
        %v2995 = vunpack.c.h.b16 %v2901
        %v2996 = vunpack.c.l.b16 %v2902
        %v2997 = vunpack.c.h.b16 %v2902
        %v2998 = vunpack.c.l.b16 %v2903
        %v2999 = vunpack.c.h.b16 %v2903
        %v3000 = vpack.c.b16 %v2938, %v2936
        %v3001 = vpack.c.b16 %v2939, %v2937
        %v3002 = vpack.c.b16 %v2942, %v2940
        %v3003 = vpack.c.b16 %v2943, %v2941
        %v3004 = vpack.c.b16 %v2946, %v2944
        %v3005 = vpack.c.b16 %v2947, %v2945
        %v3006 = vpack.c.b16 %v2950, %v2948
        %v3007 = vpack.c.b16 %v2951, %v2949
        %v3008 = vpack.c.b16 %v2954, %v2952
        %v3009 = vpack.c.b16 %v2955, %v2953
        %v3010 = vpack.c.b16 %v2958, %v2956
        %v3011 = vpack.c.b16 %v2959, %v2957
        %v3012 = vpack.c.b16 %v2962, %v2960
        %v3013 = vpack.c.b16 %v2963, %v2961
        %v3014 = vpack.c.b16 %v2966, %v2964
        %v3015 = vpack.c.b16 %v2967, %v2965
        %v3016 = vpack.c.b16 %v2970, %v2968
        %v3017 = vpack.c.b16 %v2971, %v2969
        %v3018 = vpack.c.b16 %v2974, %v2972
        %v3019 = vpack.c.b16 %v2975, %v2973
        %v3020 = vpack.c.b16 %v2978, %v2976
        %v3021 = vpack.c.b16 %v2979, %v2977
        %v3022 = vpack.c.b16 %v2982, %v2980
        %v3023 = vpack.c.b16 %v2983, %v2981
        %v3024 = vpack.c.b16 %v2986, %v2984
        %v3025 = vpack.c.b16 %v2987, %v2985
        %v3026 = vpack.c.b16 %v2990, %v2988
        %v3027 = vpack.c.b16 %v2991, %v2989
        %v3028 = vpack.c.b16 %v2994, %v2992
        %v3029 = vpack.c.b16 %v2995, %v2993
        %v3030 = vpack.c.b16 %v2998, %v2996
        %v3031 = vpack.c.b16 %v2999, %v2997
        %3064 = vmatpush.bf16.msra.mxu0 %v3014
        %3065 = vmatpush.bf16.msra.mxu0 %v3012
        %3066 = vmatpush.bf16.msra.mxu0 %v3010
        %3067 = vmatpush.bf16.msra.mxu0 %v3008
        %3068 = vmatpush.bf16.msra.mxu0 %v3006
        %3069 = vmatpush.bf16.msra.mxu0 %v3004
        %3070 = vmatpush.bf16.msra.mxu0 %v3002
        %3071 = vmatpush.bf16.msra.mxu0 %v3000
        %3072 = vmatmul.bf16.gmra.mxu0 %v585
        %v3073 = vpop.f32.mrf.mxu0
        %v3074 = vadd.f32 0.0, %v3073
        %v3075 = vpop.f32.mrf.mxu0
        %3076 = vdwg.mxu0
        %3077 = vmatpush.bf16.msra.mxu0 %v3030
        %3078 = vmatpush.bf16.msra.mxu0 %v3028
        %3079 = vmatpush.bf16.msra.mxu0 %v3026
        %3080 = vmatpush.bf16.msra.mxu0 %v3024
        %3081 = vmatpush.bf16.msra.mxu0 %v3022
        %3082 = vmatpush.bf16.msra.mxu0 %v3020
        %3083 = vmatpush.bf16.msra.mxu0 %v3018
        %3084 = vmatpush.bf16.msra.mxu0 %v3016
        %3085 = vmatmul.bf16.gmra.mxu0 %v586
        %v3086 = vpop.f32.mrf.mxu0
        %v3087 = vadd.f32 %v3074, %v3086
        %v3088 = vpop.f32.mrf.mxu0
        %3089 = vdwg.mxu0
        %3090 = vmatpush.bf16.msra.mxu0 %v3015
        %3091 = vmatpush.bf16.msra.mxu0 %v3013
        %3092 = vmatpush.bf16.msra.mxu0 %v3011
        %3093 = vmatpush.bf16.msra.mxu0 %v3009
        %3094 = vmatpush.bf16.msra.mxu0 %v3007
        %3095 = vmatpush.bf16.msra.mxu0 %v3005
        %3096 = vmatpush.bf16.msra.mxu0 %v3003
        %3097 = vmatpush.bf16.msra.mxu0 %v3001
        %3098 = vmatmul.bf16.gmra.mxu0 %v585
        %v3099 = vpop.f32.mrf.mxu0
        %v3100 = vadd.f32 0.0, %v3099
        %v3101 = vpop.f32.mrf.mxu0
        %3102 = vdwg.mxu0
        %3103 = vmatpush.bf16.msra.mxu0 %v3031
        %3104 = vmatpush.bf16.msra.mxu0 %v3029
        %3105 = vmatpush.bf16.msra.mxu0 %v3027
        %3106 = vmatpush.bf16.msra.mxu0 %v3025
        %3107 = vmatpush.bf16.msra.mxu0 %v3023
        %3108 = vmatpush.bf16.msra.mxu0 %v3021
        %3109 = vmatpush.bf16.msra.mxu0 %v3019
        %3110 = vmatpush.bf16.msra.mxu0 %v3017
        %3111 = vmatmul.bf16.gmra.mxu0 %v586
        %v3112 = vpop.f32.mrf.mxu0
        %v3113 = vadd.f32 %v3100, %v3112
        %v3114 = vpop.f32.mrf.mxu0
        %3115 = vdwg.mxu0
        %v3116 = vpack.c.bf16 %v3087, %v3087
        %v3117 = vpack.c.bf16 %v3113, %v3113
        %s3118 = scalar_lea.vmem [#allocation4], 32
        %v3119 = vld [vmem:[%s3118] sm:$0xf]
        %v3121 = vsel %vm1083, %v3119, 0
        %v3124 = vsel %vm1087, %v3116, 0
        %v3127 = vsel %vm1087, %v3117, 0
        %3129 = vmatpush.bf16.msra.mxu0 0
        %3130 = vmatpush.bf16.msra.mxu0 0
        %3131 = vmatpush.bf16.msra.mxu0 0
        %3132 = vmatpush.bf16.msra.mxu0 0
        %3133 = vmatpush.bf16.msra.mxu0 0
        %3134 = vmatpush.bf16.msra.mxu0 0
        %3135 = vmatpush.bf16.msra.mxu0 0
        %3136 = vmatpush.bf16.msra.mxu0 %v3124
        %3137 = vmatmul.bf16.gmra.mxu0 %v3121
        %v3138 = vpop.f32.mrf.mxu0
        %v3139 = vadd.f32 0.0, %v3138
        %v3140 = vpop.f32.mrf.mxu0
        %3141 = vdwg.mxu0
        %3142 = vmatpush.bf16.msra.mxu0 0
        %3143 = vmatpush.bf16.msra.mxu0 0
        %3144 = vmatpush.bf16.msra.mxu0 0
        %3145 = vmatpush.bf16.msra.mxu0 0
        %3146 = vmatpush.bf16.msra.mxu0 0
        %3147 = vmatpush.bf16.msra.mxu0 0
        %3148 = vmatpush.bf16.msra.mxu0 0
        %3149 = vmatpush.bf16.msra.mxu0 %v3127
        %3150 = vmatmul.bf16.gmra.mxu0 %v3121
        %v3151 = vpop.f32.mrf.mxu0
        %v3152 = vadd.f32 0.0, %v3151
        %v3153 = vpop.f32.mrf.mxu0
        %3154 = vdwg.mxu0
        %v3155 = vadd.f32 %v2869, %v3139
        %v3156 = vadd.f32 %v2870, %v3152
        %v3157 = vld [vmem:[#allocation6] sm:$0xff]
        %3159 = vset.pattern.permute.xlu0 0
        %3160 = vperm.xlu0 %3159, %v3157
        %v3161 = vpop.permute.xlu0 %3160
        %v3163 = vadd.f32 %v3155, %v3161
        %v3164 = vadd.f32 %v3156, %v3161
        %v3165 = vxor.u32 %v3163, 2147483648
        %v3166 = vxor.u32 %v3164, 2147483648
        %v3167 = vmul.f32 %v3165, 1.442695
        %v3168 = vpow.pop %v3167
        %v3169 = vmul.f32 %v3166, 1.442695
        %v3170 = vpow.pop %v3169
        %v3171 = vadd.f32 %v3168, 1.0
        %v3172 = vadd.f32 %v3170, 1.0
        %v3173 = vrcp.pop %v3171
        %v3174 = vmul.f32 %v3171, %v3173
        %v3175 = vsub.f32 1.0, %v3174
        %v3176 = vmul.f32 %v3173, %v3175
        %v3177 = vadd.f32 %v3173, %v3176
        %vm3178 = vweird.f32 %v3171
        %vm3179 = vweird.f32 %v3173
        %vm3180 = vmor %vm3178, %vm3179
        %v3181 = vsel %vm3180, %v3173, %v3177
        %v3182 = vand.u32 2147483647, %v3171
        %vm3183 = vcmp.eq.f32.partialorder %v3182, 8.507059e+37
        %v3184 = vand.u32 %v3171, 2147483648
        %v3185 = vor.u32 1.1754944e-38, %v3184
        %v3186 = vsel %vm3183, %v3185, %v3181
        %v3187 = vmul.f32 1.0, %v3186
        %v3188 = vrcp.pop %v3172
        %v3189 = vmul.f32 %v3172, %v3188
        %v3190 = vsub.f32 1.0, %v3189
        %v3191 = vmul.f32 %v3188, %v3190
        %v3192 = vadd.f32 %v3188, %v3191
        %vm3193 = vweird.f32 %v3172
        %vm3194 = vweird.f32 %v3188
        %vm3195 = vmor %vm3193, %vm3194
        %v3196 = vsel %vm3195, %v3188, %v3192
        %v3197 = vand.u32 2147483647, %v3172
        %vm3198 = vcmp.eq.f32.partialorder %v3197, 8.507059e+37
        %v3199 = vand.u32 %v3172, 2147483648
        %v3200 = vor.u32 1.1754944e-38, %v3199
        %v3201 = vsel %vm3198, %v3200, %v3196
        %v3202 = vmul.f32 1.0, %v3201
        %v3203 = vmul.f32 %v3163, %v3187
        %v3204 = vmul.f32 %v3164, %v3202
        %v3205 = vpack.c.bf16 %v3203, %v3203
        %v3206 = vpack.c.bf16 %v3204, %v3204
        %3207 = vmatpush.bf16.msra.mxu0 %v729
        %3208 = vmatpush.bf16.msra.mxu0 %v727
        %3209 = vmatpush.bf16.msra.mxu0 %v725
        %3210 = vmatpush.bf16.msra.mxu0 %v723
        %3211 = vmatpush.bf16.msra.mxu0 %v721
        %3212 = vmatpush.bf16.msra.mxu0 %v719
        %3213 = vmatpush.bf16.msra.mxu0 %v717
        %3214 = vmatpush.bf16.msra.mxu0 %v715
        %3215 = vmatmul.bf16.gmra.mxu0 %v3205
        %v3216 = vpop.f32.mrf.mxu0
        %v3217 = vadd.f32 0.0, %v3216
        %v3218 = vpop.f32.mrf.mxu0
        %3219 = vdwg.mxu0
        %3220 = vmatpush.bf16.msra.mxu0 %v745
        %3221 = vmatpush.bf16.msra.mxu0 %v743
        %3222 = vmatpush.bf16.msra.mxu0 %v741
        %3223 = vmatpush.bf16.msra.mxu0 %v739
        %3224 = vmatpush.bf16.msra.mxu0 %v737
        %3225 = vmatpush.bf16.msra.mxu0 %v735
        %3226 = vmatpush.bf16.msra.mxu0 %v733
        %3227 = vmatpush.bf16.msra.mxu0 %v731
        %3228 = vmatmul.bf16.gmra.mxu0 %v3206
        %v3229 = vpop.f32.mrf.mxu0
        %v3230 = vadd.f32 %v3217, %v3229
        %v3231 = vpop.f32.mrf.mxu0
        %3232 = vdwg.mxu0
        %3233 = vmatpush.bf16.msra.mxu0 %v730
        %3234 = vmatpush.bf16.msra.mxu0 %v728
        %3235 = vmatpush.bf16.msra.mxu0 %v726
        %3236 = vmatpush.bf16.msra.mxu0 %v724
        %3237 = vmatpush.bf16.msra.mxu0 %v722
        %3238 = vmatpush.bf16.msra.mxu0 %v720
        %3239 = vmatpush.bf16.msra.mxu0 %v718
        %3240 = vmatpush.bf16.msra.mxu0 %v716
        %3241 = vmatmul.bf16.gmra.mxu0 %v3205
        %v3242 = vpop.f32.mrf.mxu0
        %v3243 = vadd.f32 0.0, %v3242
        %v3244 = vpop.f32.mrf.mxu0
        %3245 = vdwg.mxu0
        %3246 = vmatpush.bf16.msra.mxu0 %v746
        %3247 = vmatpush.bf16.msra.mxu0 %v744
        %3248 = vmatpush.bf16.msra.mxu0 %v742
        %3249 = vmatpush.bf16.msra.mxu0 %v740
        %3250 = vmatpush.bf16.msra.mxu0 %v738
        %3251 = vmatpush.bf16.msra.mxu0 %v736
        %3252 = vmatpush.bf16.msra.mxu0 %v734
        %3253 = vmatpush.bf16.msra.mxu0 %v732
        %3254 = vmatmul.bf16.gmra.mxu0 %v3206
        %v3255 = vpop.f32.mrf.mxu0
        %v3256 = vadd.f32 %v3243, %v3255
        %v3257 = vpop.f32.mrf.mxu0
        %3258 = vdwg.mxu0
        %v3259 = vpack.c.bf16 %v3230, %v3230
        %v3260 = vpack.c.bf16 %v3256, %v3256
        %v3261 = vld [vmem:[#allocation7] sm:$0xf]
        %3262 = vmatpush.bf16.msra.mxu0 %v977
        %3263 = vmatpush.bf16.msra.mxu0 %v975
        %3264 = vmatpush.bf16.msra.mxu0 %v973
        %3265 = vmatpush.bf16.msra.mxu0 %v971
        %3266 = vmatpush.bf16.msra.mxu0 %v969
        %3267 = vmatpush.bf16.msra.mxu0 %v967
        %3268 = vmatpush.bf16.msra.mxu0 %v965
        %3269 = vmatpush.bf16.msra.mxu0 %v963
        %3270 = vmatmul.bf16.gmra.mxu0 %v3205
        %v3271 = vpop.f32.mrf.mxu0
        %v3272 = vadd.f32 0.0, %v3271
        %v3273 = vpop.f32.mrf.mxu0
        %3274 = vdwg.mxu0
        %3275 = vmatpush.bf16.msra.mxu0 %v993
        %3276 = vmatpush.bf16.msra.mxu0 %v991
        %3277 = vmatpush.bf16.msra.mxu0 %v989
        %3278 = vmatpush.bf16.msra.mxu0 %v987
        %3279 = vmatpush.bf16.msra.mxu0 %v985
        %3280 = vmatpush.bf16.msra.mxu0 %v983
        %3281 = vmatpush.bf16.msra.mxu0 %v981
        %3282 = vmatpush.bf16.msra.mxu0 %v979
        %3283 = vmatmul.bf16.gmra.mxu0 %v3206
        %v3284 = vpop.f32.mrf.mxu0
        %v3285 = vadd.f32 %v3272, %v3284
        %v3286 = vpop.f32.mrf.mxu0
        %3287 = vdwg.mxu0
        %3288 = vmatpush.bf16.msra.mxu0 %v978
        %3289 = vmatpush.bf16.msra.mxu0 %v976
        %3290 = vmatpush.bf16.msra.mxu0 %v974
        %3291 = vmatpush.bf16.msra.mxu0 %v972
        %3292 = vmatpush.bf16.msra.mxu0 %v970
        %3293 = vmatpush.bf16.msra.mxu0 %v968
        %3294 = vmatpush.bf16.msra.mxu0 %v966
        %3295 = vmatpush.bf16.msra.mxu0 %v964
        %3296 = vmatmul.bf16.gmra.mxu0 %v3205
        %v3297 = vpop.f32.mrf.mxu0
        %v3298 = vadd.f32 0.0, %v3297
        %v3299 = vpop.f32.mrf.mxu0
        %3300 = vdwg.mxu0
        %3301 = vmatpush.bf16.msra.mxu0 %v994
        %3302 = vmatpush.bf16.msra.mxu0 %v992
        %3303 = vmatpush.bf16.msra.mxu0 %v990
        %3304 = vmatpush.bf16.msra.mxu0 %v988
        %3305 = vmatpush.bf16.msra.mxu0 %v986
        %3306 = vmatpush.bf16.msra.mxu0 %v984
        %3307 = vmatpush.bf16.msra.mxu0 %v982
        %3308 = vmatpush.bf16.msra.mxu0 %v980
        %3309 = vmatmul.bf16.gmra.mxu0 %v3206
        %v3310 = vpop.f32.mrf.mxu0
        %v3311 = vadd.f32 %v3298, %v3310
        %v3312 = vpop.f32.mrf.mxu0
        %3313 = vdwg.mxu0
        %v3314 = vpack.c.bf16 %v3285, %v3285
        %v3315 = vpack.c.bf16 %v3311, %v3311
        %s3316 = scalar_lea.vmem [#allocation7], 4
        %v3317 = vld [vmem:[%s3316] sm:$0xf]
        %v3319 = vsel %vm1083, %v3317, 0
        %v3322 = vsel %vm1087, %v3314, 0
        %v3325 = vsel %vm1087, %v3315, 0
        %3327 = vmatpush.bf16.msra.mxu0 0
        %3328 = vmatpush.bf16.msra.mxu0 0
        %3329 = vmatpush.bf16.msra.mxu0 0
        %3330 = vmatpush.bf16.msra.mxu0 0
        %3331 = vmatpush.bf16.msra.mxu0 0
        %3332 = vmatpush.bf16.msra.mxu0 0
        %3333 = vmatpush.bf16.msra.mxu0 0
        %3334 = vmatpush.bf16.msra.mxu0 %v3322
        %3335 = vmatmul.bf16.gmra.mxu0 %v3319
        %v3336 = vpop.f32.mrf.mxu0
        %v3337 = vadd.f32 0.0, %v3336
        %v3338 = vpop.f32.mrf.mxu0
        %3339 = vdwg.mxu0
        %3340 = vmatpush.bf16.msra.mxu0 0
        %3341 = vmatpush.bf16.msra.mxu0 0
        %3342 = vmatpush.bf16.msra.mxu0 0
        %3343 = vmatpush.bf16.msra.mxu0 0
        %3344 = vmatpush.bf16.msra.mxu0 0
        %3345 = vmatpush.bf16.msra.mxu0 0
        %3346 = vmatpush.bf16.msra.mxu0 0
        %3347 = vmatpush.bf16.msra.mxu0 %v3325
        %3348 = vmatmul.bf16.gmra.mxu0 %v3319
        %v3349 = vpop.f32.mrf.mxu0
        %v3350 = vadd.f32 0.0, %v3349
        %v3351 = vpop.f32.mrf.mxu0
        %3352 = vdwg.mxu0
        %v3354 = vsel %vm1083, %v3261, 0
        %v3357 = vsel %vm1087, %v3259, 0
        %v3360 = vsel %vm1087, %v3260, 0
        %3362 = vmatpush.bf16.msra.mxu0 0
        %3363 = vmatpush.bf16.msra.mxu0 0
        %3364 = vmatpush.bf16.msra.mxu0 0
        %3365 = vmatpush.bf16.msra.mxu0 0
        %3366 = vmatpush.bf16.msra.mxu0 0
        %3367 = vmatpush.bf16.msra.mxu0 0
        %3368 = vmatpush.bf16.msra.mxu0 0
        %3369 = vmatpush.bf16.msra.mxu0 %v3357
        %3370 = vmatmul.bf16.gmra.mxu0 %v3354
        %v3371 = vpop.f32.mrf.mxu0
        %v3372 = vadd.f32 %v3337, %v3371
        %v3373 = vpop.f32.mrf.mxu0
        %3374 = vdwg.mxu0
        %3375 = vmatpush.bf16.msra.mxu0 0
        %3376 = vmatpush.bf16.msra.mxu0 0
        %3377 = vmatpush.bf16.msra.mxu0 0
        %3378 = vmatpush.bf16.msra.mxu0 0
        %3379 = vmatpush.bf16.msra.mxu0 0
        %3380 = vmatpush.bf16.msra.mxu0 0
        %3381 = vmatpush.bf16.msra.mxu0 0
        %3382 = vmatpush.bf16.msra.mxu0 %v3360
        %3383 = vmatmul.bf16.gmra.mxu0 %v3354
        %v3384 = vpop.f32.mrf.mxu0
        %v3385 = vadd.f32 %v3350, %v3384
        %v3386 = vpop.f32.mrf.mxu0
        %3387 = vdwg.mxu0
        %3388 = vmatpush.bf16.msra.mxu0 %v1298
        %3389 = vmatpush.bf16.msra.mxu0 %v1296
        %3390 = vmatpush.bf16.msra.mxu0 %v1294
        %3391 = vmatpush.bf16.msra.mxu0 %v1292
        %3392 = vmatpush.bf16.msra.mxu0 %v1290
        %3393 = vmatpush.bf16.msra.mxu0 %v1288
        %3394 = vmatpush.bf16.msra.mxu0 %v1286
        %3395 = vmatpush.bf16.msra.mxu0 %v1284
        %3396 = vmatmul.bf16.gmra.mxu0 %v3205
        %v3397 = vpop.f32.mrf.mxu0
        %v3398 = vadd.f32 0.0, %v3397
        %v3399 = vpop.f32.mrf.mxu0
        %3400 = vdwg.mxu0
        %3401 = vmatpush.bf16.msra.mxu0 %v1314
        %3402 = vmatpush.bf16.msra.mxu0 %v1312
        %3403 = vmatpush.bf16.msra.mxu0 %v1310
        %3404 = vmatpush.bf16.msra.mxu0 %v1308
        %3405 = vmatpush.bf16.msra.mxu0 %v1306
        %3406 = vmatpush.bf16.msra.mxu0 %v1304
        %3407 = vmatpush.bf16.msra.mxu0 %v1302
        %3408 = vmatpush.bf16.msra.mxu0 %v1300
        %3409 = vmatmul.bf16.gmra.mxu0 %v3206
        %v3410 = vpop.f32.mrf.mxu0
        %v3411 = vadd.f32 %v3398, %v3410
        %v3412 = vpop.f32.mrf.mxu0
        %3413 = vdwg.mxu0
        %3414 = vmatpush.bf16.msra.mxu0 %v1299
        %3415 = vmatpush.bf16.msra.mxu0 %v1297
        %3416 = vmatpush.bf16.msra.mxu0 %v1295
        %3417 = vmatpush.bf16.msra.mxu0 %v1293
        %3418 = vmatpush.bf16.msra.mxu0 %v1291
        %3419 = vmatpush.bf16.msra.mxu0 %v1289
        %3420 = vmatpush.bf16.msra.mxu0 %v1287
        %3421 = vmatpush.bf16.msra.mxu0 %v1285
        %3422 = vmatmul.bf16.gmra.mxu0 %v3205
        %v3423 = vpop.f32.mrf.mxu0
        %v3424 = vadd.f32 0.0, %v3423
        %v3425 = vpop.f32.mrf.mxu0
        %3426 = vdwg.mxu0
        %3427 = vmatpush.bf16.msra.mxu0 %v1315
        %3428 = vmatpush.bf16.msra.mxu0 %v1313
        %3429 = vmatpush.bf16.msra.mxu0 %v1311
        %3430 = vmatpush.bf16.msra.mxu0 %v1309
        %3431 = vmatpush.bf16.msra.mxu0 %v1307
        %3432 = vmatpush.bf16.msra.mxu0 %v1305
        %3433 = vmatpush.bf16.msra.mxu0 %v1303
        %3434 = vmatpush.bf16.msra.mxu0 %v1301
        %3435 = vmatmul.bf16.gmra.mxu0 %v3206
        %v3436 = vpop.f32.mrf.mxu0
        %v3437 = vadd.f32 %v3424, %v3436
        %v3438 = vpop.f32.mrf.mxu0
        %3439 = vdwg.mxu0
        %v3440 = vpack.c.bf16 %v3411, %v3411
        %v3441 = vpack.c.bf16 %v3437, %v3437
        %s3442 = scalar_lea.vmem [#allocation7], 8
        %v3443 = vld [vmem:[%s3442] sm:$0xf]
        %v3445 = vsel %vm1083, %v3443, 0
        %v3448 = vsel %vm1087, %v3440, 0
        %v3451 = vsel %vm1087, %v3441, 0
        %3453 = vmatpush.bf16.msra.mxu0 0
        %3454 = vmatpush.bf16.msra.mxu0 0
        %3455 = vmatpush.bf16.msra.mxu0 0
        %3456 = vmatpush.bf16.msra.mxu0 0
        %3457 = vmatpush.bf16.msra.mxu0 0
        %3458 = vmatpush.bf16.msra.mxu0 0
        %3459 = vmatpush.bf16.msra.mxu0 0
        %3460 = vmatpush.bf16.msra.mxu0 %v3448
        %3461 = vmatmul.bf16.gmra.mxu0 %v3445
        %v3462 = vpop.f32.mrf.mxu0
        %v3463 = vadd.f32 0.0, %v3462
        %v3464 = vpop.f32.mrf.mxu0
        %3465 = vdwg.mxu0
        %3466 = vmatpush.bf16.msra.mxu0 0
        %3467 = vmatpush.bf16.msra.mxu0 0
        %3468 = vmatpush.bf16.msra.mxu0 0
        %3469 = vmatpush.bf16.msra.mxu0 0
        %3470 = vmatpush.bf16.msra.mxu0 0
        %3471 = vmatpush.bf16.msra.mxu0 0
        %3472 = vmatpush.bf16.msra.mxu0 0
        %3473 = vmatpush.bf16.msra.mxu0 %v3451
        %3474 = vmatmul.bf16.gmra.mxu0 %v3445
        %v3475 = vpop.f32.mrf.mxu0
        %v3476 = vadd.f32 0.0, %v3475
        %v3477 = vpop.f32.mrf.mxu0
        %3478 = vdwg.mxu0
        %v3479 = vadd.f32 %v3372, %v3463
        %v3480 = vadd.f32 %v3385, %v3476
        %3481 = vmatpush.bf16.msra.mxu0 %v1584
        %3482 = vmatpush.bf16.msra.mxu0 %v1582
        %3483 = vmatpush.bf16.msra.mxu0 %v1580
        %3484 = vmatpush.bf16.msra.mxu0 %v1578
        %3485 = vmatpush.bf16.msra.mxu0 %v1576
        %3486 = vmatpush.bf16.msra.mxu0 %v1574
        %3487 = vmatpush.bf16.msra.mxu0 %v1572
        %3488 = vmatpush.bf16.msra.mxu0 %v1570
        %3489 = vmatmul.bf16.gmra.mxu0 %v3205
        %v3490 = vpop.f32.mrf.mxu0
        %v3491 = vadd.f32 0.0, %v3490
        %v3492 = vpop.f32.mrf.mxu0
        %3493 = vdwg.mxu0
        %3494 = vmatpush.bf16.msra.mxu0 %v1600
        %3495 = vmatpush.bf16.msra.mxu0 %v1598
        %3496 = vmatpush.bf16.msra.mxu0 %v1596
        %3497 = vmatpush.bf16.msra.mxu0 %v1594
        %3498 = vmatpush.bf16.msra.mxu0 %v1592
        %3499 = vmatpush.bf16.msra.mxu0 %v1590
        %3500 = vmatpush.bf16.msra.mxu0 %v1588
        %3501 = vmatpush.bf16.msra.mxu0 %v1586
        %3502 = vmatmul.bf16.gmra.mxu0 %v3206
        %v3503 = vpop.f32.mrf.mxu0
        %v3504 = vadd.f32 %v3491, %v3503
        %v3505 = vpop.f32.mrf.mxu0
        %3506 = vdwg.mxu0
        %3507 = vmatpush.bf16.msra.mxu0 %v1585
        %3508 = vmatpush.bf16.msra.mxu0 %v1583
        %3509 = vmatpush.bf16.msra.mxu0 %v1581
        %3510 = vmatpush.bf16.msra.mxu0 %v1579
        %3511 = vmatpush.bf16.msra.mxu0 %v1577
        %3512 = vmatpush.bf16.msra.mxu0 %v1575
        %3513 = vmatpush.bf16.msra.mxu0 %v1573
        %3514 = vmatpush.bf16.msra.mxu0 %v1571
        %3515 = vmatmul.bf16.gmra.mxu0 %v3205
        %v3516 = vpop.f32.mrf.mxu0
        %v3517 = vadd.f32 0.0, %v3516
        %v3518 = vpop.f32.mrf.mxu0
        %3519 = vdwg.mxu0
        %3520 = vmatpush.bf16.msra.mxu0 %v1601
        %3521 = vmatpush.bf16.msra.mxu0 %v1599
        %3522 = vmatpush.bf16.msra.mxu0 %v1597
        %3523 = vmatpush.bf16.msra.mxu0 %v1595
        %3524 = vmatpush.bf16.msra.mxu0 %v1593
        %3525 = vmatpush.bf16.msra.mxu0 %v1591
        %3526 = vmatpush.bf16.msra.mxu0 %v1589
        %3527 = vmatpush.bf16.msra.mxu0 %v1587
        %3528 = vmatmul.bf16.gmra.mxu0 %v3206
        %v3529 = vpop.f32.mrf.mxu0
        %v3530 = vadd.f32 %v3517, %v3529
        %v3531 = vpop.f32.mrf.mxu0
        %3532 = vdwg.mxu0
        %v3533 = vpack.c.bf16 %v3504, %v3504
        %v3534 = vpack.c.bf16 %v3530, %v3530
        %s3535 = scalar_lea.vmem [#allocation7], 12
        %v3536 = vld [vmem:[%s3535] sm:$0xf]
        %v3538 = vsel %vm1083, %v3536, 0
        %v3541 = vsel %vm1087, %v3533, 0
        %v3544 = vsel %vm1087, %v3534, 0
        %3546 = vmatpush.bf16.msra.mxu0 0
        %3547 = vmatpush.bf16.msra.mxu0 0
        %3548 = vmatpush.bf16.msra.mxu0 0
        %3549 = vmatpush.bf16.msra.mxu0 0
        %3550 = vmatpush.bf16.msra.mxu0 0
        %3551 = vmatpush.bf16.msra.mxu0 0
        %3552 = vmatpush.bf16.msra.mxu0 0
        %3553 = vmatpush.bf16.msra.mxu0 %v3541
        %3554 = vmatmul.bf16.gmra.mxu0 %v3538
        %v3555 = vpop.f32.mrf.mxu0
        %v3556 = vadd.f32 0.0, %v3555
        %v3557 = vpop.f32.mrf.mxu0
        %3558 = vdwg.mxu0
        %3559 = vmatpush.bf16.msra.mxu0 0
        %3560 = vmatpush.bf16.msra.mxu0 0
        %3561 = vmatpush.bf16.msra.mxu0 0
        %3562 = vmatpush.bf16.msra.mxu0 0
        %3563 = vmatpush.bf16.msra.mxu0 0
        %3564 = vmatpush.bf16.msra.mxu0 0
        %3565 = vmatpush.bf16.msra.mxu0 0
        %3566 = vmatpush.bf16.msra.mxu0 %v3544
        %3567 = vmatmul.bf16.gmra.mxu0 %v3538
        %v3568 = vpop.f32.mrf.mxu0
        %v3569 = vadd.f32 0.0, %v3568
        %v3570 = vpop.f32.mrf.mxu0
        %3571 = vdwg.mxu0
        %v3572 = vadd.f32 %v3479, %v3556
        %v3573 = vadd.f32 %v3480, %v3569
        %3574 = vmatpush.bf16.msra.mxu0 %v1870
        %3575 = vmatpush.bf16.msra.mxu0 %v1868
        %3576 = vmatpush.bf16.msra.mxu0 %v1866
        %3577 = vmatpush.bf16.msra.mxu0 %v1864
        %3578 = vmatpush.bf16.msra.mxu0 %v1862
        %3579 = vmatpush.bf16.msra.mxu0 %v1860
        %3580 = vmatpush.bf16.msra.mxu0 %v1858
        %3581 = vmatpush.bf16.msra.mxu0 %v1856
        %3582 = vmatmul.bf16.gmra.mxu0 %v3205
        %v3583 = vpop.f32.mrf.mxu0
        %v3584 = vadd.f32 0.0, %v3583
        %v3585 = vpop.f32.mrf.mxu0
        %3586 = vdwg.mxu0
        %3587 = vmatpush.bf16.msra.mxu0 %v1886
        %3588 = vmatpush.bf16.msra.mxu0 %v1884
        %3589 = vmatpush.bf16.msra.mxu0 %v1882
        %3590 = vmatpush.bf16.msra.mxu0 %v1880
        %3591 = vmatpush.bf16.msra.mxu0 %v1878
        %3592 = vmatpush.bf16.msra.mxu0 %v1876
        %3593 = vmatpush.bf16.msra.mxu0 %v1874
        %3594 = vmatpush.bf16.msra.mxu0 %v1872
        %3595 = vmatmul.bf16.gmra.mxu0 %v3206
        %v3596 = vpop.f32.mrf.mxu0
        %v3597 = vadd.f32 %v3584, %v3596
        %v3598 = vpop.f32.mrf.mxu0
        %3599 = vdwg.mxu0
        %3600 = vmatpush.bf16.msra.mxu0 %v1871
        %3601 = vmatpush.bf16.msra.mxu0 %v1869
        %3602 = vmatpush.bf16.msra.mxu0 %v1867
        %3603 = vmatpush.bf16.msra.mxu0 %v1865
        %3604 = vmatpush.bf16.msra.mxu0 %v1863
        %3605 = vmatpush.bf16.msra.mxu0 %v1861
        %3606 = vmatpush.bf16.msra.mxu0 %v1859
        %3607 = vmatpush.bf16.msra.mxu0 %v1857
        %3608 = vmatmul.bf16.gmra.mxu0 %v3205
        %v3609 = vpop.f32.mrf.mxu0
        %v3610 = vadd.f32 0.0, %v3609
        %v3611 = vpop.f32.mrf.mxu0
        %3612 = vdwg.mxu0
        %3613 = vmatpush.bf16.msra.mxu0 %v1887
        %3614 = vmatpush.bf16.msra.mxu0 %v1885
        %3615 = vmatpush.bf16.msra.mxu0 %v1883
        %3616 = vmatpush.bf16.msra.mxu0 %v1881
        %3617 = vmatpush.bf16.msra.mxu0 %v1879
        %3618 = vmatpush.bf16.msra.mxu0 %v1877
        %3619 = vmatpush.bf16.msra.mxu0 %v1875
        %3620 = vmatpush.bf16.msra.mxu0 %v1873
        %3621 = vmatmul.bf16.gmra.mxu0 %v3206
        %v3622 = vpop.f32.mrf.mxu0
        %v3623 = vadd.f32 %v3610, %v3622
        %v3624 = vpop.f32.mrf.mxu0
        %3625 = vdwg.mxu0
        %v3626 = vpack.c.bf16 %v3597, %v3597
        %v3627 = vpack.c.bf16 %v3623, %v3623
        %s3628 = scalar_lea.vmem [#allocation7], 16
        %v3629 = vld [vmem:[%s3628] sm:$0xf]
        %v3631 = vsel %vm1083, %v3629, 0
        %v3634 = vsel %vm1087, %v3626, 0
        %v3637 = vsel %vm1087, %v3627, 0
        %3639 = vmatpush.bf16.msra.mxu0 0
        %3640 = vmatpush.bf16.msra.mxu0 0
        %3641 = vmatpush.bf16.msra.mxu0 0
        %3642 = vmatpush.bf16.msra.mxu0 0
        %3643 = vmatpush.bf16.msra.mxu0 0
        %3644 = vmatpush.bf16.msra.mxu0 0
        %3645 = vmatpush.bf16.msra.mxu0 0
        %3646 = vmatpush.bf16.msra.mxu0 %v3634
        %3647 = vmatmul.bf16.gmra.mxu0 %v3631
        %v3648 = vpop.f32.mrf.mxu0
        %v3649 = vadd.f32 0.0, %v3648
        %v3650 = vpop.f32.mrf.mxu0
        %3651 = vdwg.mxu0
        %3652 = vmatpush.bf16.msra.mxu0 0
        %3653 = vmatpush.bf16.msra.mxu0 0
        %3654 = vmatpush.bf16.msra.mxu0 0
        %3655 = vmatpush.bf16.msra.mxu0 0
        %3656 = vmatpush.bf16.msra.mxu0 0
        %3657 = vmatpush.bf16.msra.mxu0 0
        %3658 = vmatpush.bf16.msra.mxu0 0
        %3659 = vmatpush.bf16.msra.mxu0 %v3637
        %3660 = vmatmul.bf16.gmra.mxu0 %v3631
        %v3661 = vpop.f32.mrf.mxu0
        %v3662 = vadd.f32 0.0, %v3661
        %v3663 = vpop.f32.mrf.mxu0
        %3664 = vdwg.mxu0
        %v3665 = vadd.f32 %v3572, %v3649
        %v3666 = vadd.f32 %v3573, %v3662
        %3667 = vmatpush.bf16.msra.mxu0 %v2156
        %3668 = vmatpush.bf16.msra.mxu0 %v2154
        %3669 = vmatpush.bf16.msra.mxu0 %v2152
        %3670 = vmatpush.bf16.msra.mxu0 %v2150
        %3671 = vmatpush.bf16.msra.mxu0 %v2148
        %3672 = vmatpush.bf16.msra.mxu0 %v2146
        %3673 = vmatpush.bf16.msra.mxu0 %v2144
        %3674 = vmatpush.bf16.msra.mxu0 %v2142
        %3675 = vmatmul.bf16.gmra.mxu0 %v3205
        %v3676 = vpop.f32.mrf.mxu0
        %v3677 = vadd.f32 0.0, %v3676
        %v3678 = vpop.f32.mrf.mxu0
        %3679 = vdwg.mxu0
        %3680 = vmatpush.bf16.msra.mxu0 %v2172
        %3681 = vmatpush.bf16.msra.mxu0 %v2170
        %3682 = vmatpush.bf16.msra.mxu0 %v2168
        %3683 = vmatpush.bf16.msra.mxu0 %v2166
        %3684 = vmatpush.bf16.msra.mxu0 %v2164
        %3685 = vmatpush.bf16.msra.mxu0 %v2162
        %3686 = vmatpush.bf16.msra.mxu0 %v2160
        %3687 = vmatpush.bf16.msra.mxu0 %v2158
        %3688 = vmatmul.bf16.gmra.mxu0 %v3206
        %v3689 = vpop.f32.mrf.mxu0
        %v3690 = vadd.f32 %v3677, %v3689
        %v3691 = vpop.f32.mrf.mxu0
        %3692 = vdwg.mxu0
        %3693 = vmatpush.bf16.msra.mxu0 %v2157
        %3694 = vmatpush.bf16.msra.mxu0 %v2155
        %3695 = vmatpush.bf16.msra.mxu0 %v2153
        %3696 = vmatpush.bf16.msra.mxu0 %v2151
        %3697 = vmatpush.bf16.msra.mxu0 %v2149
        %3698 = vmatpush.bf16.msra.mxu0 %v2147
        %3699 = vmatpush.bf16.msra.mxu0 %v2145
        %3700 = vmatpush.bf16.msra.mxu0 %v2143
        %3701 = vmatmul.bf16.gmra.mxu0 %v3205
        %v3702 = vpop.f32.mrf.mxu0
        %v3703 = vadd.f32 0.0, %v3702
        %v3704 = vpop.f32.mrf.mxu0
        %3705 = vdwg.mxu0
        %3706 = vmatpush.bf16.msra.mxu0 %v2173
        %3707 = vmatpush.bf16.msra.mxu0 %v2171
        %3708 = vmatpush.bf16.msra.mxu0 %v2169
        %3709 = vmatpush.bf16.msra.mxu0 %v2167
        %3710 = vmatpush.bf16.msra.mxu0 %v2165
        %3711 = vmatpush.bf16.msra.mxu0 %v2163
        %3712 = vmatpush.bf16.msra.mxu0 %v2161
        %3713 = vmatpush.bf16.msra.mxu0 %v2159
        %3714 = vmatmul.bf16.gmra.mxu0 %v3206
        %v3715 = vpop.f32.mrf.mxu0
        %v3716 = vadd.f32 %v3703, %v3715
        %v3717 = vpop.f32.mrf.mxu0
        %3718 = vdwg.mxu0
        %v3719 = vpack.c.bf16 %v3690, %v3690
        %v3720 = vpack.c.bf16 %v3716, %v3716
        %s3721 = scalar_lea.vmem [#allocation7], 20
        %v3722 = vld [vmem:[%s3721] sm:$0xf]
        %v3724 = vsel %vm1083, %v3722, 0
        %v3727 = vsel %vm1087, %v3719, 0
        %v3730 = vsel %vm1087, %v3720, 0
        %3732 = vmatpush.bf16.msra.mxu0 0
        %3733 = vmatpush.bf16.msra.mxu0 0
        %3734 = vmatpush.bf16.msra.mxu0 0
        %3735 = vmatpush.bf16.msra.mxu0 0
        %3736 = vmatpush.bf16.msra.mxu0 0
        %3737 = vmatpush.bf16.msra.mxu0 0
        %3738 = vmatpush.bf16.msra.mxu0 0
        %3739 = vmatpush.bf16.msra.mxu0 %v3727
        %3740 = vmatmul.bf16.gmra.mxu0 %v3724
        %v3741 = vpop.f32.mrf.mxu0
        %v3742 = vadd.f32 0.0, %v3741
        %v3743 = vpop.f32.mrf.mxu0
        %3744 = vdwg.mxu0
        %3745 = vmatpush.bf16.msra.mxu0 0
        %3746 = vmatpush.bf16.msra.mxu0 0
        %3747 = vmatpush.bf16.msra.mxu0 0
        %3748 = vmatpush.bf16.msra.mxu0 0
        %3749 = vmatpush.bf16.msra.mxu0 0
        %3750 = vmatpush.bf16.msra.mxu0 0
        %3751 = vmatpush.bf16.msra.mxu0 0
        %3752 = vmatpush.bf16.msra.mxu0 %v3730
        %3753 = vmatmul.bf16.gmra.mxu0 %v3724
        %v3754 = vpop.f32.mrf.mxu0
        %v3755 = vadd.f32 0.0, %v3754
        %v3756 = vpop.f32.mrf.mxu0
        %3757 = vdwg.mxu0
        %v3758 = vadd.f32 %v3665, %v3742
        %v3759 = vadd.f32 %v3666, %v3755
        %3760 = vmatpush.bf16.msra.mxu0 %v2442
        %3761 = vmatpush.bf16.msra.mxu0 %v2440
        %3762 = vmatpush.bf16.msra.mxu0 %v2438
        %3763 = vmatpush.bf16.msra.mxu0 %v2436
        %3764 = vmatpush.bf16.msra.mxu0 %v2434
        %3765 = vmatpush.bf16.msra.mxu0 %v2432
        %3766 = vmatpush.bf16.msra.mxu0 %v2430
        %3767 = vmatpush.bf16.msra.mxu0 %v2428
        %3768 = vmatmul.bf16.gmra.mxu0 %v3205
        %v3769 = vpop.f32.mrf.mxu0
        %v3770 = vadd.f32 0.0, %v3769
        %v3771 = vpop.f32.mrf.mxu0
        %3772 = vdwg.mxu0
        %3773 = vmatpush.bf16.msra.mxu0 %v2458
        %3774 = vmatpush.bf16.msra.mxu0 %v2456
        %3775 = vmatpush.bf16.msra.mxu0 %v2454
        %3776 = vmatpush.bf16.msra.mxu0 %v2452
        %3777 = vmatpush.bf16.msra.mxu0 %v2450
        %3778 = vmatpush.bf16.msra.mxu0 %v2448
        %3779 = vmatpush.bf16.msra.mxu0 %v2446
        %3780 = vmatpush.bf16.msra.mxu0 %v2444
        %3781 = vmatmul.bf16.gmra.mxu0 %v3206
        %v3782 = vpop.f32.mrf.mxu0
        %v3783 = vadd.f32 %v3770, %v3782
        %v3784 = vpop.f32.mrf.mxu0
        %3785 = vdwg.mxu0
        %3786 = vmatpush.bf16.msra.mxu0 %v2443
        %3787 = vmatpush.bf16.msra.mxu0 %v2441
        %3788 = vmatpush.bf16.msra.mxu0 %v2439
        %3789 = vmatpush.bf16.msra.mxu0 %v2437
        %3790 = vmatpush.bf16.msra.mxu0 %v2435
        %3791 = vmatpush.bf16.msra.mxu0 %v2433
        %3792 = vmatpush.bf16.msra.mxu0 %v2431
        %3793 = vmatpush.bf16.msra.mxu0 %v2429
        %3794 = vmatmul.bf16.gmra.mxu0 %v3205
        %v3795 = vpop.f32.mrf.mxu0
        %v3796 = vadd.f32 0.0, %v3795
        %v3797 = vpop.f32.mrf.mxu0
        %3798 = vdwg.mxu0
        %3799 = vmatpush.bf16.msra.mxu0 %v2459
        %3800 = vmatpush.bf16.msra.mxu0 %v2457
        %3801 = vmatpush.bf16.msra.mxu0 %v2455
        %3802 = vmatpush.bf16.msra.mxu0 %v2453
        %3803 = vmatpush.bf16.msra.mxu0 %v2451
        %3804 = vmatpush.bf16.msra.mxu0 %v2449
        %3805 = vmatpush.bf16.msra.mxu0 %v2447
        %3806 = vmatpush.bf16.msra.mxu0 %v2445
        %3807 = vmatmul.bf16.gmra.mxu0 %v3206
        %v3808 = vpop.f32.mrf.mxu0
        %v3809 = vadd.f32 %v3796, %v3808
        %v3810 = vpop.f32.mrf.mxu0
        %3811 = vdwg.mxu0
        %v3812 = vpack.c.bf16 %v3783, %v3783
        %v3813 = vpack.c.bf16 %v3809, %v3809
        %s3814 = scalar_lea.vmem [#allocation7], 24
        %v3815 = vld [vmem:[%s3814] sm:$0xf]
        %v3817 = vsel %vm1083, %v3815, 0
        %v3820 = vsel %vm1087, %v3812, 0
        %v3823 = vsel %vm1087, %v3813, 0
        %3825 = vmatpush.bf16.msra.mxu0 0
        %3826 = vmatpush.bf16.msra.mxu0 0
        %3827 = vmatpush.bf16.msra.mxu0 0
        %3828 = vmatpush.bf16.msra.mxu0 0
        %3829 = vmatpush.bf16.msra.mxu0 0
        %3830 = vmatpush.bf16.msra.mxu0 0
        %3831 = vmatpush.bf16.msra.mxu0 0
        %3832 = vmatpush.bf16.msra.mxu0 %v3820
        %3833 = vmatmul.bf16.gmra.mxu0 %v3817
        %v3834 = vpop.f32.mrf.mxu0
        %v3835 = vadd.f32 0.0, %v3834
        %v3836 = vpop.f32.mrf.mxu0
        %3837 = vdwg.mxu0
        %3838 = vmatpush.bf16.msra.mxu0 0
        %3839 = vmatpush.bf16.msra.mxu0 0
        %3840 = vmatpush.bf16.msra.mxu0 0
        %3841 = vmatpush.bf16.msra.mxu0 0
        %3842 = vmatpush.bf16.msra.mxu0 0
        %3843 = vmatpush.bf16.msra.mxu0 0
        %3844 = vmatpush.bf16.msra.mxu0 0
        %3845 = vmatpush.bf16.msra.mxu0 %v3823
        %3846 = vmatmul.bf16.gmra.mxu0 %v3817
        %v3847 = vpop.f32.mrf.mxu0
        %v3848 = vadd.f32 0.0, %v3847
        %v3849 = vpop.f32.mrf.mxu0
        %3850 = vdwg.mxu0
        %v3851 = vadd.f32 %v3758, %v3835
        %v3852 = vadd.f32 %v3759, %v3848
        %3853 = vmatpush.bf16.msra.mxu0 %v2728
        %3854 = vmatpush.bf16.msra.mxu0 %v2726
        %3855 = vmatpush.bf16.msra.mxu0 %v2724
        %3856 = vmatpush.bf16.msra.mxu0 %v2722
        %3857 = vmatpush.bf16.msra.mxu0 %v2720
        %3858 = vmatpush.bf16.msra.mxu0 %v2718
        %3859 = vmatpush.bf16.msra.mxu0 %v2716
        %3860 = vmatpush.bf16.msra.mxu0 %v2714
        %3861 = vmatmul.bf16.gmra.mxu0 %v3205
        %v3862 = vpop.f32.mrf.mxu0
        %v3863 = vadd.f32 0.0, %v3862
        %v3864 = vpop.f32.mrf.mxu0
        %3865 = vdwg.mxu0
        %3866 = vmatpush.bf16.msra.mxu0 %v2744
        %3867 = vmatpush.bf16.msra.mxu0 %v2742
        %3868 = vmatpush.bf16.msra.mxu0 %v2740
        %3869 = vmatpush.bf16.msra.mxu0 %v2738
        %3870 = vmatpush.bf16.msra.mxu0 %v2736
        %3871 = vmatpush.bf16.msra.mxu0 %v2734
        %3872 = vmatpush.bf16.msra.mxu0 %v2732
        %3873 = vmatpush.bf16.msra.mxu0 %v2730
        %3874 = vmatmul.bf16.gmra.mxu0 %v3206
        %v3875 = vpop.f32.mrf.mxu0
        %v3876 = vadd.f32 %v3863, %v3875
        %v3877 = vpop.f32.mrf.mxu0
        %3878 = vdwg.mxu0
        %3879 = vmatpush.bf16.msra.mxu0 %v2729
        %3880 = vmatpush.bf16.msra.mxu0 %v2727
        %3881 = vmatpush.bf16.msra.mxu0 %v2725
        %3882 = vmatpush.bf16.msra.mxu0 %v2723
        %3883 = vmatpush.bf16.msra.mxu0 %v2721
        %3884 = vmatpush.bf16.msra.mxu0 %v2719
        %3885 = vmatpush.bf16.msra.mxu0 %v2717
        %3886 = vmatpush.bf16.msra.mxu0 %v2715
        %3887 = vmatmul.bf16.gmra.mxu0 %v3205
        %v3888 = vpop.f32.mrf.mxu0
        %v3889 = vadd.f32 0.0, %v3888
        %v3890 = vpop.f32.mrf.mxu0
        %3891 = vdwg.mxu0
        %3892 = vmatpush.bf16.msra.mxu0 %v2745
        %3893 = vmatpush.bf16.msra.mxu0 %v2743
        %3894 = vmatpush.bf16.msra.mxu0 %v2741
        %3895 = vmatpush.bf16.msra.mxu0 %v2739
        %3896 = vmatpush.bf16.msra.mxu0 %v2737
        %3897 = vmatpush.bf16.msra.mxu0 %v2735
        %3898 = vmatpush.bf16.msra.mxu0 %v2733
        %3899 = vmatpush.bf16.msra.mxu0 %v2731
        %3900 = vmatmul.bf16.gmra.mxu0 %v3206
        %v3901 = vpop.f32.mrf.mxu0
        %v3902 = vadd.f32 %v3889, %v3901
        %v3903 = vpop.f32.mrf.mxu0
        %3904 = vdwg.mxu0
        %v3905 = vpack.c.bf16 %v3876, %v3876
        %v3906 = vpack.c.bf16 %v3902, %v3902
        %s3907 = scalar_lea.vmem [#allocation7], 28
        %v3908 = vld [vmem:[%s3907] sm:$0xf]
        %v3910 = vsel %vm1083, %v3908, 0
        %v3913 = vsel %vm1087, %v3905, 0
        %v3916 = vsel %vm1087, %v3906, 0
        %3918 = vmatpush.bf16.msra.mxu0 0
        %3919 = vmatpush.bf16.msra.mxu0 0
        %3920 = vmatpush.bf16.msra.mxu0 0
        %3921 = vmatpush.bf16.msra.mxu0 0
        %3922 = vmatpush.bf16.msra.mxu0 0
        %3923 = vmatpush.bf16.msra.mxu0 0
        %3924 = vmatpush.bf16.msra.mxu0 0
        %3925 = vmatpush.bf16.msra.mxu0 %v3913
        %3926 = vmatmul.bf16.gmra.mxu0 %v3910
        %v3927 = vpop.f32.mrf.mxu0
        %v3928 = vadd.f32 0.0, %v3927
        %v3929 = vpop.f32.mrf.mxu0
        %3930 = vdwg.mxu0
        %3931 = vmatpush.bf16.msra.mxu0 0
        %3932 = vmatpush.bf16.msra.mxu0 0
        %3933 = vmatpush.bf16.msra.mxu0 0
        %3934 = vmatpush.bf16.msra.mxu0 0
        %3935 = vmatpush.bf16.msra.mxu0 0
        %3936 = vmatpush.bf16.msra.mxu0 0
        %3937 = vmatpush.bf16.msra.mxu0 0
        %3938 = vmatpush.bf16.msra.mxu0 %v3916
        %3939 = vmatmul.bf16.gmra.mxu0 %v3910
        %v3940 = vpop.f32.mrf.mxu0
        %v3941 = vadd.f32 0.0, %v3940
        %v3942 = vpop.f32.mrf.mxu0
        %3943 = vdwg.mxu0
        %v3944 = vadd.f32 %v3851, %v3928
        %v3945 = vadd.f32 %v3852, %v3941
        %3946 = vmatpush.bf16.msra.mxu0 %v3014
        %3947 = vmatpush.bf16.msra.mxu0 %v3012
        %3948 = vmatpush.bf16.msra.mxu0 %v3010
        %3949 = vmatpush.bf16.msra.mxu0 %v3008
        %3950 = vmatpush.bf16.msra.mxu0 %v3006
        %3951 = vmatpush.bf16.msra.mxu0 %v3004
        %3952 = vmatpush.bf16.msra.mxu0 %v3002
        %3953 = vmatpush.bf16.msra.mxu0 %v3000
        %3954 = vmatmul.bf16.gmra.mxu0 %v3205
        %v3955 = vpop.f32.mrf.mxu0
        %v3956 = vadd.f32 0.0, %v3955
        %v3957 = vpop.f32.mrf.mxu0
        %3958 = vdwg.mxu0
        %3959 = vmatpush.bf16.msra.mxu0 %v3030
        %3960 = vmatpush.bf16.msra.mxu0 %v3028
        %3961 = vmatpush.bf16.msra.mxu0 %v3026
        %3962 = vmatpush.bf16.msra.mxu0 %v3024
        %3963 = vmatpush.bf16.msra.mxu0 %v3022
        %3964 = vmatpush.bf16.msra.mxu0 %v3020
        %3965 = vmatpush.bf16.msra.mxu0 %v3018
        %3966 = vmatpush.bf16.msra.mxu0 %v3016
        %3967 = vmatmul.bf16.gmra.mxu0 %v3206
        %v3968 = vpop.f32.mrf.mxu0
        %v3969 = vadd.f32 %v3956, %v3968
        %v3970 = vpop.f32.mrf.mxu0
        %3971 = vdwg.mxu0
        %3972 = vmatpush.bf16.msra.mxu0 %v3015
        %3973 = vmatpush.bf16.msra.mxu0 %v3013
        %3974 = vmatpush.bf16.msra.mxu0 %v3011
        %3975 = vmatpush.bf16.msra.mxu0 %v3009
        %3976 = vmatpush.bf16.msra.mxu0 %v3007
        %3977 = vmatpush.bf16.msra.mxu0 %v3005
        %3978 = vmatpush.bf16.msra.mxu0 %v3003
        %3979 = vmatpush.bf16.msra.mxu0 %v3001
        %3980 = vmatmul.bf16.gmra.mxu0 %v3205
        %v3981 = vpop.f32.mrf.mxu0
        %v3982 = vadd.f32 0.0, %v3981
        %v3983 = vpop.f32.mrf.mxu0
        %3984 = vdwg.mxu0
        %3985 = vmatpush.bf16.msra.mxu0 %v3031
        %3986 = vmatpush.bf16.msra.mxu0 %v3029
        %3987 = vmatpush.bf16.msra.mxu0 %v3027
        %3988 = vmatpush.bf16.msra.mxu0 %v3025
        %3989 = vmatpush.bf16.msra.mxu0 %v3023
        %3990 = vmatpush.bf16.msra.mxu0 %v3021
        %3991 = vmatpush.bf16.msra.mxu0 %v3019
        %3992 = vmatpush.bf16.msra.mxu0 %v3017
        %3993 = vmatmul.bf16.gmra.mxu0 %v3206
        %v3994 = vpop.f32.mrf.mxu0
        %v3995 = vadd.f32 %v3982, %v3994
        %v3996 = vpop.f32.mrf.mxu0
        %3997 = vdwg.mxu0
        %v3998 = vpack.c.bf16 %v3969, %v3969
        %v3999 = vpack.c.bf16 %v3995, %v3995
        %s4000 = scalar_lea.vmem [#allocation7], 32
        %v4001 = vld [vmem:[%s4000] sm:$0xf]
        %v4003 = vsel %vm1083, %v4001, 0
        %v4006 = vsel %vm1087, %v3998, 0
        %v4009 = vsel %vm1087, %v3999, 0
        %4011 = vmatpush.bf16.msra.mxu0 0
        %4012 = vmatpush.bf16.msra.mxu0 0
        %4013 = vmatpush.bf16.msra.mxu0 0
        %4014 = vmatpush.bf16.msra.mxu0 0
        %4015 = vmatpush.bf16.msra.mxu0 0
        %4016 = vmatpush.bf16.msra.mxu0 0
        %4017 = vmatpush.bf16.msra.mxu0 0
        %4018 = vmatpush.bf16.msra.mxu0 %v4006
        %4019 = vmatmul.bf16.gmra.mxu0 %v4003
        %v4020 = vpop.f32.mrf.mxu0
        %v4021 = vadd.f32 0.0, %v4020
        %v4022 = vpop.f32.mrf.mxu0
        %4023 = vdwg.mxu0
        %4024 = vmatpush.bf16.msra.mxu0 0
        %4025 = vmatpush.bf16.msra.mxu0 0
        %4026 = vmatpush.bf16.msra.mxu0 0
        %4027 = vmatpush.bf16.msra.mxu0 0
        %4028 = vmatpush.bf16.msra.mxu0 0
        %4029 = vmatpush.bf16.msra.mxu0 0
        %4030 = vmatpush.bf16.msra.mxu0 0
        %4031 = vmatpush.bf16.msra.mxu0 %v4009
        %4032 = vmatmul.bf16.gmra.mxu0 %v4003
        %v4033 = vpop.f32.mrf.mxu0
        %v4034 = vadd.f32 0.0, %v4033
        %v4035 = vpop.f32.mrf.mxu0
        %4036 = vdwg.mxu0
        %v4037 = vadd.f32 %v3944, %v4021
        %v4038 = vadd.f32 %v3945, %v4034
        %v4039 = vld [vmem:[#allocation9] sm:$0xff]
        %4041 = vset.pattern.permute.xlu0 0
        %4042 = vperm.xlu0 %4041, %v4039
        %v4043 = vpop.permute.xlu0 %4042
        %v4045 = vadd.f32 %v4037, %v4043
        %v4046 = vadd.f32 %v4038, %v4043
        %v4047 = vxor.u32 %v4045, 2147483648
        %v4048 = vxor.u32 %v4046, 2147483648
        %v4049 = vmul.f32 %v4047, 1.442695
        %v4050 = vpow.pop %v4049
        %v4051 = vmul.f32 %v4048, 1.442695
        %v4052 = vpow.pop %v4051
        %v4053 = vadd.f32 %v4050, 1.0
        %v4054 = vadd.f32 %v4052, 1.0
        %v4055 = vrcp.pop %v4053
        %v4056 = vmul.f32 %v4053, %v4055
        %v4057 = vsub.f32 1.0, %v4056
        %v4058 = vmul.f32 %v4055, %v4057
        %v4059 = vadd.f32 %v4055, %v4058
        %vm4060 = vweird.f32 %v4053
        %vm4061 = vweird.f32 %v4055
        %vm4062 = vmor %vm4060, %vm4061
        %v4063 = vsel %vm4062, %v4055, %v4059
        %v4064 = vand.u32 2147483647, %v4053
        %vm4065 = vcmp.eq.f32.partialorder %v4064, 8.507059e+37
        %v4066 = vand.u32 %v4053, 2147483648
        %v4067 = vor.u32 1.1754944e-38, %v4066
        %v4068 = vsel %vm4065, %v4067, %v4063
        %v4069 = vmul.f32 1.0, %v4068
        %v4070 = vrcp.pop %v4054
        %v4071 = vmul.f32 %v4054, %v4070
        %v4072 = vsub.f32 1.0, %v4071
        %v4073 = vmul.f32 %v4070, %v4072
        %v4074 = vadd.f32 %v4070, %v4073
        %vm4075 = vweird.f32 %v4054
        %vm4076 = vweird.f32 %v4070
        %vm4077 = vmor %vm4075, %vm4076
        %v4078 = vsel %vm4077, %v4070, %v4074
        %v4079 = vand.u32 2147483647, %v4054
        %vm4080 = vcmp.eq.f32.partialorder %v4079, 8.507059e+37
        %v4081 = vand.u32 %v4054, 2147483648
        %v4082 = vor.u32 1.1754944e-38, %v4081
        %v4083 = vsel %vm4080, %v4082, %v4078
        %v4084 = vmul.f32 1.0, %v4083
        %v4085 = vmul.f32 %v4045, %v4069
        %v4086 = vmul.f32 %v4046, %v4084
        %v4087 = vpack.c.bf16 %v4085, %v4085
        %v4088 = vpack.c.bf16 %v4086, %v4086
        %v4089 = vld [vmem:[#allocation10] sm:$0xf]
        %v4090 = vld [vmem:[#allocation12] sm:$0xff]
        %4092 = vset.pattern.permute.xlu0 0
        %4093 = vperm.xlu0 %4092, %v4090
        %v4094 = vpop.permute.xlu0 %4093
        %v4097 = vsel %vm1083, %v4089, 0
        %v4100 = vsel %vm1087, %v4087, 0
        %v4103 = vsel %vm1087, %v4088, 0
        %4105 = vmatpush.bf16.msra.mxu0 0
        %4106 = vmatpush.bf16.msra.mxu0 0
        %4107 = vmatpush.bf16.msra.mxu0 0
        %4108 = vmatpush.bf16.msra.mxu0 0
        %4109 = vmatpush.bf16.msra.mxu0 0
        %4110 = vmatpush.bf16.msra.mxu0 0
        %4111 = vmatpush.bf16.msra.mxu0 0
        %4112 = vmatpush.bf16.msra.mxu0 %v4100
        %4113 = vmatmul.bf16.gmra.mxu0 %v4097
        %v4114 = vpop.f32.mrf.mxu0
        %v4115 = vadd.f32 %v4094, %v4114
        %v4116 = vpop.f32.mrf.mxu0
        %4117 = vdwg.mxu0
        %4118 = vmatpush.bf16.msra.mxu0 0
        %4119 = vmatpush.bf16.msra.mxu0 0
        %4120 = vmatpush.bf16.msra.mxu0 0
        %4121 = vmatpush.bf16.msra.mxu0 0
        %4122 = vmatpush.bf16.msra.mxu0 0
        %4123 = vmatpush.bf16.msra.mxu0 0
        %4124 = vmatpush.bf16.msra.mxu0 0
        %4125 = vmatpush.bf16.msra.mxu0 %v4103
        %4126 = vmatmul.bf16.gmra.mxu0 %v4097
        %v4127 = vpop.f32.mrf.mxu0
        %v4128 = vadd.f32 %v4094, %v4127
        %v4129 = vpop.f32.mrf.mxu0
        %4130 = vdwg.mxu0
        %v4131 = vxor.u32 %v4115, 2147483648
        %v4132 = vxor.u32 %v4128, 2147483648
        %v4133 = vmul.f32 %v4131, 1.442695
        %v4134 = vpow.pop %v4133
        %v4135 = vmul.f32 %v4132, 1.442695
        %v4136 = vpow.pop %v4135
        %v4137 = vadd.f32 %v4134, 1.0
        %v4138 = vadd.f32 %v4136, 1.0
        %v4139 = vrcp.pop %v4137
        %v4140 = vmul.f32 %v4137, %v4139
        %v4141 = vsub.f32 1.0, %v4140
        %v4142 = vmul.f32 %v4139, %v4141
        %v4143 = vadd.f32 %v4139, %v4142
        %vm4144 = vweird.f32 %v4137
        %vm4145 = vweird.f32 %v4139
        %vm4146 = vmor %vm4144, %vm4145
        %v4147 = vsel %vm4146, %v4139, %v4143
        %v4148 = vand.u32 2147483647, %v4137
        %vm4149 = vcmp.eq.f32.partialorder %v4148, 8.507059e+37
        %v4150 = vand.u32 %v4137, 2147483648
        %v4151 = vor.u32 1.1754944e-38, %v4150
        %v4152 = vsel %vm4149, %v4151, %v4147
        %v4153 = vmul.f32 1.0, %v4152
        %v4154 = vrcp.pop %v4138
        %v4155 = vmul.f32 %v4138, %v4154
        %v4156 = vsub.f32 1.0, %v4155
        %v4157 = vmul.f32 %v4154, %v4156
        %v4158 = vadd.f32 %v4154, %v4157
        %vm4159 = vweird.f32 %v4138
        %vm4160 = vweird.f32 %v4154
        %vm4161 = vmor %vm4159, %vm4160
        %v4162 = vsel %vm4161, %v4154, %v4158
        %v4163 = vand.u32 2147483647, %v4138
        %vm4164 = vcmp.eq.f32.partialorder %v4163, 8.507059e+37
        %v4165 = vand.u32 %v4138, 2147483648
        %v4166 = vor.u32 1.1754944e-38, %v4165
        %v4167 = vsel %vm4164, %v4166, %v4162
        %v4168 = vmul.f32 1.0, %v4167
        %v4169 = vmul.f32 %v4115, %v4153
        %v4170 = vmul.f32 %v4128, %v4168
        %v4171 = vpack.c.bf16 %v4169, %v4169
        %v4172 = vpack.c.bf16 %v4170, %v4170
        %4173 = vmatpush.bf16.msra.mxu0 %v729
        %4174 = vmatpush.bf16.msra.mxu0 %v727
        %4175 = vmatpush.bf16.msra.mxu0 %v725
        %4176 = vmatpush.bf16.msra.mxu0 %v723
        %4177 = vmatpush.bf16.msra.mxu0 %v721
        %4178 = vmatpush.bf16.msra.mxu0 %v719
        %4179 = vmatpush.bf16.msra.mxu0 %v717
        %4180 = vmatpush.bf16.msra.mxu0 %v715
        %4181 = vmatmul.bf16.gmra.mxu0 %v4171
        %v4182 = vpop.f32.mrf.mxu0
        %v4183 = vadd.f32 0.0, %v4182
        %v4184 = vpop.f32.mrf.mxu0
        %4185 = vdwg.mxu0
        %4186 = vmatpush.bf16.msra.mxu0 %v745
        %4187 = vmatpush.bf16.msra.mxu0 %v743
        %4188 = vmatpush.bf16.msra.mxu0 %v741
        %4189 = vmatpush.bf16.msra.mxu0 %v739
        %4190 = vmatpush.bf16.msra.mxu0 %v737
        %4191 = vmatpush.bf16.msra.mxu0 %v735
        %4192 = vmatpush.bf16.msra.mxu0 %v733
        %4193 = vmatpush.bf16.msra.mxu0 %v731
        %4194 = vmatmul.bf16.gmra.mxu0 %v4172
        %v4195 = vpop.f32.mrf.mxu0
        %v4196 = vadd.f32 %v4183, %v4195
        %v4197 = vpop.f32.mrf.mxu0
        %4198 = vdwg.mxu0
        %4199 = vmatpush.bf16.msra.mxu0 %v730
        %4200 = vmatpush.bf16.msra.mxu0 %v728
        %4201 = vmatpush.bf16.msra.mxu0 %v726
        %4202 = vmatpush.bf16.msra.mxu0 %v724
        %4203 = vmatpush.bf16.msra.mxu0 %v722
        %4204 = vmatpush.bf16.msra.mxu0 %v720
        %4205 = vmatpush.bf16.msra.mxu0 %v718
        %4206 = vmatpush.bf16.msra.mxu0 %v716
        %4207 = vmatmul.bf16.gmra.mxu0 %v4171
        %v4208 = vpop.f32.mrf.mxu0
        %v4209 = vadd.f32 0.0, %v4208
        %v4210 = vpop.f32.mrf.mxu0
        %4211 = vdwg.mxu0
        %4212 = vmatpush.bf16.msra.mxu0 %v746
        %4213 = vmatpush.bf16.msra.mxu0 %v744
        %4214 = vmatpush.bf16.msra.mxu0 %v742
        %4215 = vmatpush.bf16.msra.mxu0 %v740
        %4216 = vmatpush.bf16.msra.mxu0 %v738
        %4217 = vmatpush.bf16.msra.mxu0 %v736
        %4218 = vmatpush.bf16.msra.mxu0 %v734
        %4219 = vmatpush.bf16.msra.mxu0 %v732
        %4220 = vmatmul.bf16.gmra.mxu0 %v4172
        %v4221 = vpop.f32.mrf.mxu0
        %v4222 = vadd.f32 %v4209, %v4221
        %v4223 = vpop.f32.mrf.mxu0
        %4224 = vdwg.mxu0
        %v4225 = vpack.c.bf16 %v4196, %v4196
        %v4226 = vpack.c.bf16 %v4222, %v4222
        %v4227 = vld [vmem:[#allocation16] sm:$0xf]
        %4228 = vmatpush.bf16.msra.mxu0 %v977
        %4229 = vmatpush.bf16.msra.mxu0 %v975
        %4230 = vmatpush.bf16.msra.mxu0 %v973
        %4231 = vmatpush.bf16.msra.mxu0 %v971
        %4232 = vmatpush.bf16.msra.mxu0 %v969
        %4233 = vmatpush.bf16.msra.mxu0 %v967
        %4234 = vmatpush.bf16.msra.mxu0 %v965
        %4235 = vmatpush.bf16.msra.mxu0 %v963
        %4236 = vmatmul.bf16.gmra.mxu0 %v4171
        %v4237 = vpop.f32.mrf.mxu0
        %v4238 = vadd.f32 0.0, %v4237
        %v4239 = vpop.f32.mrf.mxu0
        %4240 = vdwg.mxu0
        %4241 = vmatpush.bf16.msra.mxu0 %v993
        %4242 = vmatpush.bf16.msra.mxu0 %v991
        %4243 = vmatpush.bf16.msra.mxu0 %v989
        %4244 = vmatpush.bf16.msra.mxu0 %v987
        %4245 = vmatpush.bf16.msra.mxu0 %v985
        %4246 = vmatpush.bf16.msra.mxu0 %v983
        %4247 = vmatpush.bf16.msra.mxu0 %v981
        %4248 = vmatpush.bf16.msra.mxu0 %v979
        %4249 = vmatmul.bf16.gmra.mxu0 %v4172
        %v4250 = vpop.f32.mrf.mxu0
        %v4251 = vadd.f32 %v4238, %v4250
        %v4252 = vpop.f32.mrf.mxu0
        %4253 = vdwg.mxu0
        %4254 = vmatpush.bf16.msra.mxu0 %v978
        %4255 = vmatpush.bf16.msra.mxu0 %v976
        %4256 = vmatpush.bf16.msra.mxu0 %v974
        %4257 = vmatpush.bf16.msra.mxu0 %v972
        %4258 = vmatpush.bf16.msra.mxu0 %v970
        %4259 = vmatpush.bf16.msra.mxu0 %v968
        %4260 = vmatpush.bf16.msra.mxu0 %v966
        %4261 = vmatpush.bf16.msra.mxu0 %v964
        %4262 = vmatmul.bf16.gmra.mxu0 %v4171
        %v4263 = vpop.f32.mrf.mxu0
        %v4264 = vadd.f32 0.0, %v4263
        %v4265 = vpop.f32.mrf.mxu0
        %4266 = vdwg.mxu0
        %4267 = vmatpush.bf16.msra.mxu0 %v994
        %4268 = vmatpush.bf16.msra.mxu0 %v992
        %4269 = vmatpush.bf16.msra.mxu0 %v990
        %4270 = vmatpush.bf16.msra.mxu0 %v988
        %4271 = vmatpush.bf16.msra.mxu0 %v986
        %4272 = vmatpush.bf16.msra.mxu0 %v984
        %4273 = vmatpush.bf16.msra.mxu0 %v982
        %4274 = vmatpush.bf16.msra.mxu0 %v980
        %4275 = vmatmul.bf16.gmra.mxu0 %v4172
        %v4276 = vpop.f32.mrf.mxu0
        %v4277 = vadd.f32 %v4264, %v4276
        %v4278 = vpop.f32.mrf.mxu0
        %4279 = vdwg.mxu0
        %v4280 = vpack.c.bf16 %v4251, %v4251
        %v4281 = vpack.c.bf16 %v4277, %v4277
        %s4282 = scalar_lea.vmem [#allocation16], 4
        %v4283 = vld [vmem:[%s4282] sm:$0xf]
        %v4285 = vsel %vm1083, %v4283, 0
        %v4288 = vsel %vm1087, %v4280, 0
        %v4291 = vsel %vm1087, %v4281, 0
        %4293 = vmatpush.bf16.msra.mxu0 0
        %4294 = vmatpush.bf16.msra.mxu0 0
        %4295 = vmatpush.bf16.msra.mxu0 0
        %4296 = vmatpush.bf16.msra.mxu0 0
        %4297 = vmatpush.bf16.msra.mxu0 0
        %4298 = vmatpush.bf16.msra.mxu0 0
        %4299 = vmatpush.bf16.msra.mxu0 0
        %4300 = vmatpush.bf16.msra.mxu0 %v4288
        %4301 = vmatmul.bf16.gmra.mxu0 %v4285
        %v4302 = vpop.f32.mrf.mxu0
        %v4303 = vadd.f32 0.0, %v4302
        %v4304 = vpop.f32.mrf.mxu0
        %4305 = vdwg.mxu0
        %4306 = vmatpush.bf16.msra.mxu0 0
        %4307 = vmatpush.bf16.msra.mxu0 0
        %4308 = vmatpush.bf16.msra.mxu0 0
        %4309 = vmatpush.bf16.msra.mxu0 0
        %4310 = vmatpush.bf16.msra.mxu0 0
        %4311 = vmatpush.bf16.msra.mxu0 0
        %4312 = vmatpush.bf16.msra.mxu0 0
        %4313 = vmatpush.bf16.msra.mxu0 %v4291
        %4314 = vmatmul.bf16.gmra.mxu0 %v4285
        %v4315 = vpop.f32.mrf.mxu0
        %v4316 = vadd.f32 0.0, %v4315
        %v4317 = vpop.f32.mrf.mxu0
        %4318 = vdwg.mxu0
        %v4320 = vsel %vm1083, %v4227, 0
        %v4323 = vsel %vm1087, %v4225, 0
        %v4326 = vsel %vm1087, %v4226, 0
        %4328 = vmatpush.bf16.msra.mxu0 0
        %4329 = vmatpush.bf16.msra.mxu0 0
        %4330 = vmatpush.bf16.msra.mxu0 0
        %4331 = vmatpush.bf16.msra.mxu0 0
        %4332 = vmatpush.bf16.msra.mxu0 0
        %4333 = vmatpush.bf16.msra.mxu0 0
        %4334 = vmatpush.bf16.msra.mxu0 0
        %4335 = vmatpush.bf16.msra.mxu0 %v4323
        %4336 = vmatmul.bf16.gmra.mxu0 %v4320
        %v4337 = vpop.f32.mrf.mxu0
        %v4338 = vadd.f32 %v4303, %v4337
        %v4339 = vpop.f32.mrf.mxu0
        %4340 = vdwg.mxu0
        %4341 = vmatpush.bf16.msra.mxu0 0
        %4342 = vmatpush.bf16.msra.mxu0 0
        %4343 = vmatpush.bf16.msra.mxu0 0
        %4344 = vmatpush.bf16.msra.mxu0 0
        %4345 = vmatpush.bf16.msra.mxu0 0
        %4346 = vmatpush.bf16.msra.mxu0 0
        %4347 = vmatpush.bf16.msra.mxu0 0
        %4348 = vmatpush.bf16.msra.mxu0 %v4326
        %4349 = vmatmul.bf16.gmra.mxu0 %v4320
        %v4350 = vpop.f32.mrf.mxu0
        %v4351 = vadd.f32 %v4316, %v4350
        %v4352 = vpop.f32.mrf.mxu0
        %4353 = vdwg.mxu0
        %4354 = vmatpush.bf16.msra.mxu0 %v1298
        %4355 = vmatpush.bf16.msra.mxu0 %v1296
        %4356 = vmatpush.bf16.msra.mxu0 %v1294
        %4357 = vmatpush.bf16.msra.mxu0 %v1292
        %4358 = vmatpush.bf16.msra.mxu0 %v1290
        %4359 = vmatpush.bf16.msra.mxu0 %v1288
        %4360 = vmatpush.bf16.msra.mxu0 %v1286
        %4361 = vmatpush.bf16.msra.mxu0 %v1284
        %4362 = vmatmul.bf16.gmra.mxu0 %v4171
        %v4363 = vpop.f32.mrf.mxu0
        %v4364 = vadd.f32 0.0, %v4363
        %v4365 = vpop.f32.mrf.mxu0
        %4366 = vdwg.mxu0
        %4367 = vmatpush.bf16.msra.mxu0 %v1314
        %4368 = vmatpush.bf16.msra.mxu0 %v1312
        %4369 = vmatpush.bf16.msra.mxu0 %v1310
        %4370 = vmatpush.bf16.msra.mxu0 %v1308
        %4371 = vmatpush.bf16.msra.mxu0 %v1306
        %4372 = vmatpush.bf16.msra.mxu0 %v1304
        %4373 = vmatpush.bf16.msra.mxu0 %v1302
        %4374 = vmatpush.bf16.msra.mxu0 %v1300
        %4375 = vmatmul.bf16.gmra.mxu0 %v4172
        %v4376 = vpop.f32.mrf.mxu0
        %v4377 = vadd.f32 %v4364, %v4376
        %v4378 = vpop.f32.mrf.mxu0
        %4379 = vdwg.mxu0
        %4380 = vmatpush.bf16.msra.mxu0 %v1299
        %4381 = vmatpush.bf16.msra.mxu0 %v1297
        %4382 = vmatpush.bf16.msra.mxu0 %v1295
        %4383 = vmatpush.bf16.msra.mxu0 %v1293
        %4384 = vmatpush.bf16.msra.mxu0 %v1291
        %4385 = vmatpush.bf16.msra.mxu0 %v1289
        %4386 = vmatpush.bf16.msra.mxu0 %v1287
        %4387 = vmatpush.bf16.msra.mxu0 %v1285
        %4388 = vmatmul.bf16.gmra.mxu0 %v4171
        %v4389 = vpop.f32.mrf.mxu0
        %v4390 = vadd.f32 0.0, %v4389
        %v4391 = vpop.f32.mrf.mxu0
        %4392 = vdwg.mxu0
        %4393 = vmatpush.bf16.msra.mxu0 %v1315
        %4394 = vmatpush.bf16.msra.mxu0 %v1313
        %4395 = vmatpush.bf16.msra.mxu0 %v1311
        %4396 = vmatpush.bf16.msra.mxu0 %v1309
        %4397 = vmatpush.bf16.msra.mxu0 %v1307
        %4398 = vmatpush.bf16.msra.mxu0 %v1305
        %4399 = vmatpush.bf16.msra.mxu0 %v1303
        %4400 = vmatpush.bf16.msra.mxu0 %v1301
        %4401 = vmatmul.bf16.gmra.mxu0 %v4172
        %v4402 = vpop.f32.mrf.mxu0
        %v4403 = vadd.f32 %v4390, %v4402
        %v4404 = vpop.f32.mrf.mxu0
        %4405 = vdwg.mxu0
        %v4406 = vpack.c.bf16 %v4377, %v4377
        %v4407 = vpack.c.bf16 %v4403, %v4403
        %s4408 = scalar_lea.vmem [#allocation16], 8
        %v4409 = vld [vmem:[%s4408] sm:$0xf]
        %v4411 = vsel %vm1083, %v4409, 0
        %v4414 = vsel %vm1087, %v4406, 0
        %v4417 = vsel %vm1087, %v4407, 0
        %4419 = vmatpush.bf16.msra.mxu0 0
        %4420 = vmatpush.bf16.msra.mxu0 0
        %4421 = vmatpush.bf16.msra.mxu0 0
        %4422 = vmatpush.bf16.msra.mxu0 0
        %4423 = vmatpush.bf16.msra.mxu0 0
        %4424 = vmatpush.bf16.msra.mxu0 0
        %4425 = vmatpush.bf16.msra.mxu0 0
        %4426 = vmatpush.bf16.msra.mxu0 %v4414
        %4427 = vmatmul.bf16.gmra.mxu0 %v4411
        %v4428 = vpop.f32.mrf.mxu0
        %v4429 = vadd.f32 0.0, %v4428
        %v4430 = vpop.f32.mrf.mxu0
        %4431 = vdwg.mxu0
        %4432 = vmatpush.bf16.msra.mxu0 0
        %4433 = vmatpush.bf16.msra.mxu0 0
        %4434 = vmatpush.bf16.msra.mxu0 0
        %4435 = vmatpush.bf16.msra.mxu0 0
        %4436 = vmatpush.bf16.msra.mxu0 0
        %4437 = vmatpush.bf16.msra.mxu0 0
        %4438 = vmatpush.bf16.msra.mxu0 0
        %4439 = vmatpush.bf16.msra.mxu0 %v4417
        %4440 = vmatmul.bf16.gmra.mxu0 %v4411
        %v4441 = vpop.f32.mrf.mxu0
        %v4442 = vadd.f32 0.0, %v4441
        %v4443 = vpop.f32.mrf.mxu0
        %4444 = vdwg.mxu0
        %v4445 = vadd.f32 %v4338, %v4429
        %v4446 = vadd.f32 %v4351, %v4442
        %4447 = vmatpush.bf16.msra.mxu0 %v1584
        %4448 = vmatpush.bf16.msra.mxu0 %v1582
        %4449 = vmatpush.bf16.msra.mxu0 %v1580
        %4450 = vmatpush.bf16.msra.mxu0 %v1578
        %4451 = vmatpush.bf16.msra.mxu0 %v1576
        %4452 = vmatpush.bf16.msra.mxu0 %v1574
        %4453 = vmatpush.bf16.msra.mxu0 %v1572
        %4454 = vmatpush.bf16.msra.mxu0 %v1570
        %4455 = vmatmul.bf16.gmra.mxu0 %v4171
        %v4456 = vpop.f32.mrf.mxu0
        %v4457 = vadd.f32 0.0, %v4456
        %v4458 = vpop.f32.mrf.mxu0
        %4459 = vdwg.mxu0
        %4460 = vmatpush.bf16.msra.mxu0 %v1600
        %4461 = vmatpush.bf16.msra.mxu0 %v1598
        %4462 = vmatpush.bf16.msra.mxu0 %v1596
        %4463 = vmatpush.bf16.msra.mxu0 %v1594
        %4464 = vmatpush.bf16.msra.mxu0 %v1592
        %4465 = vmatpush.bf16.msra.mxu0 %v1590
        %4466 = vmatpush.bf16.msra.mxu0 %v1588
        %4467 = vmatpush.bf16.msra.mxu0 %v1586
        %4468 = vmatmul.bf16.gmra.mxu0 %v4172
        %v4469 = vpop.f32.mrf.mxu0
        %v4470 = vadd.f32 %v4457, %v4469
        %v4471 = vpop.f32.mrf.mxu0
        %4472 = vdwg.mxu0
        %4473 = vmatpush.bf16.msra.mxu0 %v1585
        %4474 = vmatpush.bf16.msra.mxu0 %v1583
        %4475 = vmatpush.bf16.msra.mxu0 %v1581
        %4476 = vmatpush.bf16.msra.mxu0 %v1579
        %4477 = vmatpush.bf16.msra.mxu0 %v1577
        %4478 = vmatpush.bf16.msra.mxu0 %v1575
        %4479 = vmatpush.bf16.msra.mxu0 %v1573
        %4480 = vmatpush.bf16.msra.mxu0 %v1571
        %4481 = vmatmul.bf16.gmra.mxu0 %v4171
        %v4482 = vpop.f32.mrf.mxu0
        %v4483 = vadd.f32 0.0, %v4482
        %v4484 = vpop.f32.mrf.mxu0
        %4485 = vdwg.mxu0
        %4486 = vmatpush.bf16.msra.mxu0 %v1601
        %4487 = vmatpush.bf16.msra.mxu0 %v1599
        %4488 = vmatpush.bf16.msra.mxu0 %v1597
        %4489 = vmatpush.bf16.msra.mxu0 %v1595
        %4490 = vmatpush.bf16.msra.mxu0 %v1593
        %4491 = vmatpush.bf16.msra.mxu0 %v1591
        %4492 = vmatpush.bf16.msra.mxu0 %v1589
        %4493 = vmatpush.bf16.msra.mxu0 %v1587
        %4494 = vmatmul.bf16.gmra.mxu0 %v4172
        %v4495 = vpop.f32.mrf.mxu0
        %v4496 = vadd.f32 %v4483, %v4495
        %v4497 = vpop.f32.mrf.mxu0
        %4498 = vdwg.mxu0
        %v4499 = vpack.c.bf16 %v4470, %v4470
        %v4500 = vpack.c.bf16 %v4496, %v4496
        %s4501 = scalar_lea.vmem [#allocation16], 12
        %v4502 = vld [vmem:[%s4501] sm:$0xf]
        %v4504 = vsel %vm1083, %v4502, 0
        %v4507 = vsel %vm1087, %v4499, 0
        %v4510 = vsel %vm1087, %v4500, 0
        %4512 = vmatpush.bf16.msra.mxu0 0
        %4513 = vmatpush.bf16.msra.mxu0 0
        %4514 = vmatpush.bf16.msra.mxu0 0
        %4515 = vmatpush.bf16.msra.mxu0 0
        %4516 = vmatpush.bf16.msra.mxu0 0
        %4517 = vmatpush.bf16.msra.mxu0 0
        %4518 = vmatpush.bf16.msra.mxu0 0
        %4519 = vmatpush.bf16.msra.mxu0 %v4507
        %4520 = vmatmul.bf16.gmra.mxu0 %v4504
        %v4521 = vpop.f32.mrf.mxu0
        %v4522 = vadd.f32 0.0, %v4521
        %v4523 = vpop.f32.mrf.mxu0
        %4524 = vdwg.mxu0
        %4525 = vmatpush.bf16.msra.mxu0 0
        %4526 = vmatpush.bf16.msra.mxu0 0
        %4527 = vmatpush.bf16.msra.mxu0 0
        %4528 = vmatpush.bf16.msra.mxu0 0
        %4529 = vmatpush.bf16.msra.mxu0 0
        %4530 = vmatpush.bf16.msra.mxu0 0
        %4531 = vmatpush.bf16.msra.mxu0 0
        %4532 = vmatpush.bf16.msra.mxu0 %v4510
        %4533 = vmatmul.bf16.gmra.mxu0 %v4504
        %v4534 = vpop.f32.mrf.mxu0
        %v4535 = vadd.f32 0.0, %v4534
        %v4536 = vpop.f32.mrf.mxu0
        %4537 = vdwg.mxu0
        %v4538 = vadd.f32 %v4445, %v4522
        %v4539 = vadd.f32 %v4446, %v4535
        %4540 = vmatpush.bf16.msra.mxu0 %v1870
        %4541 = vmatpush.bf16.msra.mxu0 %v1868
        %4542 = vmatpush.bf16.msra.mxu0 %v1866
        %4543 = vmatpush.bf16.msra.mxu0 %v1864
        %4544 = vmatpush.bf16.msra.mxu0 %v1862
        %4545 = vmatpush.bf16.msra.mxu0 %v1860
        %4546 = vmatpush.bf16.msra.mxu0 %v1858
        %4547 = vmatpush.bf16.msra.mxu0 %v1856
        %4548 = vmatmul.bf16.gmra.mxu0 %v4171
        %v4549 = vpop.f32.mrf.mxu0
        %v4550 = vadd.f32 0.0, %v4549
        %v4551 = vpop.f32.mrf.mxu0
        %4552 = vdwg.mxu0
        %4553 = vmatpush.bf16.msra.mxu0 %v1886
        %4554 = vmatpush.bf16.msra.mxu0 %v1884
        %4555 = vmatpush.bf16.msra.mxu0 %v1882
        %4556 = vmatpush.bf16.msra.mxu0 %v1880
        %4557 = vmatpush.bf16.msra.mxu0 %v1878
        %4558 = vmatpush.bf16.msra.mxu0 %v1876
        %4559 = vmatpush.bf16.msra.mxu0 %v1874
        %4560 = vmatpush.bf16.msra.mxu0 %v1872
        %4561 = vmatmul.bf16.gmra.mxu0 %v4172
        %v4562 = vpop.f32.mrf.mxu0
        %v4563 = vadd.f32 %v4550, %v4562
        %v4564 = vpop.f32.mrf.mxu0
        %4565 = vdwg.mxu0
        %4566 = vmatpush.bf16.msra.mxu0 %v1871
        %4567 = vmatpush.bf16.msra.mxu0 %v1869
        %4568 = vmatpush.bf16.msra.mxu0 %v1867
        %4569 = vmatpush.bf16.msra.mxu0 %v1865
        %4570 = vmatpush.bf16.msra.mxu0 %v1863
        %4571 = vmatpush.bf16.msra.mxu0 %v1861
        %4572 = vmatpush.bf16.msra.mxu0 %v1859
        %4573 = vmatpush.bf16.msra.mxu0 %v1857
        %4574 = vmatmul.bf16.gmra.mxu0 %v4171
        %v4575 = vpop.f32.mrf.mxu0
        %v4576 = vadd.f32 0.0, %v4575
        %v4577 = vpop.f32.mrf.mxu0
        %4578 = vdwg.mxu0
        %4579 = vmatpush.bf16.msra.mxu0 %v1887
        %4580 = vmatpush.bf16.msra.mxu0 %v1885
        %4581 = vmatpush.bf16.msra.mxu0 %v1883
        %4582 = vmatpush.bf16.msra.mxu0 %v1881
        %4583 = vmatpush.bf16.msra.mxu0 %v1879
        %4584 = vmatpush.bf16.msra.mxu0 %v1877
        %4585 = vmatpush.bf16.msra.mxu0 %v1875
        %4586 = vmatpush.bf16.msra.mxu0 %v1873
        %4587 = vmatmul.bf16.gmra.mxu0 %v4172
        %v4588 = vpop.f32.mrf.mxu0
        %v4589 = vadd.f32 %v4576, %v4588
        %v4590 = vpop.f32.mrf.mxu0
        %4591 = vdwg.mxu0
        %v4592 = vpack.c.bf16 %v4563, %v4563
        %v4593 = vpack.c.bf16 %v4589, %v4589
        %s4594 = scalar_lea.vmem [#allocation16], 16
        %v4595 = vld [vmem:[%s4594] sm:$0xf]
        %v4597 = vsel %vm1083, %v4595, 0
        %v4600 = vsel %vm1087, %v4592, 0
        %v4603 = vsel %vm1087, %v4593, 0
        %4605 = vmatpush.bf16.msra.mxu0 0
        %4606 = vmatpush.bf16.msra.mxu0 0
        %4607 = vmatpush.bf16.msra.mxu0 0
        %4608 = vmatpush.bf16.msra.mxu0 0
        %4609 = vmatpush.bf16.msra.mxu0 0
        %4610 = vmatpush.bf16.msra.mxu0 0
        %4611 = vmatpush.bf16.msra.mxu0 0
        %4612 = vmatpush.bf16.msra.mxu0 %v4600
        %4613 = vmatmul.bf16.gmra.mxu0 %v4597
        %v4614 = vpop.f32.mrf.mxu0
        %v4615 = vadd.f32 0.0, %v4614
        %v4616 = vpop.f32.mrf.mxu0
        %4617 = vdwg.mxu0
        %4618 = vmatpush.bf16.msra.mxu0 0
        %4619 = vmatpush.bf16.msra.mxu0 0
        %4620 = vmatpush.bf16.msra.mxu0 0
        %4621 = vmatpush.bf16.msra.mxu0 0
        %4622 = vmatpush.bf16.msra.mxu0 0
        %4623 = vmatpush.bf16.msra.mxu0 0
        %4624 = vmatpush.bf16.msra.mxu0 0
        %4625 = vmatpush.bf16.msra.mxu0 %v4603
        %4626 = vmatmul.bf16.gmra.mxu0 %v4597
        %v4627 = vpop.f32.mrf.mxu0
        %v4628 = vadd.f32 0.0, %v4627
        %v4629 = vpop.f32.mrf.mxu0
        %4630 = vdwg.mxu0
        %v4631 = vadd.f32 %v4538, %v4615
        %v4632 = vadd.f32 %v4539, %v4628
        %4633 = vmatpush.bf16.msra.mxu0 %v2156
        %4634 = vmatpush.bf16.msra.mxu0 %v2154
        %4635 = vmatpush.bf16.msra.mxu0 %v2152
        %4636 = vmatpush.bf16.msra.mxu0 %v2150
        %4637 = vmatpush.bf16.msra.mxu0 %v2148
        %4638 = vmatpush.bf16.msra.mxu0 %v2146
        %4639 = vmatpush.bf16.msra.mxu0 %v2144
        %4640 = vmatpush.bf16.msra.mxu0 %v2142
        %4641 = vmatmul.bf16.gmra.mxu0 %v4171
        %v4642 = vpop.f32.mrf.mxu0
        %v4643 = vadd.f32 0.0, %v4642
        %v4644 = vpop.f32.mrf.mxu0
        %4645 = vdwg.mxu0
        %4646 = vmatpush.bf16.msra.mxu0 %v2172
        %4647 = vmatpush.bf16.msra.mxu0 %v2170
        %4648 = vmatpush.bf16.msra.mxu0 %v2168
        %4649 = vmatpush.bf16.msra.mxu0 %v2166
        %4650 = vmatpush.bf16.msra.mxu0 %v2164
        %4651 = vmatpush.bf16.msra.mxu0 %v2162
        %4652 = vmatpush.bf16.msra.mxu0 %v2160
        %4653 = vmatpush.bf16.msra.mxu0 %v2158
        %4654 = vmatmul.bf16.gmra.mxu0 %v4172
        %v4655 = vpop.f32.mrf.mxu0
        %v4656 = vadd.f32 %v4643, %v4655
        %v4657 = vpop.f32.mrf.mxu0
        %4658 = vdwg.mxu0
        %4659 = vmatpush.bf16.msra.mxu0 %v2157
        %4660 = vmatpush.bf16.msra.mxu0 %v2155
        %4661 = vmatpush.bf16.msra.mxu0 %v2153
        %4662 = vmatpush.bf16.msra.mxu0 %v2151
        %4663 = vmatpush.bf16.msra.mxu0 %v2149
        %4664 = vmatpush.bf16.msra.mxu0 %v2147
        %4665 = vmatpush.bf16.msra.mxu0 %v2145
        %4666 = vmatpush.bf16.msra.mxu0 %v2143
        %4667 = vmatmul.bf16.gmra.mxu0 %v4171
        %v4668 = vpop.f32.mrf.mxu0
        %v4669 = vadd.f32 0.0, %v4668
        %v4670 = vpop.f32.mrf.mxu0
        %4671 = vdwg.mxu0
        %4672 = vmatpush.bf16.msra.mxu0 %v2173
        %4673 = vmatpush.bf16.msra.mxu0 %v2171
        %4674 = vmatpush.bf16.msra.mxu0 %v2169
        %4675 = vmatpush.bf16.msra.mxu0 %v2167
        %4676 = vmatpush.bf16.msra.mxu0 %v2165
        %4677 = vmatpush.bf16.msra.mxu0 %v2163
        %4678 = vmatpush.bf16.msra.mxu0 %v2161
        %4679 = vmatpush.bf16.msra.mxu0 %v2159
        %4680 = vmatmul.bf16.gmra.mxu0 %v4172
        %v4681 = vpop.f32.mrf.mxu0
        %v4682 = vadd.f32 %v4669, %v4681
        %v4683 = vpop.f32.mrf.mxu0
        %4684 = vdwg.mxu0
        %v4685 = vpack.c.bf16 %v4656, %v4656
        %v4686 = vpack.c.bf16 %v4682, %v4682
        %s4687 = scalar_lea.vmem [#allocation16], 20
        %v4688 = vld [vmem:[%s4687] sm:$0xf]
        %v4690 = vsel %vm1083, %v4688, 0
        %v4693 = vsel %vm1087, %v4685, 0
        %v4696 = vsel %vm1087, %v4686, 0
        %4698 = vmatpush.bf16.msra.mxu0 0
        %4699 = vmatpush.bf16.msra.mxu0 0
        %4700 = vmatpush.bf16.msra.mxu0 0
        %4701 = vmatpush.bf16.msra.mxu0 0
        %4702 = vmatpush.bf16.msra.mxu0 0
        %4703 = vmatpush.bf16.msra.mxu0 0
        %4704 = vmatpush.bf16.msra.mxu0 0
        %4705 = vmatpush.bf16.msra.mxu0 %v4693
        %4706 = vmatmul.bf16.gmra.mxu0 %v4690
        %v4707 = vpop.f32.mrf.mxu0
        %v4708 = vadd.f32 0.0, %v4707
        %v4709 = vpop.f32.mrf.mxu0
        %4710 = vdwg.mxu0
        %4711 = vmatpush.bf16.msra.mxu0 0
        %4712 = vmatpush.bf16.msra.mxu0 0
        %4713 = vmatpush.bf16.msra.mxu0 0
        %4714 = vmatpush.bf16.msra.mxu0 0
        %4715 = vmatpush.bf16.msra.mxu0 0
        %4716 = vmatpush.bf16.msra.mxu0 0
        %4717 = vmatpush.bf16.msra.mxu0 0
        %4718 = vmatpush.bf16.msra.mxu0 %v4696
        %4719 = vmatmul.bf16.gmra.mxu0 %v4690
        %v4720 = vpop.f32.mrf.mxu0
        %v4721 = vadd.f32 0.0, %v4720
        %v4722 = vpop.f32.mrf.mxu0
        %4723 = vdwg.mxu0
        %v4724 = vadd.f32 %v4631, %v4708
        %v4725 = vadd.f32 %v4632, %v4721
        %4726 = vmatpush.bf16.msra.mxu0 %v2442
        %4727 = vmatpush.bf16.msra.mxu0 %v2440
        %4728 = vmatpush.bf16.msra.mxu0 %v2438
        %4729 = vmatpush.bf16.msra.mxu0 %v2436
        %4730 = vmatpush.bf16.msra.mxu0 %v2434
        %4731 = vmatpush.bf16.msra.mxu0 %v2432
        %4732 = vmatpush.bf16.msra.mxu0 %v2430
        %4733 = vmatpush.bf16.msra.mxu0 %v2428
        %4734 = vmatmul.bf16.gmra.mxu0 %v4171
        %v4735 = vpop.f32.mrf.mxu0
        %v4736 = vadd.f32 0.0, %v4735
        %v4737 = vpop.f32.mrf.mxu0
        %4738 = vdwg.mxu0
        %4739 = vmatpush.bf16.msra.mxu0 %v2458
        %4740 = vmatpush.bf16.msra.mxu0 %v2456
        %4741 = vmatpush.bf16.msra.mxu0 %v2454
        %4742 = vmatpush.bf16.msra.mxu0 %v2452
        %4743 = vmatpush.bf16.msra.mxu0 %v2450
        %4744 = vmatpush.bf16.msra.mxu0 %v2448
        %4745 = vmatpush.bf16.msra.mxu0 %v2446
        %4746 = vmatpush.bf16.msra.mxu0 %v2444
        %4747 = vmatmul.bf16.gmra.mxu0 %v4172
        %v4748 = vpop.f32.mrf.mxu0
        %v4749 = vadd.f32 %v4736, %v4748
        %v4750 = vpop.f32.mrf.mxu0
        %4751 = vdwg.mxu0
        %4752 = vmatpush.bf16.msra.mxu0 %v2443
        %4753 = vmatpush.bf16.msra.mxu0 %v2441
        %4754 = vmatpush.bf16.msra.mxu0 %v2439
        %4755 = vmatpush.bf16.msra.mxu0 %v2437
        %4756 = vmatpush.bf16.msra.mxu0 %v2435
        %4757 = vmatpush.bf16.msra.mxu0 %v2433
        %4758 = vmatpush.bf16.msra.mxu0 %v2431
        %4759 = vmatpush.bf16.msra.mxu0 %v2429
        %4760 = vmatmul.bf16.gmra.mxu0 %v4171
        %v4761 = vpop.f32.mrf.mxu0
        %v4762 = vadd.f32 0.0, %v4761
        %v4763 = vpop.f32.mrf.mxu0
        %4764 = vdwg.mxu0
        %4765 = vmatpush.bf16.msra.mxu0 %v2459
        %4766 = vmatpush.bf16.msra.mxu0 %v2457
        %4767 = vmatpush.bf16.msra.mxu0 %v2455
        %4768 = vmatpush.bf16.msra.mxu0 %v2453
        %4769 = vmatpush.bf16.msra.mxu0 %v2451
        %4770 = vmatpush.bf16.msra.mxu0 %v2449
        %4771 = vmatpush.bf16.msra.mxu0 %v2447
        %4772 = vmatpush.bf16.msra.mxu0 %v2445
        %4773 = vmatmul.bf16.gmra.mxu0 %v4172
        %v4774 = vpop.f32.mrf.mxu0
        %v4775 = vadd.f32 %v4762, %v4774
        %v4776 = vpop.f32.mrf.mxu0
        %4777 = vdwg.mxu0
        %v4778 = vpack.c.bf16 %v4749, %v4749
        %v4779 = vpack.c.bf16 %v4775, %v4775
        %s4780 = scalar_lea.vmem [#allocation16], 24
        %v4781 = vld [vmem:[%s4780] sm:$0xf]
        %v4783 = vsel %vm1083, %v4781, 0
        %v4786 = vsel %vm1087, %v4778, 0
        %v4789 = vsel %vm1087, %v4779, 0
        %4791 = vmatpush.bf16.msra.mxu0 0
        %4792 = vmatpush.bf16.msra.mxu0 0
        %4793 = vmatpush.bf16.msra.mxu0 0
        %4794 = vmatpush.bf16.msra.mxu0 0
        %4795 = vmatpush.bf16.msra.mxu0 0
        %4796 = vmatpush.bf16.msra.mxu0 0
        %4797 = vmatpush.bf16.msra.mxu0 0
        %4798 = vmatpush.bf16.msra.mxu0 %v4786
        %4799 = vmatmul.bf16.gmra.mxu0 %v4783
        %v4800 = vpop.f32.mrf.mxu0
        %v4801 = vadd.f32 0.0, %v4800
        %v4802 = vpop.f32.mrf.mxu0
        %4803 = vdwg.mxu0
        %4804 = vmatpush.bf16.msra.mxu0 0
        %4805 = vmatpush.bf16.msra.mxu0 0
        %4806 = vmatpush.bf16.msra.mxu0 0
        %4807 = vmatpush.bf16.msra.mxu0 0
        %4808 = vmatpush.bf16.msra.mxu0 0
        %4809 = vmatpush.bf16.msra.mxu0 0
        %4810 = vmatpush.bf16.msra.mxu0 0
        %4811 = vmatpush.bf16.msra.mxu0 %v4789
        %4812 = vmatmul.bf16.gmra.mxu0 %v4783
        %v4813 = vpop.f32.mrf.mxu0
        %v4814 = vadd.f32 0.0, %v4813
        %v4815 = vpop.f32.mrf.mxu0
        %4816 = vdwg.mxu0
        %v4817 = vadd.f32 %v4724, %v4801
        %v4818 = vadd.f32 %v4725, %v4814
        %4819 = vmatpush.bf16.msra.mxu0 %v2728
        %4820 = vmatpush.bf16.msra.mxu0 %v2726
        %4821 = vmatpush.bf16.msra.mxu0 %v2724
        %4822 = vmatpush.bf16.msra.mxu0 %v2722
        %4823 = vmatpush.bf16.msra.mxu0 %v2720
        %4824 = vmatpush.bf16.msra.mxu0 %v2718
        %4825 = vmatpush.bf16.msra.mxu0 %v2716
        %4826 = vmatpush.bf16.msra.mxu0 %v2714
        %4827 = vmatmul.bf16.gmra.mxu0 %v4171
        %v4828 = vpop.f32.mrf.mxu0
        %v4829 = vadd.f32 0.0, %v4828
        %v4830 = vpop.f32.mrf.mxu0
        %4831 = vdwg.mxu0
        %4832 = vmatpush.bf16.msra.mxu0 %v2744
        %4833 = vmatpush.bf16.msra.mxu0 %v2742
        %4834 = vmatpush.bf16.msra.mxu0 %v2740
        %4835 = vmatpush.bf16.msra.mxu0 %v2738
        %4836 = vmatpush.bf16.msra.mxu0 %v2736
        %4837 = vmatpush.bf16.msra.mxu0 %v2734
        %4838 = vmatpush.bf16.msra.mxu0 %v2732
        %4839 = vmatpush.bf16.msra.mxu0 %v2730
        %4840 = vmatmul.bf16.gmra.mxu0 %v4172
        %v4841 = vpop.f32.mrf.mxu0
        %v4842 = vadd.f32 %v4829, %v4841
        %v4843 = vpop.f32.mrf.mxu0
        %4844 = vdwg.mxu0
        %4845 = vmatpush.bf16.msra.mxu0 %v2729
        %4846 = vmatpush.bf16.msra.mxu0 %v2727
        %4847 = vmatpush.bf16.msra.mxu0 %v2725
        %4848 = vmatpush.bf16.msra.mxu0 %v2723
        %4849 = vmatpush.bf16.msra.mxu0 %v2721
        %4850 = vmatpush.bf16.msra.mxu0 %v2719
        %4851 = vmatpush.bf16.msra.mxu0 %v2717
        %4852 = vmatpush.bf16.msra.mxu0 %v2715
        %4853 = vmatmul.bf16.gmra.mxu0 %v4171
        %v4854 = vpop.f32.mrf.mxu0
        %v4855 = vadd.f32 0.0, %v4854
        %v4856 = vpop.f32.mrf.mxu0
        %4857 = vdwg.mxu0
        %4858 = vmatpush.bf16.msra.mxu0 %v2745
        %4859 = vmatpush.bf16.msra.mxu0 %v2743
        %4860 = vmatpush.bf16.msra.mxu0 %v2741
        %4861 = vmatpush.bf16.msra.mxu0 %v2739
        %4862 = vmatpush.bf16.msra.mxu0 %v2737
        %4863 = vmatpush.bf16.msra.mxu0 %v2735
        %4864 = vmatpush.bf16.msra.mxu0 %v2733
        %4865 = vmatpush.bf16.msra.mxu0 %v2731
        %4866 = vmatmul.bf16.gmra.mxu0 %v4172
        %v4867 = vpop.f32.mrf.mxu0
        %v4868 = vadd.f32 %v4855, %v4867
        %v4869 = vpop.f32.mrf.mxu0
        %4870 = vdwg.mxu0
        %v4871 = vpack.c.bf16 %v4842, %v4842
        %v4872 = vpack.c.bf16 %v4868, %v4868
        %s4873 = scalar_lea.vmem [#allocation16], 28
        %v4874 = vld [vmem:[%s4873] sm:$0xf]
        %v4876 = vsel %vm1083, %v4874, 0
        %v4879 = vsel %vm1087, %v4871, 0
        %v4882 = vsel %vm1087, %v4872, 0
        %4884 = vmatpush.bf16.msra.mxu0 0
        %4885 = vmatpush.bf16.msra.mxu0 0
        %4886 = vmatpush.bf16.msra.mxu0 0
        %4887 = vmatpush.bf16.msra.mxu0 0
        %4888 = vmatpush.bf16.msra.mxu0 0
        %4889 = vmatpush.bf16.msra.mxu0 0
        %4890 = vmatpush.bf16.msra.mxu0 0
        %4891 = vmatpush.bf16.msra.mxu0 %v4879
        %4892 = vmatmul.bf16.gmra.mxu0 %v4876
        %v4893 = vpop.f32.mrf.mxu0
        %v4894 = vadd.f32 0.0, %v4893
        %v4895 = vpop.f32.mrf.mxu0
        %4896 = vdwg.mxu0
        %4897 = vmatpush.bf16.msra.mxu0 0
        %4898 = vmatpush.bf16.msra.mxu0 0
        %4899 = vmatpush.bf16.msra.mxu0 0
        %4900 = vmatpush.bf16.msra.mxu0 0
        %4901 = vmatpush.bf16.msra.mxu0 0
        %4902 = vmatpush.bf16.msra.mxu0 0
        %4903 = vmatpush.bf16.msra.mxu0 0
        %4904 = vmatpush.bf16.msra.mxu0 %v4882
        %4905 = vmatmul.bf16.gmra.mxu0 %v4876
        %v4906 = vpop.f32.mrf.mxu0
        %v4907 = vadd.f32 0.0, %v4906
        %v4908 = vpop.f32.mrf.mxu0
        %4909 = vdwg.mxu0
        %v4910 = vadd.f32 %v4817, %v4894
        %v4911 = vadd.f32 %v4818, %v4907
        %4912 = vmatpush.bf16.msra.mxu0 %v3014
        %4913 = vmatpush.bf16.msra.mxu0 %v3012
        %4914 = vmatpush.bf16.msra.mxu0 %v3010
        %4915 = vmatpush.bf16.msra.mxu0 %v3008
        %4916 = vmatpush.bf16.msra.mxu0 %v3006
        %4917 = vmatpush.bf16.msra.mxu0 %v3004
        %4918 = vmatpush.bf16.msra.mxu0 %v3002
        %4919 = vmatpush.bf16.msra.mxu0 %v3000
        %4920 = vmatmul.bf16.gmra.mxu0 %v4171
        %v4921 = vpop.f32.mrf.mxu0
        %v4922 = vadd.f32 0.0, %v4921
        %v4923 = vpop.f32.mrf.mxu0
        %4924 = vdwg.mxu0
        %4925 = vmatpush.bf16.msra.mxu0 %v3030
        %4926 = vmatpush.bf16.msra.mxu0 %v3028
        %4927 = vmatpush.bf16.msra.mxu0 %v3026
        %4928 = vmatpush.bf16.msra.mxu0 %v3024
        %4929 = vmatpush.bf16.msra.mxu0 %v3022
        %4930 = vmatpush.bf16.msra.mxu0 %v3020
        %4931 = vmatpush.bf16.msra.mxu0 %v3018
        %4932 = vmatpush.bf16.msra.mxu0 %v3016
        %4933 = vmatmul.bf16.gmra.mxu0 %v4172
        %v4934 = vpop.f32.mrf.mxu0
        %v4935 = vadd.f32 %v4922, %v4934
        %v4936 = vpop.f32.mrf.mxu0
        %4937 = vdwg.mxu0
        %4938 = vmatpush.bf16.msra.mxu0 %v3015
        %4939 = vmatpush.bf16.msra.mxu0 %v3013
        %4940 = vmatpush.bf16.msra.mxu0 %v3011
        %4941 = vmatpush.bf16.msra.mxu0 %v3009
        %4942 = vmatpush.bf16.msra.mxu0 %v3007
        %4943 = vmatpush.bf16.msra.mxu0 %v3005
        %4944 = vmatpush.bf16.msra.mxu0 %v3003
        %4945 = vmatpush.bf16.msra.mxu0 %v3001
        %4946 = vmatmul.bf16.gmra.mxu0 %v4171
        %v4947 = vpop.f32.mrf.mxu0
        %v4948 = vadd.f32 0.0, %v4947
        %v4949 = vpop.f32.mrf.mxu0
        %4950 = vdwg.mxu0
        %4951 = vmatpush.bf16.msra.mxu0 %v3031
        %4952 = vmatpush.bf16.msra.mxu0 %v3029
        %4953 = vmatpush.bf16.msra.mxu0 %v3027
        %4954 = vmatpush.bf16.msra.mxu0 %v3025
        %4955 = vmatpush.bf16.msra.mxu0 %v3023
        %4956 = vmatpush.bf16.msra.mxu0 %v3021
        %4957 = vmatpush.bf16.msra.mxu0 %v3019
        %4958 = vmatpush.bf16.msra.mxu0 %v3017
        %4959 = vmatmul.bf16.gmra.mxu0 %v4172
        %v4960 = vpop.f32.mrf.mxu0
        %v4961 = vadd.f32 %v4948, %v4960
        %v4962 = vpop.f32.mrf.mxu0
        %4963 = vdwg.mxu0
        %v4964 = vpack.c.bf16 %v4935, %v4935
        %v4965 = vpack.c.bf16 %v4961, %v4961
        %s4966 = scalar_lea.vmem [#allocation16], 32
        %v4967 = vld [vmem:[%s4966] sm:$0xf]
        %v4969 = vsel %vm1083, %v4967, 0
        %v4972 = vsel %vm1087, %v4964, 0
        %v4975 = vsel %vm1087, %v4965, 0
        %4977 = vmatpush.bf16.msra.mxu0 0
        %4978 = vmatpush.bf16.msra.mxu0 0
        %4979 = vmatpush.bf16.msra.mxu0 0
        %4980 = vmatpush.bf16.msra.mxu0 0
        %4981 = vmatpush.bf16.msra.mxu0 0
        %4982 = vmatpush.bf16.msra.mxu0 0
        %4983 = vmatpush.bf16.msra.mxu0 0
        %4984 = vmatpush.bf16.msra.mxu0 %v4972
        %4985 = vmatmul.bf16.gmra.mxu0 %v4969
        %v4986 = vpop.f32.mrf.mxu0
        %v4987 = vadd.f32 0.0, %v4986
        %v4988 = vpop.f32.mrf.mxu0
        %4989 = vdwg.mxu0
        %4990 = vmatpush.bf16.msra.mxu0 0
        %4991 = vmatpush.bf16.msra.mxu0 0
        %4992 = vmatpush.bf16.msra.mxu0 0
        %4993 = vmatpush.bf16.msra.mxu0 0
        %4994 = vmatpush.bf16.msra.mxu0 0
        %4995 = vmatpush.bf16.msra.mxu0 0
        %4996 = vmatpush.bf16.msra.mxu0 0
        %4997 = vmatpush.bf16.msra.mxu0 %v4975
        %4998 = vmatmul.bf16.gmra.mxu0 %v4969
        %v4999 = vpop.f32.mrf.mxu0
        %v5000 = vadd.f32 0.0, %v4999
        %v5001 = vpop.f32.mrf.mxu0
        %5002 = vdwg.mxu0
        %v5003 = vadd.f32 %v4910, %v4987
        %v5004 = vadd.f32 %v4911, %v5000
        %v5005 = vld [vmem:[#allocation18] sm:$0xff]
        %5007 = vset.pattern.permute.xlu0 0
        %5008 = vperm.xlu0 %5007, %v5005
        %v5009 = vpop.permute.xlu0 %5008
        %v5011 = vadd.f32 %v5003, %v5009
        %v5012 = vadd.f32 %v5004, %v5009
        %v5013 = vxor.u32 %v5011, 2147483648
        %v5014 = vxor.u32 %v5012, 2147483648
        %v5015 = vmul.f32 %v5013, 1.442695
        %v5016 = vpow.pop %v5015
        %v5017 = vmul.f32 %v5014, 1.442695
        %v5018 = vpow.pop %v5017
        %v5019 = vadd.f32 %v5016, 1.0
        %v5020 = vadd.f32 %v5018, 1.0
        %v5021 = vrcp.pop %v5019
        %v5022 = vmul.f32 %v5019, %v5021
        %v5023 = vsub.f32 1.0, %v5022
        %v5024 = vmul.f32 %v5021, %v5023
        %v5025 = vadd.f32 %v5021, %v5024
        %vm5026 = vweird.f32 %v5019
        %vm5027 = vweird.f32 %v5021
        %vm5028 = vmor %vm5026, %vm5027
        %v5029 = vsel %vm5028, %v5021, %v5025
        %v5030 = vand.u32 2147483647, %v5019
        %vm5031 = vcmp.eq.f32.partialorder %v5030, 8.507059e+37
        %v5032 = vand.u32 %v5019, 2147483648
        %v5033 = vor.u32 1.1754944e-38, %v5032
        %v5034 = vsel %vm5031, %v5033, %v5029
        %v5035 = vmul.f32 1.0, %v5034
        %v5036 = vrcp.pop %v5020
        %v5037 = vmul.f32 %v5020, %v5036
        %v5038 = vsub.f32 1.0, %v5037
        %v5039 = vmul.f32 %v5036, %v5038
        %v5040 = vadd.f32 %v5036, %v5039
        %vm5041 = vweird.f32 %v5020
        %vm5042 = vweird.f32 %v5036
        %vm5043 = vmor %vm5041, %vm5042
        %v5044 = vsel %vm5043, %v5036, %v5040
        %v5045 = vand.u32 2147483647, %v5020
        %vm5046 = vcmp.eq.f32.partialorder %v5045, 8.507059e+37
        %v5047 = vand.u32 %v5020, 2147483648
        %v5048 = vor.u32 1.1754944e-38, %v5047
        %v5049 = vsel %vm5046, %v5048, %v5044
        %v5050 = vmul.f32 1.0, %v5049
        %v5051 = vmul.f32 %v5011, %v5035
        %v5052 = vmul.f32 %v5012, %v5050
        %5053 = vst [vmem:[%s581] sm:$0xff] %v5051
        %5054 = vst [vmem:[%s581 + $0x8] sm:$0xff] %v5052
        %p5055 = scmp.lt.s32.totalorder %s29, 1
        %s5056 = scalar_select %p5055, %s29, 1
        %s5057 = smul.addr %s5056, 2
        %s5058 = smul.addr %s5057, 8
        %s5059 = scalar_lea.vmem %s12, %s5058
        // Predicated region
        $region113: #{apply.1} parent=67 // pred_check
          %p5060 = pneg %p304
        $region114: #{apply.1} parent=67 // pred_check_branch
          %5062 = sbr.rel (%p5060) target = $region116
        $region115: #{apply.1} parent=67 // pred_region
          _
        $region116: #{apply.1} parent=67 // pred_fallthru
          _
      $region68: #{apply.1} parent=5 // pred_fallthru
        _
      %p5063 = scmp.le.s32.totalorder 2, %s24
      // Predicated region
      $region117: #{apply.1} parent=5 // pred_check
        %p5064 = pneg %p5063
      $region118: #{apply.1} parent=5 // pred_check_branch
        %5066 = sbr.rel (%p5064) target = $region120
      $region119: #{apply.1} parent=5 // pred_region
        %s5067 = ssub.s32 %s24, 2
        // Predicated region
        $region121: #{apply.1} parent=119 // pred_check
          %p5068 = pneg %p310
        $region122: #{apply.1} parent=119 // pred_check_branch
          %5070 = sbr.rel (%p5068) target = $region124
        $region123: #{apply.1} parent=119 // pred_region
          %p5071 = scmp.lt.s32.totalorder %s30, 1
          %s5072 = scalar_select %p5071, %s30, 1
          %s5073 = smul.addr %s5072, 2
          %s5074 = smul.addr %s5073, 8
          %s5075 = scalar_lea.vmem %s12, %s5074
        $region124: #{apply.1} parent=119 // pred_fallthru
          _
      $region120: #{apply.1} parent=5 // pred_fallthru
        _
    $region6: #{apply.1} parent=1 // loop_footer
      %s28 = sadd.s32 1, %s24
    $region7: #{apply.1} parent=1 // loop_footer_branch
      %23 = sbr.rel target = $region3
    $region8: #{apply.1} parent=1 // loop_exit
      _
    %5076 = vsyncpa [#allocation3], 1
    %s5077 = scalar_lea.sflag [#allocation3], 1
    %5078 = vsyncpa %s5077, 1
    %5079 = vsyncpa [#allocation5], 1
    %5080 = vsyncpa [#allocation8], 1
    %5081 = vsyncpa [#allocation11], 1
    %5082 = vsyncpa [#allocation14], 1
    %5083 = vsyncpa [#allocation17], 1

</llo_original>
